<compile_context>
chip_gen: v7x
topology: tpu7x:2x2x1
jax: 0.10.0
libtpu: 0.0.40
codegen_flags: <defaults>
</compile_context>

<pallas_src>
import jax
import jax.numpy as jnp
from jax.experimental import pallas as pl
from jax.experimental.pallas import tpu as pltpu

_LANE = 128            # channel axis padded to the TPU lane width
_APPLY_TILE_M = 256    # rows per step in the BN-apply pass (multiple of 8);
                       # raise to 1024-2048 on v5e/v6e (128 MiB VMEM), keep
                       # modest for v7x (64 MiB VMEM / TC)
_VMEM_LIMIT = 32 * 1024 * 1024
_BN_EPS = 1e-5


def _round_up(x, m):
    return (x + m - 1) // m * m


# ---------------------------------------------------------------------------
# Pass 1: conv3x3 (+bias) fused with per-tile BN partial statistics.
# ---------------------------------------------------------------------------
def _conv3x3_stats_kernel(x_ref, w_ref, b_ref, y_ref, stats_ref):
    """x_ref     : (1, H+2, W+2, Ci)  bf16 spatially padded image tile
       w_ref     : (9, Ci, Co)        bf16 conv weight (tap-major), resident
       b_ref     : (1, Co)            f32 conv bias
       y_ref     : (1, H*W, Co)       f32 conv output (pre-BN)
       stats_ref : (1, 2, Co)         f32  row 0 = sum, row 1 = sum of squares
    """
    h = x_ref.shape[1] - 2
    w = x_ref.shape[2] - 2
    ci = x_ref.shape[3]
    co = w_ref.shape[2]
    hw = h * w

    xv = x_ref[0]                                            # (H+2, W+2, Ci)

    # f32 accumulator lives in the output VMEM block; init with the bias.
    y_ref[0] = jnp.broadcast_to(b_ref[...], (hw, co))

    # 3x3 conv as 9 shifted bf16 matmuls with f32 accumulation (MXU).
    for k in range(9):
        dy, dx = k // 3, k % 3
        xs = xv[dy:dy + h, dx:dx + w, :].reshape(hw, ci)     # (HW, Ci) bf16
        y_ref[0] += jnp.dot(xs, w_ref[k], preferred_element_type=jnp.float32)

    # Per-tile BatchNorm partials (single pass: sum and sum of squares).
    yv = y_ref[0]                                            # (HW, Co) f32
    s = jnp.sum(yv, axis=0, keepdims=True)                   # (1, Co)
    sq = jnp.sum(yv * yv, axis=0, keepdims=True)             # (1, Co)
    stats_ref[0] = jnp.concatenate([s, sq], axis=0)          # (2, Co)


def _conv3x3_pass(x_pad, w9, bias, n, h, w):
    """x_pad: (N, H+2, W+2, Ci_p) bf16; w9: (9, Ci_p, Co_p) bf16; bias: (1, Co_p) f32.
    Returns conv output (N*H*W, Co_p) f32 and per-image stats (N, 2, Co_p)."""
    # TODO(synk): add H-tiling with halo DMA (manual double-buffering) for
    # images whose (H+2, W+2, C) slab would not fit comfortably in VMEM.
    ci = x_pad.shape[-1]
    co = w9.shape[-1]
    hw = h * w
    y, stats = pl.pallas_call(
        _conv3x3_stats_kernel,
        out_shape=(jax.ShapeDtypeStruct((n, hw, co), jnp.float32),
                   jax.ShapeDtypeStruct((n, 2, co), jnp.float32)),
        grid_spec=pltpu.PrefetchScalarGridSpec(
            num_scalar_prefetch=0,
            grid=(n,),
            in_specs=[
                pl.BlockSpec((1, h + 2, w + 2, ci), lambda i: (i, 0, 0, 0)),
                pl.BlockSpec((9, ci, co), lambda i: (0, 0, 0)),   # resident
                pl.BlockSpec((1, co), lambda i: (0, 0)),
            ],
            out_specs=[
                pl.BlockSpec((1, hw, co), lambda i: (i, 0, 0)),
                pl.BlockSpec((1, 2, co), lambda i: (i, 0, 0)),
            ],
        ),
        compiler_params=pltpu.CompilerParams(
            dimension_semantics=("parallel",),
            vmem_limit_bytes=_VMEM_LIMIT),
    )(x_pad, w9, bias)
    return y.reshape(n * hw, co), stats


# ---------------------------------------------------------------------------
# Pass 2: BatchNorm apply (precomputed scale/shift) + ReLU, tiled over M.
# ---------------------------------------------------------------------------
def _bn_relu_kernel(y_ref, scale_ref, shift_ref, o_ref):
    y = y_ref[...]                                           # (TILE_M, Co) f32
    o = jnp.maximum(y * scale_ref[...] + shift_ref[...], 0.0)
    o_ref[...] = o.astype(o_ref.dtype)


def _bn_relu_pass(y, scale, shift, out_dtype):
    m, co = y.shape
    tm = min(_APPLY_TILE_M, m)
    return pl.pallas_call(
        _bn_relu_kernel,
        out_shape=jax.ShapeDtypeStruct((m, co), out_dtype),
        grid_spec=pltpu.PrefetchScalarGridSpec(
            num_scalar_prefetch=0,
            grid=(pl.cdiv(m, tm),),
            in_specs=[
                pl.BlockSpec((tm, co), lambda i: (i, 0)),
                pl.BlockSpec((1, co), lambda i: (0, 0)),
                pl.BlockSpec((1, co), lambda i: (0, 0)),
            ],
            out_specs=pl.BlockSpec((tm, co), lambda i: (i, 0)),
        ),
        compiler_params=pltpu.CompilerParams(
            dimension_semantics=("parallel",),
            vmem_limit_bytes=_VMEM_LIMIT),
    )(y, scale, shift)


# ---------------------------------------------------------------------------
# One Conv3x3 + BatchNorm2d(train, batch stats) + ReLU sub-block.
# ---------------------------------------------------------------------------
def _conv_bn_relu_block(x_pad, w_hwio, bias, gamma, beta, n, h, w, out_dtype):
    """x_pad is a channel-padded, spatially padded bf16 NHWC tile.
    Returns (N*H*W, Co_padded) in out_dtype (padded channels are exactly 0)."""
    cin, cout = w_hwio.shape[2], w_hwio.shape[3]
    ci_p = x_pad.shape[-1]
    co_p = _round_up(cout, _LANE)

    # Lane-pad parameters with zeros so padded channels stay exactly 0.
    w9 = jnp.zeros((3, 3, ci_p, co_p), jnp.float32)
    w9 = w9.at[:, :, :cin, :cout].set(w_hwio.astype(jnp.float32))
    w9 = w9.reshape(9, ci_p, co_p).astype(jnp.bfloat16)
    b_p = jnp.zeros((1, co_p), jnp.float32).at[0, :cout].set(bias)
    g_p = jnp.zeros((co_p,), jnp.float32).at[:cout].set(gamma)
    be_p = jnp.zeros((co_p,), jnp.float32).at[:cout].set(beta)

    # Pass 1: conv + per-tile stats partials.
    y, stats = _conv3x3_pass(x_pad, w9, b_p, n, h, w)        # (M, Co_p) f32

    # Tiny cross-tile reduction -> global batch stats -> per-channel affine.
    m = n * h * w
    ssum = jnp.sum(stats[:, 0, :], axis=0)
    ssq = jnp.sum(stats[:, 1, :], axis=0)
    mean = ssum / m
    var = jnp.maximum(ssq / m - mean * mean, 0.0)            # biased variance
    inv_std = jax.lax.rsqrt(var + _BN_EPS)
    scale = (g_p * inv_std)[None, :]
    shift = (be_p - mean * g_p * inv_std)[None, :]

    # Pass 2: lane-dense elementwise scale/shift + ReLU.
    return _bn_relu_pass(y, scale, shift, out_dtype)


@jax.jit
def conv_block_forward(x_nchw, params):
    """Forward of the PyTorch conv_block.  Input NCHW f32, output NCHW f32."""
    n, cin, h, w = x_nchw.shape
    cout = params["w1"].shape[3]
    ci_p = _round_up(cin, _LANE)
    co_p = _round_up(cout, _LANE)

    # NCHW -> NHWC, lane-pad channels, spatial pad by 1, cast to bf16.
    x = jnp.transpose(x_nchw, (0, 2, 3, 1)).astype(jnp.float32)
    x = jnp.pad(x, ((0, 0), (1, 1), (1, 1), (0, ci_p - cin))).astype(jnp.bfloat16)

    # Block 1: keep the activation channel-padded bf16 so it feeds block 2's
    # conv directly (no im2col, no extra cast, padded channels remain zero).
    y1 = _conv_bn_relu_block(x, params["w1"], params["b1"],
                             params["g1"], params["beta1"], n, h, w,
                             out_dtype=jnp.bfloat16)
    y1 = jnp.pad(y1.reshape(n, h, w, co_p), ((0, 0), (1, 1), (1, 1), (0, 0)))

    # Block 2: final output in f32.
    y2 = _conv_bn_relu_block(y1, params["w2"], params["b2"],
                             params["g2"], params["beta2"], n, h, w,
                             out_dtype=jnp.float32)
    y2 = y2.reshape(n, h, w, co_p)[:, :, :, :cout]
    return jnp.transpose(y2, (0, 3, 1, 2))


# ---------------------------------------------------------------------------
# Pure-JAX reference (mirrors the kernel's bf16-matmul / f32-stats numerics).
# ---------------------------------------------------------------------------
def _reference_forward(x_nchw, params):
    def block(x_nhwc, wk, bk, gk, bek):
        y = jax.lax.conv_general_dilated(
            x_nhwc.astype(jnp.bfloat16), wk.astype(jnp.bfloat16),
            window_strides=(1, 1), padding="SAME",
            dimension_numbers=("NHWC", "HWIO", "NHWC"),
            preferred_element_type=jnp.float32) + bk
        mean = jnp.mean(y, axis=(0, 1, 2))
        var = jnp.mean(y * y, axis=(0, 1, 2)) - mean * mean
        scale = gk * jax.lax.rsqrt(var + _BN_EPS)
        shift = bek - mean * scale
        return jnp.maximum(y * scale + shift, 0.0)

    x = jnp.transpose(x_nchw, (0, 2, 3, 1)).astype(jnp.float32)
    y1 = block(x, params["w1"], params["b1"], params["g1"], params["beta1"])
    y1 = y1.astype(jnp.bfloat16).astype(jnp.float32)   # mirror bf16 hand-off
    y2 = block(y1, params["w2"], params["b2"], params["g2"], params["beta2"])
    return jnp.transpose(y2, (0, 3, 1, 2))


def init_params(key, in_ch, out_ch):
    ks = jax.random.split(key, 8)
    return {
        # conv weights in HWIO = (3, 3, Cin, Cout)
        "w1": 0.1 * jax.random.normal(ks[0], (3, 3, in_ch, out_ch), jnp.float32),
        "b1": 0.05 * jax.random.normal(ks[1], (out_ch,), jnp.float32),
        "g1": 1.0 + 0.1 * jax.random.normal(ks[2], (out_ch,), jnp.float32),
        "beta1": 0.1 * jax.random.normal(ks[3], (out_ch,), jnp.float32),
        "w2": 0.1 * jax.random.normal(ks[4], (3, 3, out_ch, out_ch), jnp.float32),
        "b2": 0.05 * jax.random.normal(ks[5], (out_ch,), jnp.float32),
        "g2": 1.0 + 0.1 * jax.random.normal(ks[6], (out_ch,), jnp.float32),
        "beta2": 0.1 * jax.random.normal(ks[7], (out_ch,), jnp.float32),
    }


if __name__ == "__main__":
    key = jax.random.PRNGKey(0)
    k_x, k_p = jax.random.split(key)

    batch, in_ch, out_ch, hw = 2, 4, 8, 16
    x = jax.random.normal(k_x, (batch, in_ch, hw, hw), jnp.float32)   # NCHW
    params = init_params(k_p, in_ch, out_ch)

    out = jax.block_until_ready(conv_block_forward(x, params))
    assert out.shape == (batch, out_ch, hw, hw), out.shape

    ref = jax.block_until_ready(_reference_forward(x, params))
    max_err = float(jnp.max(jnp.abs(out - ref)))
    assert jnp.allclose(out, ref, atol=1e-2, rtol=1e-2), max_err

    print("KERNEL_OK")
</pallas_src>

<mosaic_0001>
module attributes {stable_mosaic.version = 11 : i64} {
  func.func @_conv3x3_stats_kernel(%arg0: i32, %arg1: memref<1x18x18x128xbf16, #tpu.memory_space<vmem>>, %arg2: memref<9x128x128xbf16, #tpu.memory_space<vmem>>, %arg3: memref<1x128xf32, #tpu.memory_space<vmem>>, %arg4: memref<1x256x128xf32, #tpu.memory_space<vmem>>, %arg5: memref<1x2x128xf32, #tpu.memory_space<vmem>>) attributes {dimension_semantics = [#tpu.dimension_semantics<parallel>], iteration_bounds = array<i64: 2>, scalar_prefetch = 0 : i64, scratch_operands = 0 : i64, tpu.core_type = #tpu.core_type<tc>, window_params = [{transform_indices = @transform_0, window_bounds = array<i64: 1, 18, 18, 128>}, {pipeline_mode = #tpu.pipeline_mode<synchronous>, transform_indices = @transform_1, window_bounds = array<i64: 9, 128, 128>}, {pipeline_mode = #tpu.pipeline_mode<synchronous>, transform_indices = @transform_2, window_bounds = array<i64: 1, 128>}, {transform_indices = @transform_3, window_bounds = array<i64: 1, 256, 128>}, {transform_indices = @transform_4, window_bounds = array<i64: 1, 2, 128>}]} {
    %c0 = arith.constant 0 : index
    %c0_0 = arith.constant 0 : index
    %c0_1 = arith.constant 0 : index
    %c0_2 = arith.constant 0 : index
    %0 = vector.load %arg1[%c0, %c0_0, %c0_1, %c0_2] : memref<1x18x18x128xbf16, #tpu.memory_space<vmem>>, vector<1x18x18x128xbf16>
    %1 = vector.shape_cast %0 : vector<1x18x18x128xbf16> to vector<18x18x128xbf16>
    %c0_3 = arith.constant 0 : index
    %c0_4 = arith.constant 0 : index
    %2 = vector.load %arg3[%c0_3, %c0_4] : memref<1x128xf32, #tpu.memory_space<vmem>>, vector<1x128xf32>
    %3 = vector.shape_cast %2 : vector<1x128xf32> to vector<1x128xf32>
    %4 = vector.broadcast %3 : vector<1x128xf32> to vector<256x128xf32>
    %c0_5 = arith.constant 0 : index
    %c0_6 = arith.constant 0 : index
    %c0_7 = arith.constant 0 : index
    %5 = vector.load %arg4[%c0_5, %c0_6, %c0_7] : memref<1x256x128xf32, #tpu.memory_space<vmem>>, vector<1x256x128xf32>
    %6 = vector.shape_cast %5 : vector<1x256x128xf32> to vector<256x128xf32>
    %7 = vector.shape_cast %4 : vector<256x128xf32> to vector<1x256x128xf32>
    tpu.vector_store %arg4[%c0_5, %c0_6, %c0_7], %7 {strides = array<i32>} : memref<1x256x128xf32, #tpu.memory_space<vmem>>, vector<1x256x128xf32>,
    %8 = vector.extract_strided_slice %1 {offsets = [0, 0, 0], sizes = [16, 16, 128], strides = [1, 1, 1]} : vector<18x18x128xbf16> to vector<16x16x128xbf16>
    %9 = vector.shape_cast %8 : vector<16x16x128xbf16> to vector<256x128xbf16>
    %c0_8 = arith.constant 0 : index
    %c0_9 = arith.constant 0 : index
    %c0_10 = arith.constant 0 : index
    %10 = vector.load %arg4[%c0_8, %c0_9, %c0_10] : memref<1x256x128xf32, #tpu.memory_space<vmem>>, vector<1x256x128xf32>
    %11 = vector.shape_cast %10 : vector<1x256x128xf32> to vector<256x128xf32>
    %c0_11 = arith.constant 0 : index
    %c0_12 = arith.constant 0 : index
    %c0_13 = arith.constant 0 : index
    %12 = vector.load %arg2[%c0_11, %c0_12, %c0_13] : memref<9x128x128xbf16, #tpu.memory_space<vmem>>, vector<1x128x128xbf16>
    %13 = vector.shape_cast %12 : vector<1x128x128xbf16> to vector<128x128xbf16>
    %cst = arith.constant dense<0.000000e+00> : vector<256x128xf32>
    %14 = tpu.matmul %9, %13, %cst {dimension_numbers = #tpu.dot_dimension_numbers<[1], [0], [0], [1], [0, 0, 1, 1], [], []>} : vector<256x128xbf16>, vector<128x128xbf16>, vector<256x128xf32> -> vector<256x128xf32>
    %15 = arith.addf %11, %14 : vector<256x128xf32>
    %c0_14 = arith.constant 0 : index
    %c0_15 = arith.constant 0 : index
    %c0_16 = arith.constant 0 : index
    %16 = vector.load %arg4[%c0_14, %c0_15, %c0_16] : memref<1x256x128xf32, #tpu.memory_space<vmem>>, vector<1x256x128xf32>
    %17 = vector.shape_cast %16 : vector<1x256x128xf32> to vector<256x128xf32>
    %18 = vector.shape_cast %15 : vector<256x128xf32> to vector<1x256x128xf32>
    tpu.vector_store %arg4[%c0_14, %c0_15, %c0_16], %18 {strides = array<i32>} : memref<1x256x128xf32, #tpu.memory_space<vmem>>, vector<1x256x128xf32>,
    %19 = vector.extract_strided_slice %1 {offsets = [0, 1, 0], sizes = [16, 16, 128], strides = [1, 1, 1]} : vector<18x18x128xbf16> to vector<16x16x128xbf16>
    %20 = vector.shape_cast %19 : vector<16x16x128xbf16> to vector<256x128xbf16>
    %c0_17 = arith.constant 0 : index
    %c0_18 = arith.constant 0 : index
    %c0_19 = arith.constant 0 : index
    %21 = vector.load %arg4[%c0_17, %c0_18, %c0_19] : memref<1x256x128xf32, #tpu.memory_space<vmem>>, vector<1x256x128xf32>
    %22 = vector.shape_cast %21 : vector<1x256x128xf32> to vector<256x128xf32>
    %c1 = arith.constant 1 : index
    %c0_20 = arith.constant 0 : index
    %c0_21 = arith.constant 0 : index
    %23 = vector.load %arg2[%c1, %c0_20, %c0_21] : memref<9x128x128xbf16, #tpu.memory_space<vmem>>, vector<1x128x128xbf16>
    %24 = vector.shape_cast %23 : vector<1x128x128xbf16> to vector<128x128xbf16>
    %cst_22 = arith.constant dense<0.000000e+00> : vector<256x128xf32>
    %25 = tpu.matmul %20, %24, %cst_22 {dimension_numbers = #tpu.dot_dimension_numbers<[1], [0], [0], [1], [0, 0, 1, 1], [], []>} : vector<256x128xbf16>, vector<128x128xbf16>, vector<256x128xf32> -> vector<256x128xf32>
    %26 = arith.addf %22, %25 : vector<256x128xf32>
    %c0_23 = arith.constant 0 : index
    %c0_24 = arith.constant 0 : index
    %c0_25 = arith.constant 0 : index
    %27 = vector.load %arg4[%c0_23, %c0_24, %c0_25] : memref<1x256x128xf32, #tpu.memory_space<vmem>>, vector<1x256x128xf32>
    %28 = vector.shape_cast %27 : vector<1x256x128xf32> to vector<256x128xf32>
    %29 = vector.shape_cast %26 : vector<256x128xf32> to vector<1x256x128xf32>
    tpu.vector_store %arg4[%c0_23, %c0_24, %c0_25], %29 {strides = array<i32>} : memref<1x256x128xf32, #tpu.memory_space<vmem>>, vector<1x256x128xf32>,
    %30 = vector.extract_strided_slice %1 {offsets = [0, 2, 0], sizes = [16, 16, 128], strides = [1, 1, 1]} : vector<18x18x128xbf16> to vector<16x16x128xbf16>
    %31 = vector.shape_cast %30 : vector<16x16x128xbf16> to vector<256x128xbf16>
    %c0_26 = arith.constant 0 : index
    %c0_27 = arith.constant 0 : index
    %c0_28 = arith.constant 0 : index
    %32 = vector.load %arg4[%c0_26, %c0_27, %c0_28] : memref<1x256x128xf32, #tpu.memory_space<vmem>>, vector<1x256x128xf32>
    %33 = vector.shape_cast %32 : vector<1x256x128xf32> to vector<256x128xf32>
    %c2 = arith.constant 2 : index
    %c0_29 = arith.constant 0 : index
    %c0_30 = arith.constant 0 : index
    %34 = vector.load %arg2[%c2, %c0_29, %c0_30] : memref<9x128x128xbf16, #tpu.memory_space<vmem>>, vector<1x128x128xbf16>
    %35 = vector.shape_cast %34 : vector<1x128x128xbf16> to vector<128x128xbf16>
    %cst_31 = arith.constant dense<0.000000e+00> : vector<256x128xf32>
    %36 = tpu.matmul %31, %35, %cst_31 {dimension_numbers = #tpu.dot_dimension_numbers<[1], [0], [0], [1], [0, 0, 1, 1], [], []>} : vector<256x128xbf16>, vector<128x128xbf16>, vector<256x128xf32> -> vector<256x128xf32>
    %37 = arith.addf %33, %36 : vector<256x128xf32>
    %c0_32 = arith.constant 0 : index
    %c0_33 = arith.constant 0 : index
    %c0_34 = arith.constant 0 : index
    %38 = vector.load %arg4[%c0_32, %c0_33, %c0_34] : memref<1x256x128xf32, #tpu.memory_space<vmem>>, vector<1x256x128xf32>
    %39 = vector.shape_cast %38 : vector<1x256x128xf32> to vector<256x128xf32>
    %40 = vector.shape_cast %37 : vector<256x128xf32> to vector<1x256x128xf32>
    tpu.vector_store %arg4[%c0_32, %c0_33, %c0_34], %40 {strides = array<i32>} : memref<1x256x128xf32, #tpu.memory_space<vmem>>, vector<1x256x128xf32>,
    %41 = vector.extract_strided_slice %1 {offsets = [1, 0, 0], sizes = [16, 16, 128], strides = [1, 1, 1]} : vector<18x18x128xbf16> to vector<16x16x128xbf16>
    %42 = vector.shape_cast %41 : vector<16x16x128xbf16> to vector<256x128xbf16>
    %c0_35 = arith.constant 0 : index
    %c0_36 = arith.constant 0 : index
    %c0_37 = arith.constant 0 : index
    %43 = vector.load %arg4[%c0_35, %c0_36, %c0_37] : memref<1x256x128xf32, #tpu.memory_space<vmem>>, vector<1x256x128xf32>
    %44 = vector.shape_cast %43 : vector<1x256x128xf32> to vector<256x128xf32>
    %c3 = arith.constant 3 : index
    %c0_38 = arith.constant 0 : index
    %c0_39 = arith.constant 0 : index
    %45 = vector.load %arg2[%c3, %c0_38, %c0_39] : memref<9x128x128xbf16, #tpu.memory_space<vmem>>, vector<1x128x128xbf16>
    %46 = vector.shape_cast %45 : vector<1x128x128xbf16> to vector<128x128xbf16>
    %cst_40 = arith.constant dense<0.000000e+00> : vector<256x128xf32>
    %47 = tpu.matmul %42, %46, %cst_40 {dimension_numbers = #tpu.dot_dimension_numbers<[1], [0], [0], [1], [0, 0, 1, 1], [], []>} : vector<256x128xbf16>, vector<128x128xbf16>, vector<256x128xf32> -> vector<256x128xf32>
    %48 = arith.addf %44, %47 : vector<256x128xf32>
    %c0_41 = arith.constant 0 : index
    %c0_42 = arith.constant 0 : index
    %c0_43 = arith.constant 0 : index
    %49 = vector.load %arg4[%c0_41, %c0_42, %c0_43] : memref<1x256x128xf32, #tpu.memory_space<vmem>>, vector<1x256x128xf32>
    %50 = vector.shape_cast %49 : vector<1x256x128xf32> to vector<256x128xf32>
    %51 = vector.shape_cast %48 : vector<256x128xf32> to vector<1x256x128xf32>
    tpu.vector_store %arg4[%c0_41, %c0_42, %c0_43], %51 {strides = array<i32>} : memref<1x256x128xf32, #tpu.memory_space<vmem>>, vector<1x256x128xf32>,
    %52 = vector.extract_strided_slice %1 {offsets = [1, 1, 0], sizes = [16, 16, 128], strides = [1, 1, 1]} : vector<18x18x128xbf16> to vector<16x16x128xbf16>
    %53 = vector.shape_cast %52 : vector<16x16x128xbf16> to vector<256x128xbf16>
    %c0_44 = arith.constant 0 : index
    %c0_45 = arith.constant 0 : index
    %c0_46 = arith.constant 0 : index
    %54 = vector.load %arg4[%c0_44, %c0_45, %c0_46] : memref<1x256x128xf32, #tpu.memory_space<vmem>>, vector<1x256x128xf32>
    %55 = vector.shape_cast %54 : vector<1x256x128xf32> to vector<256x128xf32>
    %c4 = arith.constant 4 : index
    %c0_47 = arith.constant 0 : index
    %c0_48 = arith.constant 0 : index
    %56 = vector.load %arg2[%c4, %c0_47, %c0_48] : memref<9x128x128xbf16, #tpu.memory_space<vmem>>, vector<1x128x128xbf16>
    %57 = vector.shape_cast %56 : vector<1x128x128xbf16> to vector<128x128xbf16>
    %cst_49 = arith.constant dense<0.000000e+00> : vector<256x128xf32>
    %58 = tpu.matmul %53, %57, %cst_49 {dimension_numbers = #tpu.dot_dimension_numbers<[1], [0], [0], [1], [0, 0, 1, 1], [], []>} : vector<256x128xbf16>, vector<128x128xbf16>, vector<256x128xf32> -> vector<256x128xf32>
    %59 = arith.addf %55, %58 : vector<256x128xf32>
    %c0_50 = arith.constant 0 : index
    %c0_51 = arith.constant 0 : index
    %c0_52 = arith.constant 0 : index
    %60 = vector.load %arg4[%c0_50, %c0_51, %c0_52] : memref<1x256x128xf32, #tpu.memory_space<vmem>>, vector<1x256x128xf32>
    %61 = vector.shape_cast %60 : vector<1x256x128xf32> to vector<256x128xf32>
    %62 = vector.shape_cast %59 : vector<256x128xf32> to vector<1x256x128xf32>
    tpu.vector_store %arg4[%c0_50, %c0_51, %c0_52], %62 {strides = array<i32>} : memref<1x256x128xf32, #tpu.memory_space<vmem>>, vector<1x256x128xf32>,
    %63 = vector.extract_strided_slice %1 {offsets = [1, 2, 0], sizes = [16, 16, 128], strides = [1, 1, 1]} : vector<18x18x128xbf16> to vector<16x16x128xbf16>
    %64 = vector.shape_cast %63 : vector<16x16x128xbf16> to vector<256x128xbf16>
    %c0_53 = arith.constant 0 : index
    %c0_54 = arith.constant 0 : index
    %c0_55 = arith.constant 0 : index
    %65 = vector.load %arg4[%c0_53, %c0_54, %c0_55] : memref<1x256x128xf32, #tpu.memory_space<vmem>>, vector<1x256x128xf32>
    %66 = vector.shape_cast %65 : vector<1x256x128xf32> to vector<256x128xf32>
    %c5 = arith.constant 5 : index
    %c0_56 = arith.constant 0 : index
    %c0_57 = arith.constant 0 : index
    %67 = vector.load %arg2[%c5, %c0_56, %c0_57] : memref<9x128x128xbf16, #tpu.memory_space<vmem>>, vector<1x128x128xbf16>
    %68 = vector.shape_cast %67 : vector<1x128x128xbf16> to vector<128x128xbf16>
    %cst_58 = arith.constant dense<0.000000e+00> : vector<256x128xf32>
    %69 = tpu.matmul %64, %68, %cst_58 {dimension_numbers = #tpu.dot_dimension_numbers<[1], [0], [0], [1], [0, 0, 1, 1], [], []>} : vector<256x128xbf16>, vector<128x128xbf16>, vector<256x128xf32> -> vector<256x128xf32>
    %70 = arith.addf %66, %69 : vector<256x128xf32>
    %c0_59 = arith.constant 0 : index
    %c0_60 = arith.constant 0 : index
    %c0_61 = arith.constant 0 : index
    %71 = vector.load %arg4[%c0_59, %c0_60, %c0_61] : memref<1x256x128xf32, #tpu.memory_space<vmem>>, vector<1x256x128xf32>
    %72 = vector.shape_cast %71 : vector<1x256x128xf32> to vector<256x128xf32>
    %73 = vector.shape_cast %70 : vector<256x128xf32> to vector<1x256x128xf32>
    tpu.vector_store %arg4[%c0_59, %c0_60, %c0_61], %73 {strides = array<i32>} : memref<1x256x128xf32, #tpu.memory_space<vmem>>, vector<1x256x128xf32>,
    %74 = vector.extract_strided_slice %1 {offsets = [2, 0, 0], sizes = [16, 16, 128], strides = [1, 1, 1]} : vector<18x18x128xbf16> to vector<16x16x128xbf16>
    %75 = vector.shape_cast %74 : vector<16x16x128xbf16> to vector<256x128xbf16>
    %c0_62 = arith.constant 0 : index
    %c0_63 = arith.constant 0 : index
    %c0_64 = arith.constant 0 : index
    %76 = vector.load %arg4[%c0_62, %c0_63, %c0_64] : memref<1x256x128xf32, #tpu.memory_space<vmem>>, vector<1x256x128xf32>
    %77 = vector.shape_cast %76 : vector<1x256x128xf32> to vector<256x128xf32>
    %c6 = arith.constant 6 : index
    %c0_65 = arith.constant 0 : index
    %c0_66 = arith.constant 0 : index
    %78 = vector.load %arg2[%c6, %c0_65, %c0_66] : memref<9x128x128xbf16, #tpu.memory_space<vmem>>, vector<1x128x128xbf16>
    %79 = vector.shape_cast %78 : vector<1x128x128xbf16> to vector<128x128xbf16>
    %cst_67 = arith.constant dense<0.000000e+00> : vector<256x128xf32>
    %80 = tpu.matmul %75, %79, %cst_67 {dimension_numbers = #tpu.dot_dimension_numbers<[1], [0], [0], [1], [0, 0, 1, 1], [], []>} : vector<256x128xbf16>, vector<128x128xbf16>, vector<256x128xf32> -> vector<256x128xf32>
    %81 = arith.addf %77, %80 : vector<256x128xf32>
    %c0_68 = arith.constant 0 : index
    %c0_69 = arith.constant 0 : index
    %c0_70 = arith.constant 0 : index
    %82 = vector.load %arg4[%c0_68, %c0_69, %c0_70] : memref<1x256x128xf32, #tpu.memory_space<vmem>>, vector<1x256x128xf32>
    %83 = vector.shape_cast %82 : vector<1x256x128xf32> to vector<256x128xf32>
    %84 = vector.shape_cast %81 : vector<256x128xf32> to vector<1x256x128xf32>
    tpu.vector_store %arg4[%c0_68, %c0_69, %c0_70], %84 {strides = array<i32>} : memref<1x256x128xf32, #tpu.memory_space<vmem>>, vector<1x256x128xf32>,
    %85 = vector.extract_strided_slice %1 {offsets = [2, 1, 0], sizes = [16, 16, 128], strides = [1, 1, 1]} : vector<18x18x128xbf16> to vector<16x16x128xbf16>
    %86 = vector.shape_cast %85 : vector<16x16x128xbf16> to vector<256x128xbf16>
    %c0_71 = arith.constant 0 : index
    %c0_72 = arith.constant 0 : index
    %c0_73 = arith.constant 0 : index
    %87 = vector.load %arg4[%c0_71, %c0_72, %c0_73] : memref<1x256x128xf32, #tpu.memory_space<vmem>>, vector<1x256x128xf32>
    %88 = vector.shape_cast %87 : vector<1x256x128xf32> to vector<256x128xf32>
    %c7 = arith.constant 7 : index
    %c0_74 = arith.constant 0 : index
    %c0_75 = arith.constant 0 : index
    %89 = vector.load %arg2[%c7, %c0_74, %c0_75] : memref<9x128x128xbf16, #tpu.memory_space<vmem>>, vector<1x128x128xbf16>
    %90 = vector.shape_cast %89 : vector<1x128x128xbf16> to vector<128x128xbf16>
    %cst_76 = arith.constant dense<0.000000e+00> : vector<256x128xf32>
    %91 = tpu.matmul %86, %90, %cst_76 {dimension_numbers = #tpu.dot_dimension_numbers<[1], [0], [0], [1], [0, 0, 1, 1], [], []>} : vector<256x128xbf16>, vector<128x128xbf16>, vector<256x128xf32> -> vector<256x128xf32>
    %92 = arith.addf %88, %91 : vector<256x128xf32>
    %c0_77 = arith.constant 0 : index
    %c0_78 = arith.constant 0 : index
    %c0_79 = arith.constant 0 : index
    %93 = vector.load %arg4[%c0_77, %c0_78, %c0_79] : memref<1x256x128xf32, #tpu.memory_space<vmem>>, vector<1x256x128xf32>
    %94 = vector.shape_cast %93 : vector<1x256x128xf32> to vector<256x128xf32>
    %95 = vector.shape_cast %92 : vector<256x128xf32> to vector<1x256x128xf32>
    tpu.vector_store %arg4[%c0_77, %c0_78, %c0_79], %95 {strides = array<i32>} : memref<1x256x128xf32, #tpu.memory_space<vmem>>, vector<1x256x128xf32>,
    %96 = vector.extract_strided_slice %1 {offsets = [2, 2, 0], sizes = [16, 16, 128], strides = [1, 1, 1]} : vector<18x18x128xbf16> to vector<16x16x128xbf16>
    %97 = vector.shape_cast %96 : vector<16x16x128xbf16> to vector<256x128xbf16>
    %c0_80 = arith.constant 0 : index
    %c0_81 = arith.constant 0 : index
    %c0_82 = arith.constant 0 : index
    %98 = vector.load %arg4[%c0_80, %c0_81, %c0_82] : memref<1x256x128xf32, #tpu.memory_space<vmem>>, vector<1x256x128xf32>
    %99 = vector.shape_cast %98 : vector<1x256x128xf32> to vector<256x128xf32>
    %c8 = arith.constant 8 : index
    %c0_83 = arith.constant 0 : index
    %c0_84 = arith.constant 0 : index
    %100 = vector.load %arg2[%c8, %c0_83, %c0_84] : memref<9x128x128xbf16, #tpu.memory_space<vmem>>, vector<1x128x128xbf16>
    %101 = vector.shape_cast %100 : vector<1x128x128xbf16> to vector<128x128xbf16>
    %cst_85 = arith.constant dense<0.000000e+00> : vector<256x128xf32>
    %102 = tpu.matmul %97, %101, %cst_85 {dimension_numbers = #tpu.dot_dimension_numbers<[1], [0], [0], [1], [0, 0, 1, 1], [], []>} : vector<256x128xbf16>, vector<128x128xbf16>, vector<256x128xf32> -> vector<256x128xf32>
    %103 = arith.addf %99, %102 : vector<256x128xf32>
    %c0_86 = arith.constant 0 : index
    %c0_87 = arith.constant 0 : index
    %c0_88 = arith.constant 0 : index
    %104 = vector.load %arg4[%c0_86, %c0_87, %c0_88] : memref<1x256x128xf32, #tpu.memory_space<vmem>>, vector<1x256x128xf32>
    %105 = vector.shape_cast %104 : vector<1x256x128xf32> to vector<256x128xf32>
    %106 = vector.shape_cast %103 : vector<256x128xf32> to vector<1x256x128xf32>
    tpu.vector_store %arg4[%c0_86, %c0_87, %c0_88], %106 {strides = array<i32>} : memref<1x256x128xf32, #tpu.memory_space<vmem>>, vector<1x256x128xf32>,
    %c0_89 = arith.constant 0 : index
    %c0_90 = arith.constant 0 : index
    %c0_91 = arith.constant 0 : index
    %107 = vector.load %arg4[%c0_89, %c0_90, %c0_91] : memref<1x256x128xf32, #tpu.memory_space<vmem>>, vector<1x256x128xf32>
    %108 = vector.shape_cast %107 : vector<1x256x128xf32> to vector<256x128xf32>
    %cst_92 = arith.constant dense<0.000000e+00> : vector<128xf32>
    %109 = vector.multi_reduction <add>, %108, %cst_92 [0] : vector<256x128xf32> to vector<128xf32>
    %110 = vector.shape_cast %109 : vector<128xf32> to vector<1x128xf32>
    %111 = arith.mulf %108, %108 : vector<256x128xf32>
    %cst_93 = arith.constant dense<0.000000e+00> : vector<128xf32>
    %112 = vector.multi_reduction <add>, %111, %cst_93 [0] : vector<256x128xf32> to vector<128xf32>
    %113 = vector.shape_cast %112 : vector<128xf32> to vector<1x128xf32>
    %114 = tpu.concatenate %110, %113 in 0 : vector<1x128xf32>, vector<1x128xf32> -> vector<2x128xf32>
    %c0_94 = arith.constant 0 : index
    %c0_95 = arith.constant 0 : index
    %c0_96 = arith.constant 0 : index
    %115 = vector.load %arg5[%c0_94, %c0_95, %c0_96] : memref<1x2x128xf32, #tpu.memory_space<vmem>>, vector<1x2x128xf32>
    %116 = vector.shape_cast %115 : vector<1x2x128xf32> to vector<2x128xf32>
    %117 = vector.shape_cast %114 : vector<2x128xf32> to vector<1x2x128xf32>
    tpu.vector_store %arg5[%c0_94, %c0_95, %c0_96], %117 {strides = array<i32>} : memref<1x2x128xf32, #tpu.memory_space<vmem>>, vector<1x2x128xf32>,
    return
  }
  func.func @transform_0(%arg0: i32) -> (i32, i32, i32, i32) {
    %c0_i32 = arith.constant 0 : i32
    %c0_i32_0 = arith.constant 0 : i32
    %c0_i32_1 = arith.constant 0 : i32
    %c0_i32_2 = arith.constant 0 : i32
    return %arg0, %c0_i32, %c0_i32_0, %c0_i32_1 : i32, i32, i32, i32
  }
  func.func @transform_1(%arg0: i32) -> (i32, i32, i32) {
    %c0_i32 = arith.constant 0 : i32
    %c0_i32_0 = arith.constant 0 : i32
    %c0_i32_1 = arith.constant 0 : i32
    %c0_i32_2 = arith.constant 0 : i32
    return %c0_i32, %c0_i32_0, %c0_i32_1 : i32, i32, i32
  }
  func.func @transform_2(%arg0: i32) -> (i32, i32) {
    %c0_i32 = arith.constant 0 : i32
    %c0_i32_0 = arith.constant 0 : i32
    %c0_i32_1 = arith.constant 0 : i32
    return %c0_i32, %c0_i32_0 : i32, i32
  }
  func.func @transform_3(%arg0: i32) -> (i32, i32, i32) {
    %c0_i32 = arith.constant 0 : i32
    %c0_i32_0 = arith.constant 0 : i32
    %c0_i32_1 = arith.constant 0 : i32
    return %arg0, %c0_i32, %c0_i32_0 : i32, i32, i32
  }
  func.func @transform_4(%arg0: i32) -> (i32, i32, i32) {
    %c0_i32 = arith.constant 0 : i32
    %c0_i32_0 = arith.constant 0 : i32
    %c0_i32_1 = arith.constant 0 : i32
    return %arg0, %c0_i32, %c0_i32_0 : i32, i32, i32
  }
}

module attributes {stable_mosaic.version = 11 : i64} {
  func.func @_bn_relu_kernel(%arg0: i32, %arg1: memref<256x128xf32, #tpu.memory_space<vmem>>, %arg2: memref<1x128xf32, #tpu.memory_space<vmem>>, %arg3: memref<1x128xf32, #tpu.memory_space<vmem>>, %arg4: memref<256x128xbf16, #tpu.memory_space<vmem>>) attributes {dimension_semantics = [#tpu.dimension_semantics<parallel>], iteration_bounds = array<i64: 2>, scalar_prefetch = 0 : i64, scratch_operands = 0 : i64, tpu.core_type = #tpu.core_type<tc>, window_params = [{transform_indices = @transform_0, window_bounds = array<i64: 256, 128>}, {pipeline_mode = #tpu.pipeline_mode<synchronous>, transform_indices = @transform_1, window_bounds = array<i64: 1, 128>}, {pipeline_mode = #tpu.pipeline_mode<synchronous>, transform_indices = @transform_2, window_bounds = array<i64: 1, 128>}, {transform_indices = @transform_3, window_bounds = array<i64: 256, 128>}]} {
    %c0 = arith.constant 0 : index
    %c0_0 = arith.constant 0 : index
    %0 = vector.load %arg1[%c0, %c0_0] : memref<256x128xf32, #tpu.memory_space<vmem>>, vector<256x128xf32>
    %c0_1 = arith.constant 0 : index
    %c0_2 = arith.constant 0 : index
    %1 = vector.load %arg2[%c0_1, %c0_2] : memref<1x128xf32, #tpu.memory_space<vmem>>, vector<1x128xf32>
    %2 = vector.broadcast %1 : vector<1x128xf32> to vector<256x128xf32>
    %3 = arith.mulf %0, %2 : vector<256x128xf32>
    %c0_3 = arith.constant 0 : index
    %c0_4 = arith.constant 0 : index
    %4 = vector.load %arg3[%c0_3, %c0_4] : memref<1x128xf32, #tpu.memory_space<vmem>>, vector<1x128xf32>
    %5 = vector.broadcast %4 : vector<1x128xf32> to vector<256x128xf32>
    %6 = arith.addf %3, %5 : vector<256x128xf32>
    %cst = arith.constant 0.000000e+00 : f32
    %7 = vector.broadcast %cst : f32 to vector<256x128xf32>
    %8 = arith.maximumf %6, %7 : vector<256x128xf32>
    %9 = arith.truncf %8 : vector<256x128xf32> to vector<256x128xbf16>
    %c0_5 = arith.constant 0 : index
    %c0_6 = arith.constant 0 : index
    %10 = vector.load %arg4[%c0_5, %c0_6] : memref<256x128xbf16, #tpu.memory_space<vmem>>, vector<256x128xbf16>
    tpu.vector_store %arg4[%c0_5, %c0_6], %9 {strides = array<i32>} : memref<256x128xbf16, #tpu.memory_space<vmem>>, vector<256x128xbf16>,
    return
  }
  func.func @transform_0(%arg0: i32) -> (i32, i32) {
    %c0_i32 = arith.constant 0 : i32
    %c0_i32_0 = arith.constant 0 : i32
    return %arg0, %c0_i32 : i32, i32
  }
  func.func @transform_1(%arg0: i32) -> (i32, i32) {
    %c0_i32 = arith.constant 0 : i32
    %c0_i32_0 = arith.constant 0 : i32
    %c0_i32_1 = arith.constant 0 : i32
    return %c0_i32, %c0_i32_0 : i32, i32
  }
  func.func @transform_2(%arg0: i32) -> (i32, i32) {
    %c0_i32 = arith.constant 0 : i32
    %c0_i32_0 = arith.constant 0 : i32
    %c0_i32_1 = arith.constant 0 : i32
    return %c0_i32, %c0_i32_0 : i32, i32
  }
  func.func @transform_3(%arg0: i32) -> (i32, i32) {
    %c0_i32 = arith.constant 0 : i32
    %c0_i32_0 = arith.constant 0 : i32
    return %arg0, %c0_i32 : i32, i32
  }
}

module attributes {stable_mosaic.version = 11 : i64} {
  func.func @_bn_relu_kernel(%arg0: i32, %arg1: memref<256x128xf32, #tpu.memory_space<vmem>>, %arg2: memref<1x128xf32, #tpu.memory_space<vmem>>, %arg3: memref<1x128xf32, #tpu.memory_space<vmem>>, %arg4: memref<256x128xf32, #tpu.memory_space<vmem>>) attributes {dimension_semantics = [#tpu.dimension_semantics<parallel>], iteration_bounds = array<i64: 2>, scalar_prefetch = 0 : i64, scratch_operands = 0 : i64, tpu.core_type = #tpu.core_type<tc>, window_params = [{transform_indices = @transform_0, window_bounds = array<i64: 256, 128>}, {pipeline_mode = #tpu.pipeline_mode<synchronous>, transform_indices = @transform_1, window_bounds = array<i64: 1, 128>}, {pipeline_mode = #tpu.pipeline_mode<synchronous>, transform_indices = @transform_2, window_bounds = array<i64: 1, 128>}, {transform_indices = @transform_3, window_bounds = array<i64: 256, 128>}]} {
    %c0 = arith.constant 0 : index
    %c0_0 = arith.constant 0 : index
    %0 = vector.load %arg1[%c0, %c0_0] : memref<256x128xf32, #tpu.memory_space<vmem>>, vector<256x128xf32>
    %c0_1 = arith.constant 0 : index
    %c0_2 = arith.constant 0 : index
    %1 = vector.load %arg2[%c0_1, %c0_2] : memref<1x128xf32, #tpu.memory_space<vmem>>, vector<1x128xf32>
    %2 = vector.broadcast %1 : vector<1x128xf32> to vector<256x128xf32>
    %3 = arith.mulf %0, %2 : vector<256x128xf32>
    %c0_3 = arith.constant 0 : index
    %c0_4 = arith.constant 0 : index
    %4 = vector.load %arg3[%c0_3, %c0_4] : memref<1x128xf32, #tpu.memory_space<vmem>>, vector<1x128xf32>
    %5 = vector.broadcast %4 : vector<1x128xf32> to vector<256x128xf32>
    %6 = arith.addf %3, %5 : vector<256x128xf32>
    %cst = arith.constant 0.000000e+00 : f32
    %7 = vector.broadcast %cst : f32 to vector<256x128xf32>
    %8 = arith.maximumf %6, %7 : vector<256x128xf32>
    %c0_5 = arith.constant 0 : index
    %c0_6 = arith.constant 0 : index
    %9 = vector.load %arg4[%c0_5, %c0_6] : memref<256x128xf32, #tpu.memory_space<vmem>>, vector<256x128xf32>
    tpu.vector_store %arg4[%c0_5, %c0_6], %8 {strides = array<i32>} : memref<256x128xf32, #tpu.memory_space<vmem>>, vector<256x128xf32>,
    return
  }
  func.func @transform_0(%arg0: i32) -> (i32, i32) {
    %c0_i32 = arith.constant 0 : i32
    %c0_i32_0 = arith.constant 0 : i32
    return %arg0, %c0_i32 : i32, i32
  }
  func.func @transform_1(%arg0: i32) -> (i32, i32) {
    %c0_i32 = arith.constant 0 : i32
    %c0_i32_0 = arith.constant 0 : i32
    %c0_i32_1 = arith.constant 0 : i32
    return %c0_i32, %c0_i32_0 : i32, i32
  }
  func.func @transform_2(%arg0: i32) -> (i32, i32) {
    %c0_i32 = arith.constant 0 : i32
    %c0_i32_0 = arith.constant 0 : i32
    %c0_i32_1 = arith.constant 0 : i32
    return %c0_i32, %c0_i32_0 : i32, i32
  }
  func.func @transform_3(%arg0: i32) -> (i32, i32) {
    %c0_i32 = arith.constant 0 : i32
    %c0_i32_0 = arith.constant 0 : i32
    return %arg0, %c0_i32 : i32, i32
  }
}

</mosaic_0001>

<llo_original>
// kernel: conv_block_forward.5
$region0: #{conv_block_forward.5}
  #allocation0 [shape = 'u32[]', space=smem, size = 0x4, offset = 0x4, fixed_abs, tag = 'smem constant byte address 0x4 - core index']
  #allocation1 [shape = 'u32[144,128]{1,0:T(1,128)}', space=vmem, size = 0x12000, scoped, tag = 'internal scratch']
  %s0 = inlined_call_operand.vmem [shape: f32[512,128], index: 0, kind: input, shape index: {}]
  %s1 = inlined_call_operand.vmem [shape: f32[1,128], index: 1, kind: input, shape index: {}]
  %s2 = inlined_call_operand.vmem [shape: f32[1,128], index: 2, kind: input, shape index: {}]
  %s3 = inlined_call_operand.vmem [shape: bf16[512,128], index: 3, kind: output, shape index: {}]
  %s4 = sld [smem:[#allocation0]]
  $region45: #{conv_block_forward.5} parent=0
    _
  %s6 = ssub.s32 1, %s4
  %s7 = scalar_select 0, %s6, %s4
  loop: start=0, step=1, limit=4
  $region2: #{conv_block_forward.5} parent=0 // loop_pre_header
    _
  $region3: #{conv_block_forward.5} parent=0 // loop_header
    %s9 = sphi 0, %s13
    %p10 = scmp.ge.s32.totalorder %s9, 4
    %s19 = sphi 0, %s21
    %s22 = sphi 0, %s19
    %s23 = sphi 0, %s22
    %s39 = sphi 0, %s23
    %s43 = sphi 0, %s43
    %s45 = sphi 0, %s43
    %s46 = sphi 0, %s45
    %s60 = sphi 0, %s46
    %s64 = sphi 0, %s64
    %s66 = sphi 0, %s64
    %s67 = sphi 0, %s66
    %s81 = sphi 0, %s67
    %s87 = sphi 0, %s89
    %s90 = sphi 0, %s87
    %s91 = sphi 0, %s90
    %s107 = sphi 0, %s91
  $region4: #{conv_block_forward.5} parent=0 // loop_header_branch
    %12 = sbr.rel (%p10) target = $region8
  $region5: #{conv_block_forward.5} parent=0 // loop_body
    %s14 = ssub.s32 %s9, 1
    %s15 = ssub.s32 %s9, 2
    %s16 = sadd.s32 %s9, 1
    %s17 = ssub.s32 %s9, %s16
    %p18 = scmp.eq.s32.totalorder %s17, 0
    %s20 = sadd.s32 %s19, 1
    %s21 = scalar_select %p18, %s19, %s20
    %p24 = pneg %p18
    %p25 = scmp.eq.s32.totalorder %s9, 1
    %p26 = por %p24, %p25
    %p27 = scmp.ne.s32.totalorder %s19, %s22
    %p28 = scmp.eq.s32.totalorder %s9, 0
    %p29 = por %p27, %p28
    %p30 = scmp.ne.s32.totalorder %s19, %s22
    %p31 = scmp.eq.s32.totalorder %s14, 1
    %p32 = por %p30, %p31
    %p33 = scmp.ne.s32.totalorder %s22, %s23
    %p34 = scmp.eq.s32.totalorder %s14, 0
    %p35 = por %p33, %p34
    %p36 = scmp.ne.s32.totalorder %s22, %s23
    %p37 = scmp.eq.s32.totalorder %s15, 1
    %p38 = por %p36, %p37
    %p40 = scmp.ne.s32.totalorder %s23, %s39
    %p41 = scmp.eq.s32.totalorder %s15, 0
    %p42 = por %p40, %p41
    %s44 = sadd.s32 %s43, 1
    %p47 = scmp.eq.s32.totalorder %s9, 1
    %p48 = scmp.ne.s32.totalorder %s43, %s45
    %p49 = scmp.eq.s32.totalorder %s9, 0
    %p50 = por %p48, %p49
    %p51 = scmp.ne.s32.totalorder %s43, %s45
    %p52 = scmp.eq.s32.totalorder %s14, 1
    %p53 = por %p51, %p52
    %p54 = scmp.ne.s32.totalorder %s45, %s46
    %p55 = scmp.eq.s32.totalorder %s14, 0
    %p56 = por %p54, %p55
    %p57 = scmp.ne.s32.totalorder %s45, %s46
    %p58 = scmp.eq.s32.totalorder %s15, 1
    %p59 = por %p57, %p58
    %p61 = scmp.ne.s32.totalorder %s46, %s60
    %p62 = scmp.eq.s32.totalorder %s15, 0
    %p63 = por %p61, %p62
    %s65 = sadd.s32 %s64, 1
    %p68 = scmp.eq.s32.totalorder %s9, 1
    %p69 = scmp.ne.s32.totalorder %s64, %s66
    %p70 = scmp.eq.s32.totalorder %s9, 0
    %p71 = por %p69, %p70
    %p72 = scmp.ne.s32.totalorder %s64, %s66
    %p73 = scmp.eq.s32.totalorder %s14, 1
    %p74 = por %p72, %p73
    %p75 = scmp.ne.s32.totalorder %s66, %s67
    %p76 = scmp.eq.s32.totalorder %s14, 0
    %p77 = por %p75, %p76
    %p78 = scmp.ne.s32.totalorder %s66, %s67
    %p79 = scmp.eq.s32.totalorder %s15, 1
    %p80 = por %p78, %p79
    %p82 = scmp.ne.s32.totalorder %s67, %s81
    %p83 = scmp.eq.s32.totalorder %s15, 0
    %p84 = por %p82, %p83
    %s85 = ssub.s32 %s9, %s16
    %p86 = scmp.eq.s32.totalorder %s85, 0
    %s88 = sadd.s32 %s87, 1
    %s89 = scalar_select %p86, %s87, %s88
    %p92 = pneg %p86
    %p93 = scmp.eq.s32.totalorder %s9, 1
    %p94 = por %p92, %p93
    %p95 = scmp.ne.s32.totalorder %s87, %s90
    %p96 = scmp.eq.s32.totalorder %s9, 0
    %p97 = por %p95, %p96
    %p98 = scmp.ne.s32.totalorder %s87, %s90
    %p99 = scmp.eq.s32.totalorder %s14, 1
    %p100 = por %p98, %p99
    %p101 = scmp.ne.s32.totalorder %s90, %s91
    %p102 = scmp.eq.s32.totalorder %s14, 0
    %p103 = por %p101, %p102
    %p104 = scmp.ne.s32.totalorder %s90, %s91
    %p105 = scmp.eq.s32.totalorder %s15, 1
    %p106 = por %p104, %p105
    %p108 = scmp.ne.s32.totalorder %s91, %s107
    %p109 = scmp.eq.s32.totalorder %s15, 0
    %p110 = por %p108, %p109
    %p111 = scmp.le.s32.totalorder 1, %s9
    %p112 = scmp.lt.s32.totalorder %s9, 3
    %p113 = pnand %p111, %p112
    %p114 = pneg %p113
    // Predicated region
    $region9: #{conv_block_forward.5} parent=5 // pred_check
      _
    $region10: #{conv_block_forward.5} parent=5 // pred_check_branch
      %116 = sbr.rel (%p113) target = $region12
    $region11: #{conv_block_forward.5} parent=5 // pred_region
      %s117 = ssub.s32 %s9, 1
      // Predicated region
      $region13: #{conv_block_forward.5} parent=11 // pred_check
        %p118 = pneg %p56
      $region14: #{conv_block_forward.5} parent=11 // pred_check_branch
        %120 = sbr.rel (%p118) target = $region16
      $region15: #{conv_block_forward.5} parent=11 // pred_region
        _
      $region16: #{conv_block_forward.5} parent=11 // pred_fallthru
        _
      // Predicated region
      $region17: #{conv_block_forward.5} parent=11 // pred_check
        %p121 = pneg %p77
      $region18: #{conv_block_forward.5} parent=11 // pred_check_branch
        %123 = sbr.rel (%p121) target = $region20
      $region19: #{conv_block_forward.5} parent=11 // pred_region
        _
      $region20: #{conv_block_forward.5} parent=11 // pred_fallthru
        _
    $region12: #{conv_block_forward.5} parent=5 // pred_fallthru
      _
    %p124 = scmp.lt.s32.totalorder %s9, 2
    // Predicated region
    $region21: #{conv_block_forward.5} parent=5 // pred_check
      %p125 = pneg %p124
    $region22: #{conv_block_forward.5} parent=5 // pred_check_branch
      %127 = sbr.rel (%p125) target = $region24
    $region23: #{conv_block_forward.5} parent=5 // pred_region
      // Predicated region
      $region25: #{conv_block_forward.5} parent=23 // pred_check
        %p128 = pneg %p29
      $region26: #{conv_block_forward.5} parent=23 // pred_check_branch
        %130 = sbr.rel (%p128) target = $region28
      $region27: #{conv_block_forward.5} parent=23 // pred_region
        %s131 = smul.u32 32, %s9
        %p132 = scmp.lt.s32.totalorder %s131, 63
        %s133 = scalar_select %p132, %s131, 63
        %s134 = smul.addr %s133, 8
        %s135 = scalar_lea.vmem %s0, %s134
        %s136 = smul.u32 32, %s9
      $region28: #{conv_block_forward.5} parent=23 // pred_fallthru
        _
    $region24: #{conv_block_forward.5} parent=5 // pred_fallthru
      _
    %p137 = scmp.le.s32.totalorder 1, %s9
    %p138 = scmp.lt.s32.totalorder %s9, 3
    %p139 = pnand %p137, %p138
    %p140 = pneg %p139
    // Predicated region
    $region29: #{conv_block_forward.5} parent=5 // pred_check
      _
    $region30: #{conv_block_forward.5} parent=5 // pred_check_branch
      %142 = sbr.rel (%p139) target = $region32
    $region31: #{conv_block_forward.5} parent=5 // pred_region
      %s143 = ssub.s32 %s9, 1
      %s144 = smul.u32 32, %s14
      %p145 = scmp.lt.s32.totalorder %s144, 63
      %s146 = scalar_select %p145, %s144, 63
      %s147 = smul.addr %s146, 8
      %s148 = scalar_lea.vmem %s0, %s147
      %p149 = pneg %p35
      %p150 = pneg %p32
      %p151 = pneg %p56
      %p152 = pneg %p53
      %p153 = pneg %p77
      %p154 = pneg %p74
      %p155 = pneg %p103
      %p156 = pneg %p100
      %s157 = smul.u32 32, %s14
      %p158 = scmp.lt.s32.totalorder %s157, 63
      %s159 = scalar_select %p158, %s157, 63
      %s160 = smul.addr %s159, 4
      %s161 = scalar_lea.vmem %s3, %s160
      %s162 = smul.u32 32, %s14
      %p163 = scmp.lt.s32.totalorder %s162, 63
      %s164 = scalar_select %p163, %s162, 63
      %s165 = smul.addr %s164, 8
      %s166 = scalar_lea.vmem %s0, %s165
      %s167 = smul.u32 32, %s14
      %s168 = smul.u32 32, %s14
      %p169 = scmp.lt.s32.totalorder %s168, 63
      %s170 = scalar_select %p169, %s168, 63
      %s171 = smul.addr %s170, 4
      %s172 = scalar_lea.vmem %s3, %s171
      %s173 = smul.u32 32, %s14
      %v174 = vld [vmem:[%s166] sm:$0xff]
      %v175 = vld [vmem:[%s166 + $0x8] sm:$0xff]
      %v176 = vld [vmem:[%s166 + $0x10] sm:$0xff]
      %v177 = vld [vmem:[%s166 + $0x18] sm:$0xff]
      %v178 = vld [vmem:[%s166 + $0x20] sm:$0xff]
      %v179 = vld [vmem:[%s166 + $0x28] sm:$0xff]
      %v180 = vld [vmem:[%s166 + $0x30] sm:$0xff]
      %v181 = vld [vmem:[%s166 + $0x38] sm:$0xff]
      %v182 = vld [vmem:[%s166 + $0x40] sm:$0xff]
      %v183 = vld [vmem:[%s166 + $0x48] sm:$0xff]
      %v184 = vld [vmem:[%s166 + $0x50] sm:$0xff]
      %v185 = vld [vmem:[%s166 + $0x58] sm:$0xff]
      %v186 = vld [vmem:[%s166 + $0x60] sm:$0xff]
      %v187 = vld [vmem:[%s166 + $0x68] sm:$0xff]
      %v188 = vld [vmem:[%s166 + $0x70] sm:$0xff]
      %v189 = vld [vmem:[%s166 + $0x78] sm:$0xff]
      %v190 = vld [vmem:[%s166 + $0x80] sm:$0xff]
      %v191 = vld [vmem:[%s166 + $0x88] sm:$0xff]
      %v192 = vld [vmem:[%s166 + $0x90] sm:$0xff]
      %v193 = vld [vmem:[%s166 + $0x98] sm:$0xff]
      %v194 = vld [vmem:[%s166 + $0xa0] sm:$0xff]
      %v195 = vld [vmem:[%s166 + $0xa8] sm:$0xff]
      %v196 = vld [vmem:[%s166 + $0xb0] sm:$0xff]
      %v197 = vld [vmem:[%s166 + $0xb8] sm:$0xff]
      %v198 = vld [vmem:[%s166 + $0xc0] sm:$0xff]
      %v199 = vld [vmem:[%s166 + $0xc8] sm:$0xff]
      %v200 = vld [vmem:[%s166 + $0xd0] sm:$0xff]
      %v201 = vld [vmem:[%s166 + $0xd8] sm:$0xff]
      %v202 = vld [vmem:[%s166 + $0xe0] sm:$0xff]
      %v203 = vld [vmem:[%s166 + $0xe8] sm:$0xff]
      %v204 = vld [vmem:[%s166 + $0xf0] sm:$0xff]
      %v205 = vld [vmem:[%s166 + $0xf8] sm:$0xff]
      %v206 = vld [vmem:[%s1] sm:$0x1]
      %v208 = vlaneseq
      %v209 = vshrl.u32 %v208, 7
      %v210 = vsub.s32 0, %v209
      %v211 = vrot.slane %v206, %v210
      %v213 = vmul.f32 %v174, %v211
      %v214 = vmul.f32 %v175, %v211
      %v215 = vmul.f32 %v176, %v211
      %v216 = vmul.f32 %v177, %v211
      %v217 = vmul.f32 %v178, %v211
      %v218 = vmul.f32 %v179, %v211
      %v219 = vmul.f32 %v180, %v211
      %v220 = vmul.f32 %v181, %v211
      %v221 = vmul.f32 %v182, %v211
      %v222 = vmul.f32 %v183, %v211
      %v223 = vmul.f32 %v184, %v211
      %v224 = vmul.f32 %v185, %v211
      %v225 = vmul.f32 %v186, %v211
      %v226 = vmul.f32 %v187, %v211
      %v227 = vmul.f32 %v188, %v211
      %v228 = vmul.f32 %v189, %v211
      %v229 = vmul.f32 %v190, %v211
      %v230 = vmul.f32 %v191, %v211
      %v231 = vmul.f32 %v192, %v211
      %v232 = vmul.f32 %v193, %v211
      %v233 = vmul.f32 %v194, %v211
      %v234 = vmul.f32 %v195, %v211
      %v235 = vmul.f32 %v196, %v211
      %v236 = vmul.f32 %v197, %v211
      %v237 = vmul.f32 %v198, %v211
      %v238 = vmul.f32 %v199, %v211
      %v239 = vmul.f32 %v200, %v211
      %v240 = vmul.f32 %v201, %v211
      %v241 = vmul.f32 %v202, %v211
      %v242 = vmul.f32 %v203, %v211
      %v243 = vmul.f32 %v204, %v211
      %v244 = vmul.f32 %v205, %v211
      %v245 = vld [vmem:[%s2] sm:$0x1]
      %v247 = vlaneseq
      %v248 = vshrl.u32 %v247, 7
      %v249 = vsub.s32 0, %v248
      %v250 = vrot.slane %v245, %v249
      %v252 = vadd.f32 %v213, %v250
      %v253 = vadd.f32 %v214, %v250
      %v254 = vadd.f32 %v215, %v250
      %v255 = vadd.f32 %v216, %v250
      %v256 = vadd.f32 %v217, %v250
      %v257 = vadd.f32 %v218, %v250
      %v258 = vadd.f32 %v219, %v250
      %v259 = vadd.f32 %v220, %v250
      %v260 = vadd.f32 %v221, %v250
      %v261 = vadd.f32 %v222, %v250
      %v262 = vadd.f32 %v223, %v250
      %v263 = vadd.f32 %v224, %v250
      %v264 = vadd.f32 %v225, %v250
      %v265 = vadd.f32 %v226, %v250
      %v266 = vadd.f32 %v227, %v250
      %v267 = vadd.f32 %v228, %v250
      %v268 = vadd.f32 %v229, %v250
      %v269 = vadd.f32 %v230, %v250
      %v270 = vadd.f32 %v231, %v250
      %v271 = vadd.f32 %v232, %v250
      %v272 = vadd.f32 %v233, %v250
      %v273 = vadd.f32 %v234, %v250
      %v274 = vadd.f32 %v235, %v250
      %v275 = vadd.f32 %v236, %v250
      %v276 = vadd.f32 %v237, %v250
      %v277 = vadd.f32 %v238, %v250
      %v278 = vadd.f32 %v239, %v250
      %v279 = vadd.f32 %v240, %v250
      %v280 = vadd.f32 %v241, %v250
      %v281 = vadd.f32 %v242, %v250
      %v282 = vadd.f32 %v243, %v250
      %v283 = vadd.f32 %v244, %v250
      %v284 = vmax.f32 %v252, 0.0
      %v285 = vmax.f32 %v253, 0.0
      %v286 = vmax.f32 %v254, 0.0
      %v287 = vmax.f32 %v255, 0.0
      %v288 = vmax.f32 %v256, 0.0
      %v289 = vmax.f32 %v257, 0.0
      %v290 = vmax.f32 %v258, 0.0
      %v291 = vmax.f32 %v259, 0.0
      %v292 = vmax.f32 %v260, 0.0
      %v293 = vmax.f32 %v261, 0.0
      %v294 = vmax.f32 %v262, 0.0
      %v295 = vmax.f32 %v263, 0.0
      %v296 = vmax.f32 %v264, 0.0
      %v297 = vmax.f32 %v265, 0.0
      %v298 = vmax.f32 %v266, 0.0
      %v299 = vmax.f32 %v267, 0.0
      %v300 = vmax.f32 %v268, 0.0
      %v301 = vmax.f32 %v269, 0.0
      %v302 = vmax.f32 %v270, 0.0
      %v303 = vmax.f32 %v271, 0.0
      %v304 = vmax.f32 %v272, 0.0
      %v305 = vmax.f32 %v273, 0.0
      %v306 = vmax.f32 %v274, 0.0
      %v307 = vmax.f32 %v275, 0.0
      %v308 = vmax.f32 %v276, 0.0
      %v309 = vmax.f32 %v277, 0.0
      %v310 = vmax.f32 %v278, 0.0
      %v311 = vmax.f32 %v279, 0.0
      %v312 = vmax.f32 %v280, 0.0
      %v313 = vmax.f32 %v281, 0.0
      %v314 = vmax.f32 %v282, 0.0
      %v315 = vmax.f32 %v283, 0.0
      %v316 = vpack.c.bf16 %v285, %v284
      %v317 = vpack.c.bf16 %v287, %v286
      %v318 = vpack.c.bf16 %v289, %v288
      %v319 = vpack.c.bf16 %v291, %v290
      %v320 = vpack.c.bf16 %v293, %v292
      %v321 = vpack.c.bf16 %v295, %v294
      %v322 = vpack.c.bf16 %v297, %v296
      %v323 = vpack.c.bf16 %v299, %v298
      %v324 = vpack.c.bf16 %v301, %v300
      %v325 = vpack.c.bf16 %v303, %v302
      %v326 = vpack.c.bf16 %v305, %v304
      %v327 = vpack.c.bf16 %v307, %v306
      %v328 = vpack.c.bf16 %v309, %v308
      %v329 = vpack.c.bf16 %v311, %v310
      %v330 = vpack.c.bf16 %v313, %v312
      %v331 = vpack.c.bf16 %v315, %v314
      %v348 = vunpack.c.l.b16 %v316
      %v349 = vunpack.c.h.b16 %v316
      %v350 = vunpack.c.l.b16 %v317
      %v351 = vunpack.c.h.b16 %v317
      %v352 = vunpack.c.l.b16 %v318
      %v353 = vunpack.c.h.b16 %v318
      %v354 = vunpack.c.l.b16 %v319
      %v355 = vunpack.c.h.b16 %v319
      %v356 = vunpack.c.l.b16 %v320
      %v357 = vunpack.c.h.b16 %v320
      %v358 = vunpack.c.l.b16 %v321
      %v359 = vunpack.c.h.b16 %v321
      %v360 = vunpack.c.l.b16 %v322
      %v361 = vunpack.c.h.b16 %v322
      %v362 = vunpack.c.l.b16 %v323
      %v363 = vunpack.c.h.b16 %v323
      %v364 = vunpack.c.l.b16 %v324
      %v365 = vunpack.c.h.b16 %v324
      %v366 = vunpack.c.l.b16 %v325
      %v367 = vunpack.c.h.b16 %v325
      %v368 = vunpack.c.l.b16 %v326
      %v369 = vunpack.c.h.b16 %v326
      %v370 = vunpack.c.l.b16 %v327
      %v371 = vunpack.c.h.b16 %v327
      %v372 = vunpack.c.l.b16 %v328
      %v373 = vunpack.c.h.b16 %v328
      %v374 = vunpack.c.l.b16 %v329
      %v375 = vunpack.c.h.b16 %v329
      %v376 = vunpack.c.l.b16 %v330
      %v377 = vunpack.c.h.b16 %v330
      %v378 = vunpack.c.l.b16 %v331
      %v379 = vunpack.c.h.b16 %v331
      %v380 = vpack.c.b16 %v348, %v348
      %v381 = vpack.c.b16 %v349, %v349
      %v382 = vpack.c.b16 %v350, %v350
      %v383 = vpack.c.b16 %v351, %v351
      %v384 = vpack.c.b16 %v352, %v352
      %v385 = vpack.c.b16 %v353, %v353
      %v386 = vpack.c.b16 %v354, %v354
      %v387 = vpack.c.b16 %v355, %v355
      %v388 = vpack.c.b16 %v356, %v356
      %v389 = vpack.c.b16 %v357, %v357
      %v390 = vpack.c.b16 %v358, %v358
      %v391 = vpack.c.b16 %v359, %v359
      %v392 = vpack.c.b16 %v360, %v360
      %v393 = vpack.c.b16 %v361, %v361
      %v394 = vpack.c.b16 %v362, %v362
      %v395 = vpack.c.b16 %v363, %v363
      %v396 = vpack.c.b16 %v364, %v364
      %v397 = vpack.c.b16 %v365, %v365
      %v398 = vpack.c.b16 %v366, %v366
      %v399 = vpack.c.b16 %v367, %v367
      %v400 = vpack.c.b16 %v368, %v368
      %v401 = vpack.c.b16 %v369, %v369
      %v402 = vpack.c.b16 %v370, %v370
      %v403 = vpack.c.b16 %v371, %v371
      %v404 = vpack.c.b16 %v372, %v372
      %v405 = vpack.c.b16 %v373, %v373
      %v406 = vpack.c.b16 %v374, %v374
      %v407 = vpack.c.b16 %v375, %v375
      %v408 = vpack.c.b16 %v376, %v376
      %v409 = vpack.c.b16 %v377, %v377
      %v410 = vpack.c.b16 %v378, %v378
      %v411 = vpack.c.b16 %v379, %v379
      %444 = vst [vmem:[%s172] sm:$0xf] %v380
      %445 = vst [vmem:[%s172 + $0x4] sm:$0xf] %v381
      %446 = vst [vmem:[%s172 + $0x8] sm:$0xf] %v382
      %447 = vst [vmem:[%s172 + $0xc] sm:$0xf] %v383
      %448 = vst [vmem:[%s172 + $0x10] sm:$0xf] %v384
      %449 = vst [vmem:[%s172 + $0x14] sm:$0xf] %v385
      %450 = vst [vmem:[%s172 + $0x18] sm:$0xf] %v386
      %451 = vst [vmem:[%s172 + $0x1c] sm:$0xf] %v387
      %452 = vst [vmem:[%s172 + $0x20] sm:$0xf] %v388
      %453 = vst [vmem:[%s172 + $0x24] sm:$0xf] %v389
      %454 = vst [vmem:[%s172 + $0x28] sm:$0xf] %v390
      %455 = vst [vmem:[%s172 + $0x2c] sm:$0xf] %v391
      %456 = vst [vmem:[%s172 + $0x30] sm:$0xf] %v392
      %457 = vst [vmem:[%s172 + $0x34] sm:$0xf] %v393
      %458 = vst [vmem:[%s172 + $0x38] sm:$0xf] %v394
      %459 = vst [vmem:[%s172 + $0x3c] sm:$0xf] %v395
      %460 = vst [vmem:[%s172 + $0x40] sm:$0xf] %v396
      %461 = vst [vmem:[%s172 + $0x44] sm:$0xf] %v397
      %462 = vst [vmem:[%s172 + $0x48] sm:$0xf] %v398
      %463 = vst [vmem:[%s172 + $0x4c] sm:$0xf] %v399
      %464 = vst [vmem:[%s172 + $0x50] sm:$0xf] %v400
      %465 = vst [vmem:[%s172 + $0x54] sm:$0xf] %v401
      %466 = vst [vmem:[%s172 + $0x58] sm:$0xf] %v402
      %467 = vst [vmem:[%s172 + $0x5c] sm:$0xf] %v403
      %468 = vst [vmem:[%s172 + $0x60] sm:$0xf] %v404
      %469 = vst [vmem:[%s172 + $0x64] sm:$0xf] %v405
      %470 = vst [vmem:[%s172 + $0x68] sm:$0xf] %v406
      %471 = vst [vmem:[%s172 + $0x6c] sm:$0xf] %v407
      %472 = vst [vmem:[%s172 + $0x70] sm:$0xf] %v408
      %473 = vst [vmem:[%s172 + $0x74] sm:$0xf] %v409
      %474 = vst [vmem:[%s172 + $0x78] sm:$0xf] %v410
      %475 = vst [vmem:[%s172 + $0x7c] sm:$0xf] %v411
      %s476 = smul.u32 32, %s14
      %p477 = scmp.lt.s32.totalorder %s476, 63
      %s478 = scalar_select %p477, %s476, 63
      %s479 = smul.addr %s478, 4
      %s480 = scalar_lea.vmem %s3, %s479
      // Predicated region
      $region33: #{conv_block_forward.5} parent=31 // pred_check
        %p481 = pneg %p100
      $region34: #{conv_block_forward.5} parent=31 // pred_check_branch
        %483 = sbr.rel (%p481) target = $region36
      $region35: #{conv_block_forward.5} parent=31 // pred_region
        %s484 = smul.u32 32, %s14
      $region36: #{conv_block_forward.5} parent=31 // pred_fallthru
        _
    $region32: #{conv_block_forward.5} parent=5 // pred_fallthru
      _
    %p485 = scmp.le.s32.totalorder 2, %s9
    // Predicated region
    $region37: #{conv_block_forward.5} parent=5 // pred_check
      %p486 = pneg %p485
    $region38: #{conv_block_forward.5} parent=5 // pred_check_branch
      %488 = sbr.rel (%p486) target = $region40
    $region39: #{conv_block_forward.5} parent=5 // pred_region
      %s489 = ssub.s32 %s9, 2
      // Predicated region
      $region41: #{conv_block_forward.5} parent=39 // pred_check
        %p490 = pneg %p106
      $region42: #{conv_block_forward.5} parent=39 // pred_check_branch
        %492 = sbr.rel (%p490) target = $region44
      $region43: #{conv_block_forward.5} parent=39 // pred_region
        %s493 = smul.u32 32, %s15
        %p494 = scmp.lt.s32.totalorder %s493, 63
        %s495 = scalar_select %p494, %s493, 63
        %s496 = smul.addr %s495, 4
        %s497 = scalar_lea.vmem %s3, %s496
      $region44: #{conv_block_forward.5} parent=39 // pred_fallthru
        _
    $region40: #{conv_block_forward.5} parent=5 // pred_fallthru
      _
  $region6: #{conv_block_forward.5} parent=0 // loop_footer
    %s13 = sadd.s32 1, %s9
  $region7: #{conv_block_forward.5} parent=0 // loop_footer_branch
    %8 = sbr.rel target = $region3
  $region8: #{conv_block_forward.5} parent=0 // loop_exit
    _

// kernel: conv_block_forward.7
$region0: #{conv_block_forward.7}
  #allocation0 [shape = 'u32[]', space=smem, size = 0x4, offset = 0x4, fixed_abs, tag = 'smem constant byte address 0x4 - core index']
  #allocation1 [shape = 'u32[144,128]{1,0:T(1,128)}', space=vmem, size = 0x12000, scoped, tag = 'internal scratch']
  %s0 = inlined_call_operand.vmem [shape: f32[512,128], index: 0, kind: input, shape index: {}]
  %s1 = inlined_call_operand.vmem [shape: f32[1,128], index: 1, kind: input, shape index: {}]
  %s2 = inlined_call_operand.vmem [shape: f32[1,128], index: 2, kind: input, shape index: {}]
  %s3 = inlined_call_operand.vmem [shape: f32[512,128], index: 3, kind: output, shape index: {}]
  %s4 = sld [smem:[#allocation0]]
  $region45: #{conv_block_forward.7} parent=0
    _
  %s6 = ssub.s32 1, %s4
  %s7 = scalar_select 0, %s6, %s4
  loop: start=0, step=1, limit=4
  $region2: #{conv_block_forward.7} parent=0 // loop_pre_header
    _
  $region3: #{conv_block_forward.7} parent=0 // loop_header
    %s9 = sphi 0, %s13
    %p10 = scmp.ge.s32.totalorder %s9, 4
    %s19 = sphi 0, %s21
    %s22 = sphi 0, %s19
    %s23 = sphi 0, %s22
    %s39 = sphi 0, %s23
    %s43 = sphi 0, %s43
    %s45 = sphi 0, %s43
    %s46 = sphi 0, %s45
    %s60 = sphi 0, %s46
    %s64 = sphi 0, %s64
    %s66 = sphi 0, %s64
    %s67 = sphi 0, %s66
    %s81 = sphi 0, %s67
    %s87 = sphi 0, %s89
    %s90 = sphi 0, %s87
    %s91 = sphi 0, %s90
    %s107 = sphi 0, %s91
  $region4: #{conv_block_forward.7} parent=0 // loop_header_branch
    %12 = sbr.rel (%p10) target = $region8
  $region5: #{conv_block_forward.7} parent=0 // loop_body
    %s14 = ssub.s32 %s9, 1
    %s15 = ssub.s32 %s9, 2
    %s16 = sadd.s32 %s9, 1
    %s17 = ssub.s32 %s9, %s16
    %p18 = scmp.eq.s32.totalorder %s17, 0
    %s20 = sadd.s32 %s19, 1
    %s21 = scalar_select %p18, %s19, %s20
    %p24 = pneg %p18
    %p25 = scmp.eq.s32.totalorder %s9, 1
    %p26 = por %p24, %p25
    %p27 = scmp.ne.s32.totalorder %s19, %s22
    %p28 = scmp.eq.s32.totalorder %s9, 0
    %p29 = por %p27, %p28
    %p30 = scmp.ne.s32.totalorder %s19, %s22
    %p31 = scmp.eq.s32.totalorder %s14, 1
    %p32 = por %p30, %p31
    %p33 = scmp.ne.s32.totalorder %s22, %s23
    %p34 = scmp.eq.s32.totalorder %s14, 0
    %p35 = por %p33, %p34
    %p36 = scmp.ne.s32.totalorder %s22, %s23
    %p37 = scmp.eq.s32.totalorder %s15, 1
    %p38 = por %p36, %p37
    %p40 = scmp.ne.s32.totalorder %s23, %s39
    %p41 = scmp.eq.s32.totalorder %s15, 0
    %p42 = por %p40, %p41
    %s44 = sadd.s32 %s43, 1
    %p47 = scmp.eq.s32.totalorder %s9, 1
    %p48 = scmp.ne.s32.totalorder %s43, %s45
    %p49 = scmp.eq.s32.totalorder %s9, 0
    %p50 = por %p48, %p49
    %p51 = scmp.ne.s32.totalorder %s43, %s45
    %p52 = scmp.eq.s32.totalorder %s14, 1
    %p53 = por %p51, %p52
    %p54 = scmp.ne.s32.totalorder %s45, %s46
    %p55 = scmp.eq.s32.totalorder %s14, 0
    %p56 = por %p54, %p55
    %p57 = scmp.ne.s32.totalorder %s45, %s46
    %p58 = scmp.eq.s32.totalorder %s15, 1
    %p59 = por %p57, %p58
    %p61 = scmp.ne.s32.totalorder %s46, %s60
    %p62 = scmp.eq.s32.totalorder %s15, 0
    %p63 = por %p61, %p62
    %s65 = sadd.s32 %s64, 1
    %p68 = scmp.eq.s32.totalorder %s9, 1
    %p69 = scmp.ne.s32.totalorder %s64, %s66
    %p70 = scmp.eq.s32.totalorder %s9, 0
    %p71 = por %p69, %p70
    %p72 = scmp.ne.s32.totalorder %s64, %s66
    %p73 = scmp.eq.s32.totalorder %s14, 1
    %p74 = por %p72, %p73
    %p75 = scmp.ne.s32.totalorder %s66, %s67
    %p76 = scmp.eq.s32.totalorder %s14, 0
    %p77 = por %p75, %p76
    %p78 = scmp.ne.s32.totalorder %s66, %s67
    %p79 = scmp.eq.s32.totalorder %s15, 1
    %p80 = por %p78, %p79
    %p82 = scmp.ne.s32.totalorder %s67, %s81
    %p83 = scmp.eq.s32.totalorder %s15, 0
    %p84 = por %p82, %p83
    %s85 = ssub.s32 %s9, %s16
    %p86 = scmp.eq.s32.totalorder %s85, 0
    %s88 = sadd.s32 %s87, 1
    %s89 = scalar_select %p86, %s87, %s88
    %p92 = pneg %p86
    %p93 = scmp.eq.s32.totalorder %s9, 1
    %p94 = por %p92, %p93
    %p95 = scmp.ne.s32.totalorder %s87, %s90
    %p96 = scmp.eq.s32.totalorder %s9, 0
    %p97 = por %p95, %p96
    %p98 = scmp.ne.s32.totalorder %s87, %s90
    %p99 = scmp.eq.s32.totalorder %s14, 1
    %p100 = por %p98, %p99
    %p101 = scmp.ne.s32.totalorder %s90, %s91
    %p102 = scmp.eq.s32.totalorder %s14, 0
    %p103 = por %p101, %p102
    %p104 = scmp.ne.s32.totalorder %s90, %s91
    %p105 = scmp.eq.s32.totalorder %s15, 1
    %p106 = por %p104, %p105
    %p108 = scmp.ne.s32.totalorder %s91, %s107
    %p109 = scmp.eq.s32.totalorder %s15, 0
    %p110 = por %p108, %p109
    %p111 = scmp.le.s32.totalorder 1, %s9
    %p112 = scmp.lt.s32.totalorder %s9, 3
    %p113 = pnand %p111, %p112
    %p114 = pneg %p113
    // Predicated region
    $region9: #{conv_block_forward.7} parent=5 // pred_check
      _
    $region10: #{conv_block_forward.7} parent=5 // pred_check_branch
      %116 = sbr.rel (%p113) target = $region12
    $region11: #{conv_block_forward.7} parent=5 // pred_region
      %s117 = ssub.s32 %s9, 1
      // Predicated region
      $region13: #{conv_block_forward.7} parent=11 // pred_check
        %p118 = pneg %p56
      $region14: #{conv_block_forward.7} parent=11 // pred_check_branch
        %120 = sbr.rel (%p118) target = $region16
      $region15: #{conv_block_forward.7} parent=11 // pred_region
        _
      $region16: #{conv_block_forward.7} parent=11 // pred_fallthru
        _
      // Predicated region
      $region17: #{conv_block_forward.7} parent=11 // pred_check
        %p121 = pneg %p77
      $region18: #{conv_block_forward.7} parent=11 // pred_check_branch
        %123 = sbr.rel (%p121) target = $region20
      $region19: #{conv_block_forward.7} parent=11 // pred_region
        _
      $region20: #{conv_block_forward.7} parent=11 // pred_fallthru
        _
    $region12: #{conv_block_forward.7} parent=5 // pred_fallthru
      _
    %p124 = scmp.lt.s32.totalorder %s9, 2
    // Predicated region
    $region21: #{conv_block_forward.7} parent=5 // pred_check
      %p125 = pneg %p124
    $region22: #{conv_block_forward.7} parent=5 // pred_check_branch
      %127 = sbr.rel (%p125) target = $region24
    $region23: #{conv_block_forward.7} parent=5 // pred_region
      // Predicated region
      $region25: #{conv_block_forward.7} parent=23 // pred_check
        %p128 = pneg %p29
      $region26: #{conv_block_forward.7} parent=23 // pred_check_branch
        %130 = sbr.rel (%p128) target = $region28
      $region27: #{conv_block_forward.7} parent=23 // pred_region
        %s131 = smul.u32 32, %s9
        %p132 = scmp.lt.s32.totalorder %s131, 63
        %s133 = scalar_select %p132, %s131, 63
        %s134 = smul.addr %s133, 8
        %s135 = scalar_lea.vmem %s0, %s134
        %s136 = smul.u32 32, %s9
      $region28: #{conv_block_forward.7} parent=23 // pred_fallthru
        _
    $region24: #{conv_block_forward.7} parent=5 // pred_fallthru
      _
    %p137 = scmp.le.s32.totalorder 1, %s9
    %p138 = scmp.lt.s32.totalorder %s9, 3
    %p139 = pnand %p137, %p138
    %p140 = pneg %p139
    // Predicated region
    $region29: #{conv_block_forward.7} parent=5 // pred_check
      _
    $region30: #{conv_block_forward.7} parent=5 // pred_check_branch
      %142 = sbr.rel (%p139) target = $region32
    $region31: #{conv_block_forward.7} parent=5 // pred_region
      %s143 = ssub.s32 %s9, 1
      %s144 = smul.u32 32, %s14
      %p145 = scmp.lt.s32.totalorder %s144, 63
      %s146 = scalar_select %p145, %s144, 63
      %s147 = smul.addr %s146, 8
      %s148 = scalar_lea.vmem %s0, %s147
      %p149 = pneg %p35
      %p150 = pneg %p32
      %p151 = pneg %p56
      %p152 = pneg %p53
      %p153 = pneg %p77
      %p154 = pneg %p74
      %p155 = pneg %p103
      %p156 = pneg %p100
      %s157 = smul.u32 32, %s14
      %p158 = scmp.lt.s32.totalorder %s157, 63
      %s159 = scalar_select %p158, %s157, 63
      %s160 = smul.addr %s159, 8
      %s161 = scalar_lea.vmem %s3, %s160
      %s162 = smul.u32 32, %s14
      %p163 = scmp.lt.s32.totalorder %s162, 63
      %s164 = scalar_select %p163, %s162, 63
      %s165 = smul.addr %s164, 8
      %s166 = scalar_lea.vmem %s0, %s165
      %s167 = smul.u32 32, %s14
      %s168 = smul.u32 32, %s14
      %p169 = scmp.lt.s32.totalorder %s168, 63
      %s170 = scalar_select %p169, %s168, 63
      %s171 = smul.addr %s170, 8
      %s172 = scalar_lea.vmem %s3, %s171
      %s173 = smul.u32 32, %s14
      %v174 = vld [vmem:[%s166] sm:$0xff]
      %v175 = vld [vmem:[%s166 + $0x8] sm:$0xff]
      %v176 = vld [vmem:[%s166 + $0x10] sm:$0xff]
      %v177 = vld [vmem:[%s166 + $0x18] sm:$0xff]
      %v178 = vld [vmem:[%s166 + $0x20] sm:$0xff]
      %v179 = vld [vmem:[%s166 + $0x28] sm:$0xff]
      %v180 = vld [vmem:[%s166 + $0x30] sm:$0xff]
      %v181 = vld [vmem:[%s166 + $0x38] sm:$0xff]
      %v182 = vld [vmem:[%s166 + $0x40] sm:$0xff]
      %v183 = vld [vmem:[%s166 + $0x48] sm:$0xff]
      %v184 = vld [vmem:[%s166 + $0x50] sm:$0xff]
      %v185 = vld [vmem:[%s166 + $0x58] sm:$0xff]
      %v186 = vld [vmem:[%s166 + $0x60] sm:$0xff]
      %v187 = vld [vmem:[%s166 + $0x68] sm:$0xff]
      %v188 = vld [vmem:[%s166 + $0x70] sm:$0xff]
      %v189 = vld [vmem:[%s166 + $0x78] sm:$0xff]
      %v190 = vld [vmem:[%s166 + $0x80] sm:$0xff]
      %v191 = vld [vmem:[%s166 + $0x88] sm:$0xff]
      %v192 = vld [vmem:[%s166 + $0x90] sm:$0xff]
      %v193 = vld [vmem:[%s166 + $0x98] sm:$0xff]
      %v194 = vld [vmem:[%s166 + $0xa0] sm:$0xff]
      %v195 = vld [vmem:[%s166 + $0xa8] sm:$0xff]
      %v196 = vld [vmem:[%s166 + $0xb0] sm:$0xff]
      %v197 = vld [vmem:[%s166 + $0xb8] sm:$0xff]
      %v198 = vld [vmem:[%s166 + $0xc0] sm:$0xff]
      %v199 = vld [vmem:[%s166 + $0xc8] sm:$0xff]
      %v200 = vld [vmem:[%s166 + $0xd0] sm:$0xff]
      %v201 = vld [vmem:[%s166 + $0xd8] sm:$0xff]
      %v202 = vld [vmem:[%s166 + $0xe0] sm:$0xff]
      %v203 = vld [vmem:[%s166 + $0xe8] sm:$0xff]
      %v204 = vld [vmem:[%s166 + $0xf0] sm:$0xff]
      %v205 = vld [vmem:[%s166 + $0xf8] sm:$0xff]
      %v206 = vld [vmem:[%s1] sm:$0x1]
      %v208 = vlaneseq
      %v209 = vshrl.u32 %v208, 7
      %v210 = vsub.s32 0, %v209
      %v211 = vrot.slane %v206, %v210
      %v213 = vmul.f32 %v174, %v211
      %v214 = vmul.f32 %v175, %v211
      %v215 = vmul.f32 %v176, %v211
      %v216 = vmul.f32 %v177, %v211
      %v217 = vmul.f32 %v178, %v211
      %v218 = vmul.f32 %v179, %v211
      %v219 = vmul.f32 %v180, %v211
      %v220 = vmul.f32 %v181, %v211
      %v221 = vmul.f32 %v182, %v211
      %v222 = vmul.f32 %v183, %v211
      %v223 = vmul.f32 %v184, %v211
      %v224 = vmul.f32 %v185, %v211
      %v225 = vmul.f32 %v186, %v211
      %v226 = vmul.f32 %v187, %v211
      %v227 = vmul.f32 %v188, %v211
      %v228 = vmul.f32 %v189, %v211
      %v229 = vmul.f32 %v190, %v211
      %v230 = vmul.f32 %v191, %v211
      %v231 = vmul.f32 %v192, %v211
      %v232 = vmul.f32 %v193, %v211
      %v233 = vmul.f32 %v194, %v211
      %v234 = vmul.f32 %v195, %v211
      %v235 = vmul.f32 %v196, %v211
      %v236 = vmul.f32 %v197, %v211
      %v237 = vmul.f32 %v198, %v211
      %v238 = vmul.f32 %v199, %v211
      %v239 = vmul.f32 %v200, %v211
      %v240 = vmul.f32 %v201, %v211
      %v241 = vmul.f32 %v202, %v211
      %v242 = vmul.f32 %v203, %v211
      %v243 = vmul.f32 %v204, %v211
      %v244 = vmul.f32 %v205, %v211
      %v245 = vld [vmem:[%s2] sm:$0x1]
      %v247 = vlaneseq
      %v248 = vshrl.u32 %v247, 7
      %v249 = vsub.s32 0, %v248
      %v250 = vrot.slane %v245, %v249
      %v252 = vadd.f32 %v213, %v250
      %v253 = vadd.f32 %v214, %v250
      %v254 = vadd.f32 %v215, %v250
      %v255 = vadd.f32 %v216, %v250
      %v256 = vadd.f32 %v217, %v250
      %v257 = vadd.f32 %v218, %v250
      %v258 = vadd.f32 %v219, %v250
      %v259 = vadd.f32 %v220, %v250
      %v260 = vadd.f32 %v221, %v250
      %v261 = vadd.f32 %v222, %v250
      %v262 = vadd.f32 %v223, %v250
      %v263 = vadd.f32 %v224, %v250
      %v264 = vadd.f32 %v225, %v250
      %v265 = vadd.f32 %v226, %v250
      %v266 = vadd.f32 %v227, %v250
      %v267 = vadd.f32 %v228, %v250
      %v268 = vadd.f32 %v229, %v250
      %v269 = vadd.f32 %v230, %v250
      %v270 = vadd.f32 %v231, %v250
      %v271 = vadd.f32 %v232, %v250
      %v272 = vadd.f32 %v233, %v250
      %v273 = vadd.f32 %v234, %v250
      %v274 = vadd.f32 %v235, %v250
      %v275 = vadd.f32 %v236, %v250
      %v276 = vadd.f32 %v237, %v250
      %v277 = vadd.f32 %v238, %v250
      %v278 = vadd.f32 %v239, %v250
      %v279 = vadd.f32 %v240, %v250
      %v280 = vadd.f32 %v241, %v250
      %v281 = vadd.f32 %v242, %v250
      %v282 = vadd.f32 %v243, %v250
      %v283 = vadd.f32 %v244, %v250
      %v284 = vmax.f32 %v252, 0.0
      %v285 = vmax.f32 %v253, 0.0
      %v286 = vmax.f32 %v254, 0.0
      %v287 = vmax.f32 %v255, 0.0
      %v288 = vmax.f32 %v256, 0.0
      %v289 = vmax.f32 %v257, 0.0
      %v290 = vmax.f32 %v258, 0.0
      %v291 = vmax.f32 %v259, 0.0
      %v292 = vmax.f32 %v260, 0.0
      %v293 = vmax.f32 %v261, 0.0
      %v294 = vmax.f32 %v262, 0.0
      %v295 = vmax.f32 %v263, 0.0
      %v296 = vmax.f32 %v264, 0.0
      %v297 = vmax.f32 %v265, 0.0
      %v298 = vmax.f32 %v266, 0.0
      %v299 = vmax.f32 %v267, 0.0
      %v300 = vmax.f32 %v268, 0.0
      %v301 = vmax.f32 %v269, 0.0
      %v302 = vmax.f32 %v270, 0.0
      %v303 = vmax.f32 %v271, 0.0
      %v304 = vmax.f32 %v272, 0.0
      %v305 = vmax.f32 %v273, 0.0
      %v306 = vmax.f32 %v274, 0.0
      %v307 = vmax.f32 %v275, 0.0
      %v308 = vmax.f32 %v276, 0.0
      %v309 = vmax.f32 %v277, 0.0
      %v310 = vmax.f32 %v278, 0.0
      %v311 = vmax.f32 %v279, 0.0
      %v312 = vmax.f32 %v280, 0.0
      %v313 = vmax.f32 %v281, 0.0
      %v314 = vmax.f32 %v282, 0.0
      %v315 = vmax.f32 %v283, 0.0
      %316 = vst [vmem:[%s172] sm:$0xff] %v284
      %317 = vst [vmem:[%s172 + $0x8] sm:$0xff] %v285
      %318 = vst [vmem:[%s172 + $0x10] sm:$0xff] %v286
      %319 = vst [vmem:[%s172 + $0x18] sm:$0xff] %v287
      %320 = vst [vmem:[%s172 + $0x20] sm:$0xff] %v288
      %321 = vst [vmem:[%s172 + $0x28] sm:$0xff] %v289
      %322 = vst [vmem:[%s172 + $0x30] sm:$0xff] %v290
      %323 = vst [vmem:[%s172 + $0x38] sm:$0xff] %v291
      %324 = vst [vmem:[%s172 + $0x40] sm:$0xff] %v292
      %325 = vst [vmem:[%s172 + $0x48] sm:$0xff] %v293
      %326 = vst [vmem:[%s172 + $0x50] sm:$0xff] %v294
      %327 = vst [vmem:[%s172 + $0x58] sm:$0xff] %v295
      %328 = vst [vmem:[%s172 + $0x60] sm:$0xff] %v296
      %329 = vst [vmem:[%s172 + $0x68] sm:$0xff] %v297
      %330 = vst [vmem:[%s172 + $0x70] sm:$0xff] %v298
      %331 = vst [vmem:[%s172 + $0x78] sm:$0xff] %v299
      %332 = vst [vmem:[%s172 + $0x80] sm:$0xff] %v300
      %333 = vst [vmem:[%s172 + $0x88] sm:$0xff] %v301
      %334 = vst [vmem:[%s172 + $0x90] sm:$0xff] %v302
      %335 = vst [vmem:[%s172 + $0x98] sm:$0xff] %v303
      %336 = vst [vmem:[%s172 + $0xa0] sm:$0xff] %v304
      %337 = vst [vmem:[%s172 + $0xa8] sm:$0xff] %v305
      %338 = vst [vmem:[%s172 + $0xb0] sm:$0xff] %v306
      %339 = vst [vmem:[%s172 + $0xb8] sm:$0xff] %v307
      %340 = vst [vmem:[%s172 + $0xc0] sm:$0xff] %v308
      %341 = vst [vmem:[%s172 + $0xc8] sm:$0xff] %v309
      %342 = vst [vmem:[%s172 + $0xd0] sm:$0xff] %v310
      %343 = vst [vmem:[%s172 + $0xd8] sm:$0xff] %v311
      %344 = vst [vmem:[%s172 + $0xe0] sm:$0xff] %v312
      %345 = vst [vmem:[%s172 + $0xe8] sm:$0xff] %v313
      %346 = vst [vmem:[%s172 + $0xf0] sm:$0xff] %v314
      %347 = vst [vmem:[%s172 + $0xf8] sm:$0xff] %v315
      %s348 = smul.u32 32, %s14
      %p349 = scmp.lt.s32.totalorder %s348, 63
      %s350 = scalar_select %p349, %s348, 63
      %s351 = smul.addr %s350, 8
      %s352 = scalar_lea.vmem %s3, %s351
      // Predicated region
      $region33: #{conv_block_forward.7} parent=31 // pred_check
        %p353 = pneg %p100
      $region34: #{conv_block_forward.7} parent=31 // pred_check_branch
        %355 = sbr.rel (%p353) target = $region36
      $region35: #{conv_block_forward.7} parent=31 // pred_region
        %s356 = smul.u32 32, %s14
      $region36: #{conv_block_forward.7} parent=31 // pred_fallthru
        _
    $region32: #{conv_block_forward.7} parent=5 // pred_fallthru
      _
    %p357 = scmp.le.s32.totalorder 2, %s9
    // Predicated region
    $region37: #{conv_block_forward.7} parent=5 // pred_check
      %p358 = pneg %p357
    $region38: #{conv_block_forward.7} parent=5 // pred_check_branch
      %360 = sbr.rel (%p358) target = $region40
    $region39: #{conv_block_forward.7} parent=5 // pred_region
      %s361 = ssub.s32 %s9, 2
      // Predicated region
      $region41: #{conv_block_forward.7} parent=39 // pred_check
        %p362 = pneg %p106
      $region42: #{conv_block_forward.7} parent=39 // pred_check_branch
        %364 = sbr.rel (%p362) target = $region44
      $region43: #{conv_block_forward.7} parent=39 // pred_region
        %s365 = smul.u32 32, %s15
        %p366 = scmp.lt.s32.totalorder %s365, 63
        %s367 = scalar_select %p366, %s365, 63
        %s368 = smul.addr %s367, 8
        %s369 = scalar_lea.vmem %s3, %s368
      $region44: #{conv_block_forward.7} parent=39 // pred_fallthru
        _
    $region40: #{conv_block_forward.7} parent=5 // pred_fallthru
      _
  $region6: #{conv_block_forward.7} parent=0 // loop_footer
    %s13 = sadd.s32 1, %s9
  $region7: #{conv_block_forward.7} parent=0 // loop_footer_branch
    %8 = sbr.rel target = $region3
  $region8: #{conv_block_forward.7} parent=0 // loop_exit
    _

// kernel: conv_block_forward.4
$region0: #{conv_block_forward.4}
  #allocation0 [shape = 'u32[]', space=smem, size = 0x4, offset = 0x4, fixed_abs, tag = 'smem constant byte address 0x4 - core index']
  #allocation1 [shape = 'u32[144,128]{1,0:T(1,128)}', space=vmem, size = 0x12000, scoped, tag = 'internal scratch']
  %s0 = inlined_call_operand.vmem [shape: bf16[2,18,18,128], index: 0, kind: input, shape index: {}]
  %s1 = inlined_call_operand.vmem [shape: bf16[9,128,128], index: 1, kind: input, shape index: {}]
  %s2 = inlined_call_operand.vmem [shape: f32[1,128], index: 2, kind: input, shape index: {}]
  %s3 = inlined_call_operand.vmem [shape: f32[2,256,128], index: 3, kind: output, shape index: {0}]
  %s4 = inlined_call_operand.vmem [shape: f32[2,2,128], index: 4, kind: output, shape index: {1}]
  %5 = xla_tuple %s3, %s4
  %s6 = sld [smem:[#allocation0]]
  $region53: #{conv_block_forward.4} parent=0
    _
  %s8 = ssub.s32 1, %s6
  %s9 = scalar_select 0, %s8, %s6
  loop: start=0, step=1, limit=4
  $region2: #{conv_block_forward.4} parent=0 // loop_pre_header
    _
  $region3: #{conv_block_forward.4} parent=0 // loop_header
    %s11 = sphi 0, %s15
    %p12 = scmp.ge.s32.totalorder %s11, 4
    %s21 = sphi 0, %s23
    %s24 = sphi 0, %s21
    %s25 = sphi 0, %s24
    %s41 = sphi 0, %s25
    %s45 = sphi 0, %s45
    %s47 = sphi 0, %s45
    %s48 = sphi 0, %s47
    %s62 = sphi 0, %s48
    %s66 = sphi 0, %s66
    %s68 = sphi 0, %s66
    %s69 = sphi 0, %s68
    %s83 = sphi 0, %s69
    %s89 = sphi 0, %s91
    %s92 = sphi 0, %s89
    %s93 = sphi 0, %s92
    %s109 = sphi 0, %s93
    %s115 = sphi 0, %s117
    %s118 = sphi 0, %s115
    %s119 = sphi 0, %s118
    %s135 = sphi 0, %s119
  $region4: #{conv_block_forward.4} parent=0 // loop_header_branch
    %14 = sbr.rel (%p12) target = $region8
  $region5: #{conv_block_forward.4} parent=0 // loop_body
    %s16 = ssub.s32 %s11, 1
    %s17 = ssub.s32 %s11, 2
    %s18 = sadd.s32 %s11, 1
    %s19 = ssub.s32 %s11, %s18
    %p20 = scmp.eq.s32.totalorder %s19, 0
    %s22 = sadd.s32 %s21, 1
    %s23 = scalar_select %p20, %s21, %s22
    %p26 = pneg %p20
    %p27 = scmp.eq.s32.totalorder %s11, 1
    %p28 = por %p26, %p27
    %p29 = scmp.ne.s32.totalorder %s21, %s24
    %p30 = scmp.eq.s32.totalorder %s11, 0
    %p31 = por %p29, %p30
    %p32 = scmp.ne.s32.totalorder %s21, %s24
    %p33 = scmp.eq.s32.totalorder %s16, 1
    %p34 = por %p32, %p33
    %p35 = scmp.ne.s32.totalorder %s24, %s25
    %p36 = scmp.eq.s32.totalorder %s16, 0
    %p37 = por %p35, %p36
    %p38 = scmp.ne.s32.totalorder %s24, %s25
    %p39 = scmp.eq.s32.totalorder %s17, 1
    %p40 = por %p38, %p39
    %p42 = scmp.ne.s32.totalorder %s25, %s41
    %p43 = scmp.eq.s32.totalorder %s17, 0
    %p44 = por %p42, %p43
    %s46 = sadd.s32 %s45, 1
    %p49 = scmp.eq.s32.totalorder %s11, 1
    %p50 = scmp.ne.s32.totalorder %s45, %s47
    %p51 = scmp.eq.s32.totalorder %s11, 0
    %p52 = por %p50, %p51
    %p53 = scmp.ne.s32.totalorder %s45, %s47
    %p54 = scmp.eq.s32.totalorder %s16, 1
    %p55 = por %p53, %p54
    %p56 = scmp.ne.s32.totalorder %s47, %s48
    %p57 = scmp.eq.s32.totalorder %s16, 0
    %p58 = por %p56, %p57
    %p59 = scmp.ne.s32.totalorder %s47, %s48
    %p60 = scmp.eq.s32.totalorder %s17, 1
    %p61 = por %p59, %p60
    %p63 = scmp.ne.s32.totalorder %s48, %s62
    %p64 = scmp.eq.s32.totalorder %s17, 0
    %p65 = por %p63, %p64
    %s67 = sadd.s32 %s66, 1
    %p70 = scmp.eq.s32.totalorder %s11, 1
    %p71 = scmp.ne.s32.totalorder %s66, %s68
    %p72 = scmp.eq.s32.totalorder %s11, 0
    %p73 = por %p71, %p72
    %p74 = scmp.ne.s32.totalorder %s66, %s68
    %p75 = scmp.eq.s32.totalorder %s16, 1
    %p76 = por %p74, %p75
    %p77 = scmp.ne.s32.totalorder %s68, %s69
    %p78 = scmp.eq.s32.totalorder %s16, 0
    %p79 = por %p77, %p78
    %p80 = scmp.ne.s32.totalorder %s68, %s69
    %p81 = scmp.eq.s32.totalorder %s17, 1
    %p82 = por %p80, %p81
    %p84 = scmp.ne.s32.totalorder %s69, %s83
    %p85 = scmp.eq.s32.totalorder %s17, 0
    %p86 = por %p84, %p85
    %s87 = ssub.s32 %s11, %s18
    %p88 = scmp.eq.s32.totalorder %s87, 0
    %s90 = sadd.s32 %s89, 1
    %s91 = scalar_select %p88, %s89, %s90
    %p94 = pneg %p88
    %p95 = scmp.eq.s32.totalorder %s11, 1
    %p96 = por %p94, %p95
    %p97 = scmp.ne.s32.totalorder %s89, %s92
    %p98 = scmp.eq.s32.totalorder %s11, 0
    %p99 = por %p97, %p98
    %p100 = scmp.ne.s32.totalorder %s89, %s92
    %p101 = scmp.eq.s32.totalorder %s16, 1
    %p102 = por %p100, %p101
    %p103 = scmp.ne.s32.totalorder %s92, %s93
    %p104 = scmp.eq.s32.totalorder %s16, 0
    %p105 = por %p103, %p104
    %p106 = scmp.ne.s32.totalorder %s92, %s93
    %p107 = scmp.eq.s32.totalorder %s17, 1
    %p108 = por %p106, %p107
    %p110 = scmp.ne.s32.totalorder %s93, %s109
    %p111 = scmp.eq.s32.totalorder %s17, 0
    %p112 = por %p110, %p111
    %s113 = ssub.s32 %s11, %s18
    %p114 = scmp.eq.s32.totalorder %s113, 0
    %s116 = sadd.s32 %s115, 1
    %s117 = scalar_select %p114, %s115, %s116
    %p120 = pneg %p114
    %p121 = scmp.eq.s32.totalorder %s11, 1
    %p122 = por %p120, %p121
    %p123 = scmp.ne.s32.totalorder %s115, %s118
    %p124 = scmp.eq.s32.totalorder %s11, 0
    %p125 = por %p123, %p124
    %p126 = scmp.ne.s32.totalorder %s115, %s118
    %p127 = scmp.eq.s32.totalorder %s16, 1
    %p128 = por %p126, %p127
    %p129 = scmp.ne.s32.totalorder %s118, %s119
    %p130 = scmp.eq.s32.totalorder %s16, 0
    %p131 = por %p129, %p130
    %p132 = scmp.ne.s32.totalorder %s118, %s119
    %p133 = scmp.eq.s32.totalorder %s17, 1
    %p134 = por %p132, %p133
    %p136 = scmp.ne.s32.totalorder %s119, %s135
    %p137 = scmp.eq.s32.totalorder %s17, 0
    %p138 = por %p136, %p137
    %p139 = scmp.le.s32.totalorder 1, %s11
    %p140 = scmp.lt.s32.totalorder %s11, 3
    %p141 = pnand %p139, %p140
    %p142 = pneg %p141
    // Predicated region
    $region9: #{conv_block_forward.4} parent=5 // pred_check
      _
    $region10: #{conv_block_forward.4} parent=5 // pred_check_branch
      %144 = sbr.rel (%p141) target = $region12
    $region11: #{conv_block_forward.4} parent=5 // pred_region
      %s145 = ssub.s32 %s11, 1
      // Predicated region
      $region13: #{conv_block_forward.4} parent=11 // pred_check
        %p146 = pneg %p58
      $region14: #{conv_block_forward.4} parent=11 // pred_check_branch
        %148 = sbr.rel (%p146) target = $region16
      $region15: #{conv_block_forward.4} parent=11 // pred_region
        _
      $region16: #{conv_block_forward.4} parent=11 // pred_fallthru
        _
      // Predicated region
      $region17: #{conv_block_forward.4} parent=11 // pred_check
        %p149 = pneg %p79
      $region18: #{conv_block_forward.4} parent=11 // pred_check_branch
        %151 = sbr.rel (%p149) target = $region20
      $region19: #{conv_block_forward.4} parent=11 // pred_region
        _
      $region20: #{conv_block_forward.4} parent=11 // pred_fallthru
        _
    $region12: #{conv_block_forward.4} parent=5 // pred_fallthru
      _
    %p152 = scmp.lt.s32.totalorder %s11, 2
    // Predicated region
    $region21: #{conv_block_forward.4} parent=5 // pred_check
      %p153 = pneg %p152
    $region22: #{conv_block_forward.4} parent=5 // pred_check_branch
      %155 = sbr.rel (%p153) target = $region24
    $region23: #{conv_block_forward.4} parent=5 // pred_region
      // Predicated region
      $region25: #{conv_block_forward.4} parent=23 // pred_check
        %p156 = pneg %p31
      $region26: #{conv_block_forward.4} parent=23 // pred_check_branch
        %158 = sbr.rel (%p156) target = $region28
      $region27: #{conv_block_forward.4} parent=23 // pred_region
        %p159 = scmp.lt.s32.totalorder %s11, 1
        %s160 = scalar_select %p159, %s11, 1
        %s161 = smul.addr %s160, 54
        %s162 = smul.addr %s161, 4
        %s163 = scalar_lea.vmem %s0, %s162
      $region28: #{conv_block_forward.4} parent=23 // pred_fallthru
        _
    $region24: #{conv_block_forward.4} parent=5 // pred_fallthru
      _
    %p164 = scmp.le.s32.totalorder 1, %s11
    %p165 = scmp.lt.s32.totalorder %s11, 3
    %p166 = pnand %p164, %p165
    %p167 = pneg %p166
    // Predicated region
    $region29: #{conv_block_forward.4} parent=5 // pred_check
      _
    $region30: #{conv_block_forward.4} parent=5 // pred_check_branch
      %169 = sbr.rel (%p166) target = $region32
    $region31: #{conv_block_forward.4} parent=5 // pred_region
      %s170 = ssub.s32 %s11, 1
      %p171 = scmp.lt.s32.totalorder %s16, 1
      %s172 = scalar_select %p171, %s16, 1
      %s173 = smul.addr %s172, 54
      %s174 = smul.addr %s173, 4
      %s175 = scalar_lea.vmem %s0, %s174
      %p176 = pneg %p37
      %p177 = pneg %p34
      %p178 = pneg %p58
      %p179 = pneg %p55
      %p180 = pneg %p79
      %p181 = pneg %p76
      %p182 = pneg %p105
      %p183 = pneg %p102
      %p184 = scmp.lt.s32.totalorder %s16, 1
      %s185 = scalar_select %p184, %s16, 1
      %s186 = smul.addr %s185, 32
      %s187 = smul.addr %s186, 8
      %s188 = scalar_lea.vmem %s3, %s187
      %p189 = pneg %p131
      %p190 = pneg %p128
      %p191 = scmp.lt.s32.totalorder %s16, 1
      %s192 = scalar_select %p191, %s16, 1
      %s193 = smul.addr %s192, 2
      %s194 = scalar_lea.vmem %s4, %s193
      %p195 = scmp.lt.s32.totalorder %s16, 1
      %s196 = scalar_select %p195, %s16, 1
      %s197 = smul.addr %s196, 54
      %s198 = smul.addr %s197, 4
      %s199 = scalar_lea.vmem %s0, %s198
      %p200 = scmp.lt.s32.totalorder %s16, 1
      %s201 = scalar_select %p200, %s16, 1
      %s202 = smul.addr %s201, 32
      %s203 = smul.addr %s202, 8
      %s204 = scalar_lea.vmem %s3, %s203
      %p205 = scmp.lt.s32.totalorder %s16, 1
      %s206 = scalar_select %p205, %s16, 1
      %s207 = smul.addr %s206, 2
      %s208 = scalar_lea.vmem %s4, %s207
      %v210 = vld [vmem:[%s199] sm:$0xf]
      %v211 = vld [vmem:[%s199 + $0x4] sm:$0xf]
      %v212 = vld [vmem:[%s199 + $0x8] sm:$0x1]
      %v213 = vld [vmem:[%s199 + $0xc] sm:$0xf]
      %v214 = vld [vmem:[%s199 + $0x10] sm:$0xf]
      %v215 = vld [vmem:[%s199 + $0x14] sm:$0x1]
      %v216 = vld [vmem:[%s199 + $0x18] sm:$0xf]
      %v217 = vld [vmem:[%s199 + $0x1c] sm:$0xf]
      %v218 = vld [vmem:[%s199 + $0x20] sm:$0x1]
      %v219 = vld [vmem:[%s199 + $0x24] sm:$0xf]
      %v220 = vld [vmem:[%s199 + $0x28] sm:$0xf]
      %v221 = vld [vmem:[%s199 + $0x2c] sm:$0x1]
      %v222 = vld [vmem:[%s199 + $0x30] sm:$0xf]
      %v223 = vld [vmem:[%s199 + $0x34] sm:$0xf]
      %v224 = vld [vmem:[%s199 + $0x38] sm:$0x1]
      %v225 = vld [vmem:[%s199 + $0x3c] sm:$0xf]
      %v226 = vld [vmem:[%s199 + $0x40] sm:$0xf]
      %v227 = vld [vmem:[%s199 + $0x44] sm:$0x1]
      %v228 = vld [vmem:[%s199 + $0x48] sm:$0xf]
      %v229 = vld [vmem:[%s199 + $0x4c] sm:$0xf]
      %v230 = vld [vmem:[%s199 + $0x50] sm:$0x1]
      %v231 = vld [vmem:[%s199 + $0x54] sm:$0xf]
      %v232 = vld [vmem:[%s199 + $0x58] sm:$0xf]
      %v233 = vld [vmem:[%s199 + $0x5c] sm:$0x1]
      %v234 = vld [vmem:[%s199 + $0x60] sm:$0xf]
      %v235 = vld [vmem:[%s199 + $0x64] sm:$0xf]
      %v236 = vld [vmem:[%s199 + $0x68] sm:$0x1]
      %v237 = vld [vmem:[%s199 + $0x6c] sm:$0xf]
      %v238 = vld [vmem:[%s199 + $0x70] sm:$0xf]
      %v239 = vld [vmem:[%s199 + $0x74] sm:$0x1]
      %v240 = vld [vmem:[%s199 + $0x78] sm:$0xf]
      %v241 = vld [vmem:[%s199 + $0x7c] sm:$0xf]
      %v242 = vld [vmem:[%s199 + $0x80] sm:$0x1]
      %v243 = vld [vmem:[%s199 + $0x84] sm:$0xf]
      %v244 = vld [vmem:[%s199 + $0x88] sm:$0xf]
      %v245 = vld [vmem:[%s199 + $0x8c] sm:$0x1]
      %v246 = vld [vmem:[%s199 + $0x90] sm:$0xf]
      %v247 = vld [vmem:[%s199 + $0x94] sm:$0xf]
      %v248 = vld [vmem:[%s199 + $0x98] sm:$0x1]
      %v249 = vld [vmem:[%s199 + $0x9c] sm:$0xf]
      %v250 = vld [vmem:[%s199 + $0xa0] sm:$0xf]
      %v251 = vld [vmem:[%s199 + $0xa4] sm:$0x1]
      %v252 = vld [vmem:[%s199 + $0xa8] sm:$0xf]
      %v253 = vld [vmem:[%s199 + $0xac] sm:$0xf]
      %v254 = vld [vmem:[%s199 + $0xb0] sm:$0x1]
      %v255 = vld [vmem:[%s199 + $0xb4] sm:$0xf]
      %v256 = vld [vmem:[%s199 + $0xb8] sm:$0xf]
      %v257 = vld [vmem:[%s199 + $0xbc] sm:$0x1]
      %v258 = vld [vmem:[%s199 + $0xc0] sm:$0xf]
      %v259 = vld [vmem:[%s199 + $0xc4] sm:$0xf]
      %v260 = vld [vmem:[%s199 + $0xc8] sm:$0x1]
      %v261 = vld [vmem:[%s199 + $0xcc] sm:$0xf]
      %v262 = vld [vmem:[%s199 + $0xd0] sm:$0xf]
      %v263 = vld [vmem:[%s199 + $0xd4] sm:$0x1]
      %v264 = vld [vmem:[%s2] sm:$0x1]
      %v266 = vlaneseq
      %v267 = vshrl.u32 %v266, 7
      %v268 = vsub.s32 0, %v267
      %v269 = vrot.slane %v264, %v268
      %271 = vst [vmem:[%s204] sm:$0xff] %v269
      %272 = vst [vmem:[%s204 + $0x8] sm:$0xff] %v269
      %273 = vst [vmem:[%s204 + $0x10] sm:$0xff] %v269
      %274 = vst [vmem:[%s204 + $0x18] sm:$0xff] %v269
      %275 = vst [vmem:[%s204 + $0x20] sm:$0xff] %v269
      %276 = vst [vmem:[%s204 + $0x28] sm:$0xff] %v269
      %277 = vst [vmem:[%s204 + $0x30] sm:$0xff] %v269
      %278 = vst [vmem:[%s204 + $0x38] sm:$0xff] %v269
      %279 = vst [vmem:[%s204 + $0x40] sm:$0xff] %v269
      %280 = vst [vmem:[%s204 + $0x48] sm:$0xff] %v269
      %281 = vst [vmem:[%s204 + $0x50] sm:$0xff] %v269
      %282 = vst [vmem:[%s204 + $0x58] sm:$0xff] %v269
      %283 = vst [vmem:[%s204 + $0x60] sm:$0xff] %v269
      %284 = vst [vmem:[%s204 + $0x68] sm:$0xff] %v269
      %285 = vst [vmem:[%s204 + $0x70] sm:$0xff] %v269
      %286 = vst [vmem:[%s204 + $0x78] sm:$0xff] %v269
      %287 = vst [vmem:[%s204 + $0x80] sm:$0xff] %v269
      %288 = vst [vmem:[%s204 + $0x88] sm:$0xff] %v269
      %289 = vst [vmem:[%s204 + $0x90] sm:$0xff] %v269
      %290 = vst [vmem:[%s204 + $0x98] sm:$0xff] %v269
      %291 = vst [vmem:[%s204 + $0xa0] sm:$0xff] %v269
      %292 = vst [vmem:[%s204 + $0xa8] sm:$0xff] %v269
      %293 = vst [vmem:[%s204 + $0xb0] sm:$0xff] %v269
      %294 = vst [vmem:[%s204 + $0xb8] sm:$0xff] %v269
      %295 = vst [vmem:[%s204 + $0xc0] sm:$0xff] %v269
      %296 = vst [vmem:[%s204 + $0xc8] sm:$0xff] %v269
      %297 = vst [vmem:[%s204 + $0xd0] sm:$0xff] %v269
      %298 = vst [vmem:[%s204 + $0xd8] sm:$0xff] %v269
      %299 = vst [vmem:[%s204 + $0xe0] sm:$0xff] %v269
      %300 = vst [vmem:[%s204 + $0xe8] sm:$0xff] %v269
      %301 = vst [vmem:[%s204 + $0xf0] sm:$0xff] %v269
      %302 = vst [vmem:[%s204 + $0xf8] sm:$0xff] %v269
      %v303 = vld [vmem:[%s204] sm:$0xff]
      %v304 = vld [vmem:[%s204 + $0x8] sm:$0xff]
      %v305 = vld [vmem:[%s204 + $0x10] sm:$0xff]
      %v306 = vld [vmem:[%s204 + $0x18] sm:$0xff]
      %v307 = vld [vmem:[%s204 + $0x20] sm:$0xff]
      %v308 = vld [vmem:[%s204 + $0x28] sm:$0xff]
      %v309 = vld [vmem:[%s204 + $0x30] sm:$0xff]
      %v310 = vld [vmem:[%s204 + $0x38] sm:$0xff]
      %v311 = vld [vmem:[%s204 + $0x40] sm:$0xff]
      %v312 = vld [vmem:[%s204 + $0x48] sm:$0xff]
      %v313 = vld [vmem:[%s204 + $0x50] sm:$0xff]
      %v314 = vld [vmem:[%s204 + $0x58] sm:$0xff]
      %v315 = vld [vmem:[%s204 + $0x60] sm:$0xff]
      %v316 = vld [vmem:[%s204 + $0x68] sm:$0xff]
      %v317 = vld [vmem:[%s204 + $0x70] sm:$0xff]
      %v318 = vld [vmem:[%s204 + $0x78] sm:$0xff]
      %v319 = vld [vmem:[%s204 + $0x80] sm:$0xff]
      %v320 = vld [vmem:[%s204 + $0x88] sm:$0xff]
      %v321 = vld [vmem:[%s204 + $0x90] sm:$0xff]
      %v322 = vld [vmem:[%s204 + $0x98] sm:$0xff]
      %v323 = vld [vmem:[%s204 + $0xa0] sm:$0xff]
      %v324 = vld [vmem:[%s204 + $0xa8] sm:$0xff]
      %v325 = vld [vmem:[%s204 + $0xb0] sm:$0xff]
      %v326 = vld [vmem:[%s204 + $0xb8] sm:$0xff]
      %v327 = vld [vmem:[%s204 + $0xc0] sm:$0xff]
      %v328 = vld [vmem:[%s204 + $0xc8] sm:$0xff]
      %v329 = vld [vmem:[%s204 + $0xd0] sm:$0xff]
      %v330 = vld [vmem:[%s204 + $0xd8] sm:$0xff]
      %v331 = vld [vmem:[%s204 + $0xe0] sm:$0xff]
      %v332 = vld [vmem:[%s204 + $0xe8] sm:$0xff]
      %v333 = vld [vmem:[%s204 + $0xf0] sm:$0xff]
      %v334 = vld [vmem:[%s204 + $0xf8] sm:$0xff]
      %v335 = vld [vmem:[%s1] sm:$0xf]
      %v336 = vld [vmem:[%s1 + $0x4] sm:$0xf]
      %v337 = vld [vmem:[%s1 + $0x8] sm:$0xf]
      %v338 = vld [vmem:[%s1 + $0xc] sm:$0xf]
      %v339 = vld [vmem:[%s1 + $0x10] sm:$0xf]
      %v340 = vld [vmem:[%s1 + $0x14] sm:$0xf]
      %v341 = vld [vmem:[%s1 + $0x18] sm:$0xf]
      %v342 = vld [vmem:[%s1 + $0x1c] sm:$0xf]
      %v343 = vld [vmem:[%s1 + $0x20] sm:$0xf]
      %v344 = vld [vmem:[%s1 + $0x24] sm:$0xf]
      %v345 = vld [vmem:[%s1 + $0x28] sm:$0xf]
      %v346 = vld [vmem:[%s1 + $0x2c] sm:$0xf]
      %v347 = vld [vmem:[%s1 + $0x30] sm:$0xf]
      %v348 = vld [vmem:[%s1 + $0x34] sm:$0xf]
      %v349 = vld [vmem:[%s1 + $0x38] sm:$0xf]
      %v350 = vld [vmem:[%s1 + $0x3c] sm:$0xf]
      %v383 = vunpack.c.l.b16 %v210
      %v384 = vunpack.c.l.b16 %v211
      %v385 = vunpack.c.l.b16 %v213
      %v386 = vunpack.c.l.b16 %v214
      %v387 = vunpack.c.l.b16 %v216
      %v388 = vunpack.c.l.b16 %v217
      %v389 = vunpack.c.l.b16 %v219
      %v390 = vunpack.c.l.b16 %v220
      %v391 = vunpack.c.l.b16 %v222
      %v392 = vunpack.c.l.b16 %v223
      %v393 = vunpack.c.l.b16 %v225
      %v394 = vunpack.c.l.b16 %v226
      %v395 = vunpack.c.l.b16 %v228
      %v396 = vunpack.c.l.b16 %v229
      %v397 = vunpack.c.l.b16 %v231
      %v398 = vunpack.c.l.b16 %v232
      %v399 = vunpack.c.l.b16 %v234
      %v400 = vunpack.c.l.b16 %v235
      %v401 = vunpack.c.l.b16 %v237
      %v402 = vunpack.c.l.b16 %v238
      %v403 = vunpack.c.l.b16 %v240
      %v404 = vunpack.c.l.b16 %v241
      %v405 = vunpack.c.l.b16 %v243
      %v406 = vunpack.c.l.b16 %v244
      %v407 = vunpack.c.l.b16 %v246
      %v408 = vunpack.c.l.b16 %v247
      %v409 = vunpack.c.l.b16 %v249
      %v410 = vunpack.c.l.b16 %v250
      %v411 = vunpack.c.l.b16 %v252
      %v412 = vunpack.c.l.b16 %v253
      %v413 = vunpack.c.l.b16 %v255
      %v414 = vunpack.c.l.b16 %v256
      %v415 = vpack.c.b16 %v384, %v383
      %v416 = vpack.c.b16 %v386, %v385
      %v417 = vpack.c.b16 %v388, %v387
      %v418 = vpack.c.b16 %v390, %v389
      %v419 = vpack.c.b16 %v392, %v391
      %v420 = vpack.c.b16 %v394, %v393
      %v421 = vpack.c.b16 %v396, %v395
      %v422 = vpack.c.b16 %v398, %v397
      %v423 = vpack.c.b16 %v400, %v399
      %v424 = vpack.c.b16 %v402, %v401
      %v425 = vpack.c.b16 %v404, %v403
      %v426 = vpack.c.b16 %v406, %v405
      %v427 = vpack.c.b16 %v408, %v407
      %v428 = vpack.c.b16 %v410, %v409
      %v429 = vpack.c.b16 %v412, %v411
      %v430 = vpack.c.b16 %v414, %v413
      %v463 = vunpack.c.l.b16 %v335
      %v464 = vunpack.c.l.b16 %v336
      %v465 = vunpack.c.l.b16 %v337
      %v466 = vunpack.c.l.b16 %v338
      %v467 = vunpack.c.l.b16 %v339
      %v468 = vunpack.c.l.b16 %v340
      %v469 = vunpack.c.l.b16 %v341
      %v470 = vunpack.c.l.b16 %v342
      %v471 = vunpack.c.l.b16 %v343
      %v472 = vunpack.c.l.b16 %v344
      %v473 = vunpack.c.l.b16 %v345
      %v474 = vunpack.c.l.b16 %v346
      %v475 = vunpack.c.l.b16 %v347
      %v476 = vunpack.c.l.b16 %v348
      %v477 = vunpack.c.l.b16 %v349
      %v478 = vunpack.c.l.b16 %v350
      %v479 = vpack.c.b16 %v464, %v463
      %v480 = vpack.c.b16 %v466, %v465
      %v481 = vpack.c.b16 %v468, %v467
      %v482 = vpack.c.b16 %v470, %v469
      %v483 = vpack.c.b16 %v472, %v471
      %v484 = vpack.c.b16 %v474, %v473
      %v485 = vpack.c.b16 %v476, %v475
      %v486 = vpack.c.b16 %v478, %v477
      %495 = vmatprep.subr.bf16.mxu0 0
      %496 = vmatpush1.bf16.msra.mxu0 %v479
      %497 = vmatprep.subr.bf16.mxu0 0
      %498 = vmatpush1.bf16.msra.mxu0 %v480
      %499 = vmatprep.subr.bf16.mxu0 0
      %500 = vmatpush1.bf16.msra.mxu0 %v481
      %501 = vmatprep.subr.bf16.mxu0 0
      %502 = vmatpush1.bf16.msra.mxu0 %v482
      %503 = vmatprep.subr.bf16.mxu0 0
      %504 = vmatpush1.bf16.msra.mxu0 %v483
      %505 = vmatprep.subr.bf16.mxu0 0
      %506 = vmatpush1.bf16.msra.mxu0 %v484
      %507 = vmatprep.subr.bf16.mxu0 0
      %508 = vmatpush1.bf16.msra.mxu0 %v485
      %509 = vmatprep.subr.bf16.mxu0 0
      %510 = vmatpush1.bf16.msra.mxu0 %v486
      %511 = vmatprep.subr.bf16.mxu0 0
      %512 = vmatpush1.bf16.msra.mxu0 0
      %513 = vmatprep.subr.bf16.mxu0 0
      %514 = vmatpush1.bf16.msra.mxu0 0
      %515 = vmatprep.subr.bf16.mxu0 0
      %516 = vmatpush1.bf16.msra.mxu0 0
      %517 = vmatprep.subr.bf16.mxu0 0
      %518 = vmatpush1.bf16.msra.mxu0 0
      %519 = vmatprep.subr.bf16.mxu0 0
      %520 = vmatpush1.bf16.msra.mxu0 0
      %521 = vmatprep.subr.bf16.mxu0 0
      %522 = vmatpush1.bf16.msra.mxu0 0
      %523 = vmatprep.subr.bf16.mxu0 0
      %524 = vmatpush1.bf16.msra.mxu0 0
      %525 = vmatprep.subr.bf16.mxu0 0
      %526 = vmatpush1.bf16.msra.mxu0 0
      %527 = vmatprep.mubr.bf16.mxu0 0
      %528 = vmatmul.mubr.bf16.gmra.mrb[0].mxu0 %v415
      %v529 = vpop.f32.mrb[0].mxu0
      %v530 = vadd.f32 0.0, %v529
      %v531 = vpop.f32.mrb[0].mxu0
      %v532 = vpop.f32.mrb[0].mxu0
      %v533 = vadd.f32 0.0, %v532
      %v534 = vpop.f32.mrb[0].mxu0
      %535 = vmatprep.mubr.bf16.mxu0 0
      %536 = vmatmul.mubr.bf16.gmra.mrb[0].mxu0 %v416
      %v537 = vpop.f32.mrb[0].mxu0
      %v538 = vadd.f32 0.0, %v537
      %v539 = vpop.f32.mrb[0].mxu0
      %v540 = vpop.f32.mrb[0].mxu0
      %v541 = vadd.f32 0.0, %v540
      %v542 = vpop.f32.mrb[0].mxu0
      %543 = vmatprep.mubr.bf16.mxu0 0
      %544 = vmatmul.mubr.bf16.gmra.mrb[0].mxu0 %v417
      %v545 = vpop.f32.mrb[0].mxu0
      %v546 = vadd.f32 0.0, %v545
      %v547 = vpop.f32.mrb[0].mxu0
      %v548 = vpop.f32.mrb[0].mxu0
      %v549 = vadd.f32 0.0, %v548
      %v550 = vpop.f32.mrb[0].mxu0
      %551 = vmatprep.mubr.bf16.mxu0 0
      %552 = vmatmul.mubr.bf16.gmra.mrb[0].mxu0 %v418
      %v553 = vpop.f32.mrb[0].mxu0
      %v554 = vadd.f32 0.0, %v553
      %v555 = vpop.f32.mrb[0].mxu0
      %v556 = vpop.f32.mrb[0].mxu0
      %v557 = vadd.f32 0.0, %v556
      %v558 = vpop.f32.mrb[0].mxu0
      %559 = vmatprep.mubr.bf16.mxu0 0
      %560 = vmatmul.mubr.bf16.gmra.mrb[0].mxu0 %v419
      %v561 = vpop.f32.mrb[0].mxu0
      %v562 = vadd.f32 0.0, %v561
      %v563 = vpop.f32.mrb[0].mxu0
      %v564 = vpop.f32.mrb[0].mxu0
      %v565 = vadd.f32 0.0, %v564
      %v566 = vpop.f32.mrb[0].mxu0
      %567 = vmatprep.mubr.bf16.mxu0 0
      %568 = vmatmul.mubr.bf16.gmra.mrb[0].mxu0 %v420
      %v569 = vpop.f32.mrb[0].mxu0
      %v570 = vadd.f32 0.0, %v569
      %v571 = vpop.f32.mrb[0].mxu0
      %v572 = vpop.f32.mrb[0].mxu0
      %v573 = vadd.f32 0.0, %v572
      %v574 = vpop.f32.mrb[0].mxu0
      %575 = vmatprep.mubr.bf16.mxu0 0
      %576 = vmatmul.mubr.bf16.gmra.mrb[0].mxu0 %v421
      %v577 = vpop.f32.mrb[0].mxu0
      %v578 = vadd.f32 0.0, %v577
      %v579 = vpop.f32.mrb[0].mxu0
      %v580 = vpop.f32.mrb[0].mxu0
      %v581 = vadd.f32 0.0, %v580
      %v582 = vpop.f32.mrb[0].mxu0
      %583 = vmatprep.mubr.bf16.mxu0 0
      %584 = vmatmul.mubr.bf16.gmra.mrb[0].mxu0 %v422
      %v585 = vpop.f32.mrb[0].mxu0
      %v586 = vadd.f32 0.0, %v585
      %v587 = vpop.f32.mrb[0].mxu0
      %v588 = vpop.f32.mrb[0].mxu0
      %v589 = vadd.f32 0.0, %v588
      %v590 = vpop.f32.mrb[0].mxu0
      %591 = vmatprep.mubr.bf16.mxu0 0
      %592 = vmatmul.mubr.bf16.gmra.mrb[0].mxu0 %v423
      %v593 = vpop.f32.mrb[0].mxu0
      %v594 = vadd.f32 0.0, %v593
      %v595 = vpop.f32.mrb[0].mxu0
      %v596 = vpop.f32.mrb[0].mxu0
      %v597 = vadd.f32 0.0, %v596
      %v598 = vpop.f32.mrb[0].mxu0
      %599 = vmatprep.mubr.bf16.mxu0 0
      %600 = vmatmul.mubr.bf16.gmra.mrb[0].mxu0 %v424
      %v601 = vpop.f32.mrb[0].mxu0
      %v602 = vadd.f32 0.0, %v601
      %v603 = vpop.f32.mrb[0].mxu0
      %v604 = vpop.f32.mrb[0].mxu0
      %v605 = vadd.f32 0.0, %v604
      %v606 = vpop.f32.mrb[0].mxu0
      %607 = vmatprep.mubr.bf16.mxu0 0
      %608 = vmatmul.mubr.bf16.gmra.mrb[0].mxu0 %v425
      %v609 = vpop.f32.mrb[0].mxu0
      %v610 = vadd.f32 0.0, %v609
      %v611 = vpop.f32.mrb[0].mxu0
      %v612 = vpop.f32.mrb[0].mxu0
      %v613 = vadd.f32 0.0, %v612
      %v614 = vpop.f32.mrb[0].mxu0
      %615 = vmatprep.mubr.bf16.mxu0 0
      %616 = vmatmul.mubr.bf16.gmra.mrb[0].mxu0 %v426
      %v617 = vpop.f32.mrb[0].mxu0
      %v618 = vadd.f32 0.0, %v617
      %v619 = vpop.f32.mrb[0].mxu0
      %v620 = vpop.f32.mrb[0].mxu0
      %v621 = vadd.f32 0.0, %v620
      %v622 = vpop.f32.mrb[0].mxu0
      %623 = vmatprep.mubr.bf16.mxu0 0
      %624 = vmatmul.mubr.bf16.gmra.mrb[0].mxu0 %v427
      %v625 = vpop.f32.mrb[0].mxu0
      %v626 = vadd.f32 0.0, %v625
      %v627 = vpop.f32.mrb[0].mxu0
      %v628 = vpop.f32.mrb[0].mxu0
      %v629 = vadd.f32 0.0, %v628
      %v630 = vpop.f32.mrb[0].mxu0
      %631 = vmatprep.mubr.bf16.mxu0 0
      %632 = vmatmul.mubr.bf16.gmra.mrb[0].mxu0 %v428
      %v633 = vpop.f32.mrb[0].mxu0
      %v634 = vadd.f32 0.0, %v633
      %v635 = vpop.f32.mrb[0].mxu0
      %v636 = vpop.f32.mrb[0].mxu0
      %v637 = vadd.f32 0.0, %v636
      %v638 = vpop.f32.mrb[0].mxu0
      %639 = vmatprep.mubr.bf16.mxu0 0
      %640 = vmatmul.mubr.bf16.gmra.mrb[0].mxu0 %v429
      %v641 = vpop.f32.mrb[0].mxu0
      %v642 = vadd.f32 0.0, %v641
      %v643 = vpop.f32.mrb[0].mxu0
      %v644 = vpop.f32.mrb[0].mxu0
      %v645 = vadd.f32 0.0, %v644
      %v646 = vpop.f32.mrb[0].mxu0
      %647 = vmatprep.mubr.bf16.mxu0 0
      %648 = vmatmul.mubr.bf16.gmra.mrb[0].mxu0 %v430
      %v649 = vpop.f32.mrb[0].mxu0
      %v650 = vadd.f32 0.0, %v649
      %v651 = vpop.f32.mrb[0].mxu0
      %v652 = vpop.f32.mrb[0].mxu0
      %v653 = vadd.f32 0.0, %v652
      %v654 = vpop.f32.mrb[0].mxu0
      %655 = vdwg.mxu0
      %v656 = vadd.f32 %v303, %v530
      %v657 = vadd.f32 %v304, %v533
      %v658 = vadd.f32 %v305, %v538
      %v659 = vadd.f32 %v306, %v541
      %v660 = vadd.f32 %v307, %v546
      %v661 = vadd.f32 %v308, %v549
      %v662 = vadd.f32 %v309, %v554
      %v663 = vadd.f32 %v310, %v557
      %v664 = vadd.f32 %v311, %v562
      %v665 = vadd.f32 %v312, %v565
      %v666 = vadd.f32 %v313, %v570
      %v667 = vadd.f32 %v314, %v573
      %v668 = vadd.f32 %v315, %v578
      %v669 = vadd.f32 %v316, %v581
      %v670 = vadd.f32 %v317, %v586
      %v671 = vadd.f32 %v318, %v589
      %v672 = vadd.f32 %v319, %v594
      %v673 = vadd.f32 %v320, %v597
      %v674 = vadd.f32 %v321, %v602
      %v675 = vadd.f32 %v322, %v605
      %v676 = vadd.f32 %v323, %v610
      %v677 = vadd.f32 %v324, %v613
      %v678 = vadd.f32 %v325, %v618
      %v679 = vadd.f32 %v326, %v621
      %v680 = vadd.f32 %v327, %v626
      %v681 = vadd.f32 %v328, %v629
      %v682 = vadd.f32 %v329, %v634
      %v683 = vadd.f32 %v330, %v637
      %v684 = vadd.f32 %v331, %v642
      %v685 = vadd.f32 %v332, %v645
      %v686 = vadd.f32 %v333, %v650
      %v687 = vadd.f32 %v334, %v653
      %688 = vst [vmem:[%s204] sm:$0xff] %v656
      %689 = vst [vmem:[%s204 + $0x8] sm:$0xff] %v657
      %690 = vst [vmem:[%s204 + $0x10] sm:$0xff] %v658
      %691 = vst [vmem:[%s204 + $0x18] sm:$0xff] %v659
      %692 = vst [vmem:[%s204 + $0x20] sm:$0xff] %v660
      %693 = vst [vmem:[%s204 + $0x28] sm:$0xff] %v661
      %694 = vst [vmem:[%s204 + $0x30] sm:$0xff] %v662
      %695 = vst [vmem:[%s204 + $0x38] sm:$0xff] %v663
      %696 = vst [vmem:[%s204 + $0x40] sm:$0xff] %v664
      %697 = vst [vmem:[%s204 + $0x48] sm:$0xff] %v665
      %698 = vst [vmem:[%s204 + $0x50] sm:$0xff] %v666
      %699 = vst [vmem:[%s204 + $0x58] sm:$0xff] %v667
      %700 = vst [vmem:[%s204 + $0x60] sm:$0xff] %v668
      %701 = vst [vmem:[%s204 + $0x68] sm:$0xff] %v669
      %702 = vst [vmem:[%s204 + $0x70] sm:$0xff] %v670
      %703 = vst [vmem:[%s204 + $0x78] sm:$0xff] %v671
      %704 = vst [vmem:[%s204 + $0x80] sm:$0xff] %v672
      %705 = vst [vmem:[%s204 + $0x88] sm:$0xff] %v673
      %706 = vst [vmem:[%s204 + $0x90] sm:$0xff] %v674
      %707 = vst [vmem:[%s204 + $0x98] sm:$0xff] %v675
      %708 = vst [vmem:[%s204 + $0xa0] sm:$0xff] %v676
      %709 = vst [vmem:[%s204 + $0xa8] sm:$0xff] %v677
      %710 = vst [vmem:[%s204 + $0xb0] sm:$0xff] %v678
      %711 = vst [vmem:[%s204 + $0xb8] sm:$0xff] %v679
      %712 = vst [vmem:[%s204 + $0xc0] sm:$0xff] %v680
      %713 = vst [vmem:[%s204 + $0xc8] sm:$0xff] %v681
      %714 = vst [vmem:[%s204 + $0xd0] sm:$0xff] %v682
      %715 = vst [vmem:[%s204 + $0xd8] sm:$0xff] %v683
      %716 = vst [vmem:[%s204 + $0xe0] sm:$0xff] %v684
      %717 = vst [vmem:[%s204 + $0xe8] sm:$0xff] %v685
      %718 = vst [vmem:[%s204 + $0xf0] sm:$0xff] %v686
      %719 = vst [vmem:[%s204 + $0xf8] sm:$0xff] %v687
      %vm720 = vsmask.f32 3328
      %vm721 = vsmask.f32 7440
      %vm722 = vmor %vm720, %vm721
      %v724 = vshrl.u32 %v210, 16
      %v726 = vrot.slane %v724, 4
      %v727 = vshll.u32 %v210, 16
      %v729 = vrot.slane %v727, 5
      %v730 = vor.u32 %v726, %v729
      %v731 = vrot.slane %v730, 4
      %v733 = vshll.u32 %v211, 16
      %v735 = vrot.slane %v733, 5
      %v736 = vsel %vm722, %v731, %v735
      %v737 = vshrl.u32 %v211, 16
      %v739 = vrot.slane %v737, 4
      %v740 = vor.u32 %v739, %v735
      %v741 = vrot.slane %v740, 4
      %v743 = vshll.u32 %v212, 16
      %v745 = vrot.slane %v743, 5
      %v746 = vsel %vm722, %v741, %v745
      %v748 = vshrl.u32 %v213, 16
      %v750 = vrot.slane %v748, 4
      %v751 = vshll.u32 %v213, 16
      %v753 = vrot.slane %v751, 5
      %v754 = vor.u32 %v750, %v753
      %v755 = vrot.slane %v754, 4
      %v757 = vshll.u32 %v214, 16
      %v759 = vrot.slane %v757, 5
      %v760 = vsel %vm722, %v755, %v759
      %v761 = vshrl.u32 %v214, 16
      %v763 = vrot.slane %v761, 4
      %v764 = vor.u32 %v763, %v759
      %v765 = vrot.slane %v764, 4
      %v767 = vshll.u32 %v215, 16
      %v769 = vrot.slane %v767, 5
      %v770 = vsel %vm722, %v765, %v769
      %v772 = vshrl.u32 %v216, 16
      %v774 = vrot.slane %v772, 4
      %v775 = vshll.u32 %v216, 16
      %v777 = vrot.slane %v775, 5
      %v778 = vor.u32 %v774, %v777
      %v779 = vrot.slane %v778, 4
      %v781 = vshll.u32 %v217, 16
      %v783 = vrot.slane %v781, 5
      %v784 = vsel %vm722, %v779, %v783
      %v785 = vshrl.u32 %v217, 16
      %v787 = vrot.slane %v785, 4
      %v788 = vor.u32 %v787, %v783
      %v789 = vrot.slane %v788, 4
      %v791 = vshll.u32 %v218, 16
      %v793 = vrot.slane %v791, 5
      %v794 = vsel %vm722, %v789, %v793
      %v796 = vshrl.u32 %v219, 16
      %v798 = vrot.slane %v796, 4
      %v799 = vshll.u32 %v219, 16
      %v801 = vrot.slane %v799, 5
      %v802 = vor.u32 %v798, %v801
      %v803 = vrot.slane %v802, 4
      %v805 = vshll.u32 %v220, 16
      %v807 = vrot.slane %v805, 5
      %v808 = vsel %vm722, %v803, %v807
      %v809 = vshrl.u32 %v220, 16
      %v811 = vrot.slane %v809, 4
      %v812 = vor.u32 %v811, %v807
      %v813 = vrot.slane %v812, 4
      %v815 = vshll.u32 %v221, 16
      %v817 = vrot.slane %v815, 5
      %v818 = vsel %vm722, %v813, %v817
      %v820 = vshrl.u32 %v222, 16
      %v822 = vrot.slane %v820, 4
      %v823 = vshll.u32 %v222, 16
      %v825 = vrot.slane %v823, 5
      %v826 = vor.u32 %v822, %v825
      %v827 = vrot.slane %v826, 4
      %v829 = vshll.u32 %v223, 16
      %v831 = vrot.slane %v829, 5
      %v832 = vsel %vm722, %v827, %v831
      %v833 = vshrl.u32 %v223, 16
      %v835 = vrot.slane %v833, 4
      %v836 = vor.u32 %v835, %v831
      %v837 = vrot.slane %v836, 4
      %v839 = vshll.u32 %v224, 16
      %v841 = vrot.slane %v839, 5
      %v842 = vsel %vm722, %v837, %v841
      %v844 = vshrl.u32 %v225, 16
      %v846 = vrot.slane %v844, 4
      %v847 = vshll.u32 %v225, 16
      %v849 = vrot.slane %v847, 5
      %v850 = vor.u32 %v846, %v849
      %v851 = vrot.slane %v850, 4
      %v853 = vshll.u32 %v226, 16
      %v855 = vrot.slane %v853, 5
      %v856 = vsel %vm722, %v851, %v855
      %v857 = vshrl.u32 %v226, 16
      %v859 = vrot.slane %v857, 4
      %v860 = vor.u32 %v859, %v855
      %v861 = vrot.slane %v860, 4
      %v863 = vshll.u32 %v227, 16
      %v865 = vrot.slane %v863, 5
      %v866 = vsel %vm722, %v861, %v865
      %v868 = vshrl.u32 %v228, 16
      %v870 = vrot.slane %v868, 4
      %v871 = vshll.u32 %v228, 16
      %v873 = vrot.slane %v871, 5
      %v874 = vor.u32 %v870, %v873
      %v875 = vrot.slane %v874, 4
      %v877 = vshll.u32 %v229, 16
      %v879 = vrot.slane %v877, 5
      %v880 = vsel %vm722, %v875, %v879
      %v881 = vshrl.u32 %v229, 16
      %v883 = vrot.slane %v881, 4
      %v884 = vor.u32 %v883, %v879
      %v885 = vrot.slane %v884, 4
      %v887 = vshll.u32 %v230, 16
      %v889 = vrot.slane %v887, 5
      %v890 = vsel %vm722, %v885, %v889
      %v892 = vshrl.u32 %v231, 16
      %v894 = vrot.slane %v892, 4
      %v895 = vshll.u32 %v231, 16
      %v897 = vrot.slane %v895, 5
      %v898 = vor.u32 %v894, %v897
      %v899 = vrot.slane %v898, 4
      %v901 = vshll.u32 %v232, 16
      %v903 = vrot.slane %v901, 5
      %v904 = vsel %vm722, %v899, %v903
      %v905 = vshrl.u32 %v232, 16
      %v907 = vrot.slane %v905, 4
      %v908 = vor.u32 %v907, %v903
      %v909 = vrot.slane %v908, 4
      %v911 = vshll.u32 %v233, 16
      %v913 = vrot.slane %v911, 5
      %v914 = vsel %vm722, %v909, %v913
      %v916 = vshrl.u32 %v234, 16
      %v918 = vrot.slane %v916, 4
      %v919 = vshll.u32 %v234, 16
      %v921 = vrot.slane %v919, 5
      %v922 = vor.u32 %v918, %v921
      %v923 = vrot.slane %v922, 4
      %v925 = vshll.u32 %v235, 16
      %v927 = vrot.slane %v925, 5
      %v928 = vsel %vm722, %v923, %v927
      %v929 = vshrl.u32 %v235, 16
      %v931 = vrot.slane %v929, 4
      %v932 = vor.u32 %v931, %v927
      %v933 = vrot.slane %v932, 4
      %v935 = vshll.u32 %v236, 16
      %v937 = vrot.slane %v935, 5
      %v938 = vsel %vm722, %v933, %v937
      %v940 = vshrl.u32 %v237, 16
      %v942 = vrot.slane %v940, 4
      %v943 = vshll.u32 %v237, 16
      %v945 = vrot.slane %v943, 5
      %v946 = vor.u32 %v942, %v945
      %v947 = vrot.slane %v946, 4
      %v949 = vshll.u32 %v238, 16
      %v951 = vrot.slane %v949, 5
      %v952 = vsel %vm722, %v947, %v951
      %v953 = vshrl.u32 %v238, 16
      %v955 = vrot.slane %v953, 4
      %v956 = vor.u32 %v955, %v951
      %v957 = vrot.slane %v956, 4
      %v959 = vshll.u32 %v239, 16
      %v961 = vrot.slane %v959, 5
      %v962 = vsel %vm722, %v957, %v961
      %v964 = vshrl.u32 %v240, 16
      %v966 = vrot.slane %v964, 4
      %v967 = vshll.u32 %v240, 16
      %v969 = vrot.slane %v967, 5
      %v970 = vor.u32 %v966, %v969
      %v971 = vrot.slane %v970, 4
      %v973 = vshll.u32 %v241, 16
      %v975 = vrot.slane %v973, 5
      %v976 = vsel %vm722, %v971, %v975
      %v977 = vshrl.u32 %v241, 16
      %v979 = vrot.slane %v977, 4
      %v980 = vor.u32 %v979, %v975
      %v981 = vrot.slane %v980, 4
      %v983 = vshll.u32 %v242, 16
      %v985 = vrot.slane %v983, 5
      %v986 = vsel %vm722, %v981, %v985
      %v988 = vshrl.u32 %v243, 16
      %v990 = vrot.slane %v988, 4
      %v991 = vshll.u32 %v243, 16
      %v993 = vrot.slane %v991, 5
      %v994 = vor.u32 %v990, %v993
      %v995 = vrot.slane %v994, 4
      %v997 = vshll.u32 %v244, 16
      %v999 = vrot.slane %v997, 5
      %v1000 = vsel %vm722, %v995, %v999
      %v1001 = vshrl.u32 %v244, 16
      %v1003 = vrot.slane %v1001, 4
      %v1004 = vor.u32 %v1003, %v999
      %v1005 = vrot.slane %v1004, 4
      %v1007 = vshll.u32 %v245, 16
      %v1009 = vrot.slane %v1007, 5
      %v1010 = vsel %vm722, %v1005, %v1009
      %v1012 = vshrl.u32 %v246, 16
      %v1014 = vrot.slane %v1012, 4
      %v1015 = vshll.u32 %v246, 16
      %v1017 = vrot.slane %v1015, 5
      %v1018 = vor.u32 %v1014, %v1017
      %v1019 = vrot.slane %v1018, 4
      %v1021 = vshll.u32 %v247, 16
      %v1023 = vrot.slane %v1021, 5
      %v1024 = vsel %vm722, %v1019, %v1023
      %v1025 = vshrl.u32 %v247, 16
      %v1027 = vrot.slane %v1025, 4
      %v1028 = vor.u32 %v1027, %v1023
      %v1029 = vrot.slane %v1028, 4
      %v1031 = vshll.u32 %v248, 16
      %v1033 = vrot.slane %v1031, 5
      %v1034 = vsel %vm722, %v1029, %v1033
      %v1036 = vshrl.u32 %v249, 16
      %v1038 = vrot.slane %v1036, 4
      %v1039 = vshll.u32 %v249, 16
      %v1041 = vrot.slane %v1039, 5
      %v1042 = vor.u32 %v1038, %v1041
      %v1043 = vrot.slane %v1042, 4
      %v1045 = vshll.u32 %v250, 16
      %v1047 = vrot.slane %v1045, 5
      %v1048 = vsel %vm722, %v1043, %v1047
      %v1049 = vshrl.u32 %v250, 16
      %v1051 = vrot.slane %v1049, 4
      %v1052 = vor.u32 %v1051, %v1047
      %v1053 = vrot.slane %v1052, 4
      %v1055 = vshll.u32 %v251, 16
      %v1057 = vrot.slane %v1055, 5
      %v1058 = vsel %vm722, %v1053, %v1057
      %v1060 = vshrl.u32 %v252, 16
      %v1062 = vrot.slane %v1060, 4
      %v1063 = vshll.u32 %v252, 16
      %v1065 = vrot.slane %v1063, 5
      %v1066 = vor.u32 %v1062, %v1065
      %v1067 = vrot.slane %v1066, 4
      %v1069 = vshll.u32 %v253, 16
      %v1071 = vrot.slane %v1069, 5
      %v1072 = vsel %vm722, %v1067, %v1071
      %v1073 = vshrl.u32 %v253, 16
      %v1075 = vrot.slane %v1073, 4
      %v1076 = vor.u32 %v1075, %v1071
      %v1077 = vrot.slane %v1076, 4
      %v1079 = vshll.u32 %v254, 16
      %v1081 = vrot.slane %v1079, 5
      %v1082 = vsel %vm722, %v1077, %v1081
      %v1084 = vshrl.u32 %v255, 16
      %v1086 = vrot.slane %v1084, 4
      %v1087 = vshll.u32 %v255, 16
      %v1089 = vrot.slane %v1087, 5
      %v1090 = vor.u32 %v1086, %v1089
      %v1091 = vrot.slane %v1090, 4
      %v1093 = vshll.u32 %v256, 16
      %v1095 = vrot.slane %v1093, 5
      %v1096 = vsel %vm722, %v1091, %v1095
      %v1097 = vshrl.u32 %v256, 16
      %v1099 = vrot.slane %v1097, 4
      %v1100 = vor.u32 %v1099, %v1095
      %v1101 = vrot.slane %v1100, 4
      %v1103 = vshll.u32 %v257, 16
      %v1105 = vrot.slane %v1103, 5
      %v1106 = vsel %vm722, %v1101, %v1105
      %v1107 = vld [vmem:[%s204] sm:$0xff]
      %v1108 = vld [vmem:[%s204 + $0x8] sm:$0xff]
      %v1109 = vld [vmem:[%s204 + $0x10] sm:$0xff]
      %v1110 = vld [vmem:[%s204 + $0x18] sm:$0xff]
      %v1111 = vld [vmem:[%s204 + $0x20] sm:$0xff]
      %v1112 = vld [vmem:[%s204 + $0x28] sm:$0xff]
      %v1113 = vld [vmem:[%s204 + $0x30] sm:$0xff]
      %v1114 = vld [vmem:[%s204 + $0x38] sm:$0xff]
      %v1115 = vld [vmem:[%s204 + $0x40] sm:$0xff]
      %v1116 = vld [vmem:[%s204 + $0x48] sm:$0xff]
      %v1117 = vld [vmem:[%s204 + $0x50] sm:$0xff]
      %v1118 = vld [vmem:[%s204 + $0x58] sm:$0xff]
      %v1119 = vld [vmem:[%s204 + $0x60] sm:$0xff]
      %v1120 = vld [vmem:[%s204 + $0x68] sm:$0xff]
      %v1121 = vld [vmem:[%s204 + $0x70] sm:$0xff]
      %v1122 = vld [vmem:[%s204 + $0x78] sm:$0xff]
      %v1123 = vld [vmem:[%s204 + $0x80] sm:$0xff]
      %v1124 = vld [vmem:[%s204 + $0x88] sm:$0xff]
      %v1125 = vld [vmem:[%s204 + $0x90] sm:$0xff]
      %v1126 = vld [vmem:[%s204 + $0x98] sm:$0xff]
      %v1127 = vld [vmem:[%s204 + $0xa0] sm:$0xff]
      %v1128 = vld [vmem:[%s204 + $0xa8] sm:$0xff]
      %v1129 = vld [vmem:[%s204 + $0xb0] sm:$0xff]
      %v1130 = vld [vmem:[%s204 + $0xb8] sm:$0xff]
      %v1131 = vld [vmem:[%s204 + $0xc0] sm:$0xff]
      %v1132 = vld [vmem:[%s204 + $0xc8] sm:$0xff]
      %v1133 = vld [vmem:[%s204 + $0xd0] sm:$0xff]
      %v1134 = vld [vmem:[%s204 + $0xd8] sm:$0xff]
      %v1135 = vld [vmem:[%s204 + $0xe0] sm:$0xff]
      %v1136 = vld [vmem:[%s204 + $0xe8] sm:$0xff]
      %v1137 = vld [vmem:[%s204 + $0xf0] sm:$0xff]
      %v1138 = vld [vmem:[%s204 + $0xf8] sm:$0xff]
      %s1139 = scalar_lea.vmem %s1, 64
      %v1140 = vld [vmem:[%s1139] sm:$0xf]
      %v1141 = vld [vmem:[%s1139 + $0x4] sm:$0xf]
      %v1142 = vld [vmem:[%s1139 + $0x8] sm:$0xf]
      %v1143 = vld [vmem:[%s1139 + $0xc] sm:$0xf]
      %v1144 = vld [vmem:[%s1139 + $0x10] sm:$0xf]
      %v1145 = vld [vmem:[%s1139 + $0x14] sm:$0xf]
      %v1146 = vld [vmem:[%s1139 + $0x18] sm:$0xf]
      %v1147 = vld [vmem:[%s1139 + $0x1c] sm:$0xf]
      %v1148 = vld [vmem:[%s1139 + $0x20] sm:$0xf]
      %v1149 = vld [vmem:[%s1139 + $0x24] sm:$0xf]
      %v1150 = vld [vmem:[%s1139 + $0x28] sm:$0xf]
      %v1151 = vld [vmem:[%s1139 + $0x2c] sm:$0xf]
      %v1152 = vld [vmem:[%s1139 + $0x30] sm:$0xf]
      %v1153 = vld [vmem:[%s1139 + $0x34] sm:$0xf]
      %v1154 = vld [vmem:[%s1139 + $0x38] sm:$0xf]
      %v1155 = vld [vmem:[%s1139 + $0x3c] sm:$0xf]
      %v1156 = vunpack.c.l.b16 %v736
      %v1157 = vunpack.c.l.b16 %v746
      %v1158 = vunpack.c.l.b16 %v760
      %v1159 = vunpack.c.l.b16 %v770
      %v1160 = vunpack.c.l.b16 %v784
      %v1161 = vunpack.c.l.b16 %v794
      %v1162 = vunpack.c.l.b16 %v808
      %v1163 = vunpack.c.l.b16 %v818
      %v1164 = vunpack.c.l.b16 %v832
      %v1165 = vunpack.c.l.b16 %v842
      %v1166 = vunpack.c.l.b16 %v856
      %v1167 = vunpack.c.l.b16 %v866
      %v1168 = vunpack.c.l.b16 %v880
      %v1169 = vunpack.c.l.b16 %v890
      %v1170 = vunpack.c.l.b16 %v904
      %v1171 = vunpack.c.l.b16 %v914
      %v1172 = vunpack.c.l.b16 %v928
      %v1173 = vunpack.c.l.b16 %v938
      %v1174 = vunpack.c.l.b16 %v952
      %v1175 = vunpack.c.l.b16 %v962
      %v1176 = vunpack.c.l.b16 %v976
      %v1177 = vunpack.c.l.b16 %v986
      %v1178 = vunpack.c.l.b16 %v1000
      %v1179 = vunpack.c.l.b16 %v1010
      %v1180 = vunpack.c.l.b16 %v1024
      %v1181 = vunpack.c.l.b16 %v1034
      %v1182 = vunpack.c.l.b16 %v1048
      %v1183 = vunpack.c.l.b16 %v1058
      %v1184 = vunpack.c.l.b16 %v1072
      %v1185 = vunpack.c.l.b16 %v1082
      %v1186 = vunpack.c.l.b16 %v1096
      %v1187 = vunpack.c.l.b16 %v1106
      %v1188 = vpack.c.b16 %v1157, %v1156
      %v1189 = vpack.c.b16 %v1159, %v1158
      %v1190 = vpack.c.b16 %v1161, %v1160
      %v1191 = vpack.c.b16 %v1163, %v1162
      %v1192 = vpack.c.b16 %v1165, %v1164
      %v1193 = vpack.c.b16 %v1167, %v1166
      %v1194 = vpack.c.b16 %v1169, %v1168
      %v1195 = vpack.c.b16 %v1171, %v1170
      %v1196 = vpack.c.b16 %v1173, %v1172
      %v1197 = vpack.c.b16 %v1175, %v1174
      %v1198 = vpack.c.b16 %v1177, %v1176
      %v1199 = vpack.c.b16 %v1179, %v1178
      %v1200 = vpack.c.b16 %v1181, %v1180
      %v1201 = vpack.c.b16 %v1183, %v1182
      %v1202 = vpack.c.b16 %v1185, %v1184
      %v1203 = vpack.c.b16 %v1187, %v1186
      %v1236 = vunpack.c.l.b16 %v1140
      %v1237 = vunpack.c.l.b16 %v1141
      %v1238 = vunpack.c.l.b16 %v1142
      %v1239 = vunpack.c.l.b16 %v1143
      %v1240 = vunpack.c.l.b16 %v1144
      %v1241 = vunpack.c.l.b16 %v1145
      %v1242 = vunpack.c.l.b16 %v1146
      %v1243 = vunpack.c.l.b16 %v1147
      %v1244 = vunpack.c.l.b16 %v1148
      %v1245 = vunpack.c.l.b16 %v1149
      %v1246 = vunpack.c.l.b16 %v1150
      %v1247 = vunpack.c.l.b16 %v1151
      %v1248 = vunpack.c.l.b16 %v1152
      %v1249 = vunpack.c.l.b16 %v1153
      %v1250 = vunpack.c.l.b16 %v1154
      %v1251 = vunpack.c.l.b16 %v1155
      %v1252 = vpack.c.b16 %v1237, %v1236
      %v1253 = vpack.c.b16 %v1239, %v1238
      %v1254 = vpack.c.b16 %v1241, %v1240
      %v1255 = vpack.c.b16 %v1243, %v1242
      %v1256 = vpack.c.b16 %v1245, %v1244
      %v1257 = vpack.c.b16 %v1247, %v1246
      %v1258 = vpack.c.b16 %v1249, %v1248
      %v1259 = vpack.c.b16 %v1251, %v1250
      %1268 = vmatprep.subr.bf16.mxu0 0
      %1269 = vmatpush1.bf16.msra.mxu0 %v1252
      %1270 = vmatprep.subr.bf16.mxu0 0
      %1271 = vmatpush1.bf16.msra.mxu0 %v1253
      %1272 = vmatprep.subr.bf16.mxu0 0
      %1273 = vmatpush1.bf16.msra.mxu0 %v1254
      %1274 = vmatprep.subr.bf16.mxu0 0
      %1275 = vmatpush1.bf16.msra.mxu0 %v1255
      %1276 = vmatprep.subr.bf16.mxu0 0
      %1277 = vmatpush1.bf16.msra.mxu0 %v1256
      %1278 = vmatprep.subr.bf16.mxu0 0
      %1279 = vmatpush1.bf16.msra.mxu0 %v1257
      %1280 = vmatprep.subr.bf16.mxu0 0
      %1281 = vmatpush1.bf16.msra.mxu0 %v1258
      %1282 = vmatprep.subr.bf16.mxu0 0
      %1283 = vmatpush1.bf16.msra.mxu0 %v1259
      %1284 = vmatprep.subr.bf16.mxu0 0
      %1285 = vmatpush1.bf16.msra.mxu0 0
      %1286 = vmatprep.subr.bf16.mxu0 0
      %1287 = vmatpush1.bf16.msra.mxu0 0
      %1288 = vmatprep.subr.bf16.mxu0 0
      %1289 = vmatpush1.bf16.msra.mxu0 0
      %1290 = vmatprep.subr.bf16.mxu0 0
      %1291 = vmatpush1.bf16.msra.mxu0 0
      %1292 = vmatprep.subr.bf16.mxu0 0
      %1293 = vmatpush1.bf16.msra.mxu0 0
      %1294 = vmatprep.subr.bf16.mxu0 0
      %1295 = vmatpush1.bf16.msra.mxu0 0
      %1296 = vmatprep.subr.bf16.mxu0 0
      %1297 = vmatpush1.bf16.msra.mxu0 0
      %1298 = vmatprep.subr.bf16.mxu0 0
      %1299 = vmatpush1.bf16.msra.mxu0 0
      %1300 = vmatprep.mubr.bf16.mxu0 0
      %1301 = vmatmul.mubr.bf16.gmra.mrb[0].mxu0 %v1188
      %v1302 = vpop.f32.mrb[0].mxu0
      %v1303 = vadd.f32 0.0, %v1302
      %v1304 = vpop.f32.mrb[0].mxu0
      %v1305 = vpop.f32.mrb[0].mxu0
      %v1306 = vadd.f32 0.0, %v1305
      %v1307 = vpop.f32.mrb[0].mxu0
      %1308 = vmatprep.mubr.bf16.mxu0 0
      %1309 = vmatmul.mubr.bf16.gmra.mrb[0].mxu0 %v1189
      %v1310 = vpop.f32.mrb[0].mxu0
      %v1311 = vadd.f32 0.0, %v1310
      %v1312 = vpop.f32.mrb[0].mxu0
      %v1313 = vpop.f32.mrb[0].mxu0
      %v1314 = vadd.f32 0.0, %v1313
      %v1315 = vpop.f32.mrb[0].mxu0
      %1316 = vmatprep.mubr.bf16.mxu0 0
      %1317 = vmatmul.mubr.bf16.gmra.mrb[0].mxu0 %v1190
      %v1318 = vpop.f32.mrb[0].mxu0
      %v1319 = vadd.f32 0.0, %v1318
      %v1320 = vpop.f32.mrb[0].mxu0
      %v1321 = vpop.f32.mrb[0].mxu0
      %v1322 = vadd.f32 0.0, %v1321
      %v1323 = vpop.f32.mrb[0].mxu0
      %1324 = vmatprep.mubr.bf16.mxu0 0
      %1325 = vmatmul.mubr.bf16.gmra.mrb[0].mxu0 %v1191
      %v1326 = vpop.f32.mrb[0].mxu0
      %v1327 = vadd.f32 0.0, %v1326
      %v1328 = vpop.f32.mrb[0].mxu0
      %v1329 = vpop.f32.mrb[0].mxu0
      %v1330 = vadd.f32 0.0, %v1329
      %v1331 = vpop.f32.mrb[0].mxu0
      %1332 = vmatprep.mubr.bf16.mxu0 0
      %1333 = vmatmul.mubr.bf16.gmra.mrb[0].mxu0 %v1192
      %v1334 = vpop.f32.mrb[0].mxu0
      %v1335 = vadd.f32 0.0, %v1334
      %v1336 = vpop.f32.mrb[0].mxu0
      %v1337 = vpop.f32.mrb[0].mxu0
      %v1338 = vadd.f32 0.0, %v1337
      %v1339 = vpop.f32.mrb[0].mxu0
      %1340 = vmatprep.mubr.bf16.mxu0 0
      %1341 = vmatmul.mubr.bf16.gmra.mrb[0].mxu0 %v1193
      %v1342 = vpop.f32.mrb[0].mxu0
      %v1343 = vadd.f32 0.0, %v1342
      %v1344 = vpop.f32.mrb[0].mxu0
      %v1345 = vpop.f32.mrb[0].mxu0
      %v1346 = vadd.f32 0.0, %v1345
      %v1347 = vpop.f32.mrb[0].mxu0
      %1348 = vmatprep.mubr.bf16.mxu0 0
      %1349 = vmatmul.mubr.bf16.gmra.mrb[0].mxu0 %v1194
      %v1350 = vpop.f32.mrb[0].mxu0
      %v1351 = vadd.f32 0.0, %v1350
      %v1352 = vpop.f32.mrb[0].mxu0
      %v1353 = vpop.f32.mrb[0].mxu0
      %v1354 = vadd.f32 0.0, %v1353
      %v1355 = vpop.f32.mrb[0].mxu0
      %1356 = vmatprep.mubr.bf16.mxu0 0
      %1357 = vmatmul.mubr.bf16.gmra.mrb[0].mxu0 %v1195
      %v1358 = vpop.f32.mrb[0].mxu0
      %v1359 = vadd.f32 0.0, %v1358
      %v1360 = vpop.f32.mrb[0].mxu0
      %v1361 = vpop.f32.mrb[0].mxu0
      %v1362 = vadd.f32 0.0, %v1361
      %v1363 = vpop.f32.mrb[0].mxu0
      %1364 = vmatprep.mubr.bf16.mxu0 0
      %1365 = vmatmul.mubr.bf16.gmra.mrb[0].mxu0 %v1196
      %v1366 = vpop.f32.mrb[0].mxu0
      %v1367 = vadd.f32 0.0, %v1366
      %v1368 = vpop.f32.mrb[0].mxu0
      %v1369 = vpop.f32.mrb[0].mxu0
      %v1370 = vadd.f32 0.0, %v1369
      %v1371 = vpop.f32.mrb[0].mxu0
      %1372 = vmatprep.mubr.bf16.mxu0 0
      %1373 = vmatmul.mubr.bf16.gmra.mrb[0].mxu0 %v1197
      %v1374 = vpop.f32.mrb[0].mxu0
      %v1375 = vadd.f32 0.0, %v1374
      %v1376 = vpop.f32.mrb[0].mxu0
      %v1377 = vpop.f32.mrb[0].mxu0
      %v1378 = vadd.f32 0.0, %v1377
      %v1379 = vpop.f32.mrb[0].mxu0
      %1380 = vmatprep.mubr.bf16.mxu0 0
      %1381 = vmatmul.mubr.bf16.gmra.mrb[0].mxu0 %v1198
      %v1382 = vpop.f32.mrb[0].mxu0
      %v1383 = vadd.f32 0.0, %v1382
      %v1384 = vpop.f32.mrb[0].mxu0
      %v1385 = vpop.f32.mrb[0].mxu0
      %v1386 = vadd.f32 0.0, %v1385
      %v1387 = vpop.f32.mrb[0].mxu0
      %1388 = vmatprep.mubr.bf16.mxu0 0
      %1389 = vmatmul.mubr.bf16.gmra.mrb[0].mxu0 %v1199
      %v1390 = vpop.f32.mrb[0].mxu0
      %v1391 = vadd.f32 0.0, %v1390
      %v1392 = vpop.f32.mrb[0].mxu0
      %v1393 = vpop.f32.mrb[0].mxu0
      %v1394 = vadd.f32 0.0, %v1393
      %v1395 = vpop.f32.mrb[0].mxu0
      %1396 = vmatprep.mubr.bf16.mxu0 0
      %1397 = vmatmul.mubr.bf16.gmra.mrb[0].mxu0 %v1200
      %v1398 = vpop.f32.mrb[0].mxu0
      %v1399 = vadd.f32 0.0, %v1398
      %v1400 = vpop.f32.mrb[0].mxu0
      %v1401 = vpop.f32.mrb[0].mxu0
      %v1402 = vadd.f32 0.0, %v1401
      %v1403 = vpop.f32.mrb[0].mxu0
      %1404 = vmatprep.mubr.bf16.mxu0 0
      %1405 = vmatmul.mubr.bf16.gmra.mrb[0].mxu0 %v1201
      %v1406 = vpop.f32.mrb[0].mxu0
      %v1407 = vadd.f32 0.0, %v1406
      %v1408 = vpop.f32.mrb[0].mxu0
      %v1409 = vpop.f32.mrb[0].mxu0
      %v1410 = vadd.f32 0.0, %v1409
      %v1411 = vpop.f32.mrb[0].mxu0
      %1412 = vmatprep.mubr.bf16.mxu0 0
      %1413 = vmatmul.mubr.bf16.gmra.mrb[0].mxu0 %v1202
      %v1414 = vpop.f32.mrb[0].mxu0
      %v1415 = vadd.f32 0.0, %v1414
      %v1416 = vpop.f32.mrb[0].mxu0
      %v1417 = vpop.f32.mrb[0].mxu0
      %v1418 = vadd.f32 0.0, %v1417
      %v1419 = vpop.f32.mrb[0].mxu0
      %1420 = vmatprep.mubr.bf16.mxu0 0
      %1421 = vmatmul.mubr.bf16.gmra.mrb[0].mxu0 %v1203
      %v1422 = vpop.f32.mrb[0].mxu0
      %v1423 = vadd.f32 0.0, %v1422
      %v1424 = vpop.f32.mrb[0].mxu0
      %v1425 = vpop.f32.mrb[0].mxu0
      %v1426 = vadd.f32 0.0, %v1425
      %v1427 = vpop.f32.mrb[0].mxu0
      %1428 = vdwg.mxu0
      %v1429 = vadd.f32 %v1107, %v1303
      %v1430 = vadd.f32 %v1108, %v1306
      %v1431 = vadd.f32 %v1109, %v1311
      %v1432 = vadd.f32 %v1110, %v1314
      %v1433 = vadd.f32 %v1111, %v1319
      %v1434 = vadd.f32 %v1112, %v1322
      %v1435 = vadd.f32 %v1113, %v1327
      %v1436 = vadd.f32 %v1114, %v1330
      %v1437 = vadd.f32 %v1115, %v1335
      %v1438 = vadd.f32 %v1116, %v1338
      %v1439 = vadd.f32 %v1117, %v1343
      %v1440 = vadd.f32 %v1118, %v1346
      %v1441 = vadd.f32 %v1119, %v1351
      %v1442 = vadd.f32 %v1120, %v1354
      %v1443 = vadd.f32 %v1121, %v1359
      %v1444 = vadd.f32 %v1122, %v1362
      %v1445 = vadd.f32 %v1123, %v1367
      %v1446 = vadd.f32 %v1124, %v1370
      %v1447 = vadd.f32 %v1125, %v1375
      %v1448 = vadd.f32 %v1126, %v1378
      %v1449 = vadd.f32 %v1127, %v1383
      %v1450 = vadd.f32 %v1128, %v1386
      %v1451 = vadd.f32 %v1129, %v1391
      %v1452 = vadd.f32 %v1130, %v1394
      %v1453 = vadd.f32 %v1131, %v1399
      %v1454 = vadd.f32 %v1132, %v1402
      %v1455 = vadd.f32 %v1133, %v1407
      %v1456 = vadd.f32 %v1134, %v1410
      %v1457 = vadd.f32 %v1135, %v1415
      %v1458 = vadd.f32 %v1136, %v1418
      %v1459 = vadd.f32 %v1137, %v1423
      %v1460 = vadd.f32 %v1138, %v1426
      %1461 = vst [vmem:[%s204] sm:$0xff] %v1429
      %1462 = vst [vmem:[%s204 + $0x8] sm:$0xff] %v1430
      %1463 = vst [vmem:[%s204 + $0x10] sm:$0xff] %v1431
      %1464 = vst [vmem:[%s204 + $0x18] sm:$0xff] %v1432
      %1465 = vst [vmem:[%s204 + $0x20] sm:$0xff] %v1433
      %1466 = vst [vmem:[%s204 + $0x28] sm:$0xff] %v1434
      %1467 = vst [vmem:[%s204 + $0x30] sm:$0xff] %v1435
      %1468 = vst [vmem:[%s204 + $0x38] sm:$0xff] %v1436
      %1469 = vst [vmem:[%s204 + $0x40] sm:$0xff] %v1437
      %1470 = vst [vmem:[%s204 + $0x48] sm:$0xff] %v1438
      %1471 = vst [vmem:[%s204 + $0x50] sm:$0xff] %v1439
      %1472 = vst [vmem:[%s204 + $0x58] sm:$0xff] %v1440
      %1473 = vst [vmem:[%s204 + $0x60] sm:$0xff] %v1441
      %1474 = vst [vmem:[%s204 + $0x68] sm:$0xff] %v1442
      %1475 = vst [vmem:[%s204 + $0x70] sm:$0xff] %v1443
      %1476 = vst [vmem:[%s204 + $0x78] sm:$0xff] %v1444
      %1477 = vst [vmem:[%s204 + $0x80] sm:$0xff] %v1445
      %1478 = vst [vmem:[%s204 + $0x88] sm:$0xff] %v1446
      %1479 = vst [vmem:[%s204 + $0x90] sm:$0xff] %v1447
      %1480 = vst [vmem:[%s204 + $0x98] sm:$0xff] %v1448
      %1481 = vst [vmem:[%s204 + $0xa0] sm:$0xff] %v1449
      %1482 = vst [vmem:[%s204 + $0xa8] sm:$0xff] %v1450
      %1483 = vst [vmem:[%s204 + $0xb0] sm:$0xff] %v1451
      %1484 = vst [vmem:[%s204 + $0xb8] sm:$0xff] %v1452
      %1485 = vst [vmem:[%s204 + $0xc0] sm:$0xff] %v1453
      %1486 = vst [vmem:[%s204 + $0xc8] sm:$0xff] %v1454
      %1487 = vst [vmem:[%s204 + $0xd0] sm:$0xff] %v1455
      %1488 = vst [vmem:[%s204 + $0xd8] sm:$0xff] %v1456
      %1489 = vst [vmem:[%s204 + $0xe0] sm:$0xff] %v1457
      %1490 = vst [vmem:[%s204 + $0xe8] sm:$0xff] %v1458
      %1491 = vst [vmem:[%s204 + $0xf0] sm:$0xff] %v1459
      %1492 = vst [vmem:[%s204 + $0xf8] sm:$0xff] %v1460
      %vm1509 = vcmask 1042432
      %vm1510 = vcmask 1046532
      %vm1511 = vmor %vm1509, %vm1510
      %v1512 = vrot.slane %v210, 5
      %v1513 = vrot.slane %v1512, 4
      %v1514 = vrot.slane %v211, 5
      %v1515 = vsel %vm1511, %v1513, %v1514
      %v1516 = vrot.slane %v1514, 4
      %v1517 = vrot.slane %v212, 5
      %v1518 = vsel %vm1511, %v1516, %v1517
      %v1519 = vrot.slane %v213, 5
      %v1520 = vrot.slane %v1519, 4
      %v1521 = vrot.slane %v214, 5
      %v1522 = vsel %vm1511, %v1520, %v1521
      %v1523 = vrot.slane %v1521, 4
      %v1524 = vrot.slane %v215, 5
      %v1525 = vsel %vm1511, %v1523, %v1524
      %v1526 = vrot.slane %v216, 5
      %v1527 = vrot.slane %v1526, 4
      %v1528 = vrot.slane %v217, 5
      %v1529 = vsel %vm1511, %v1527, %v1528
      %v1530 = vrot.slane %v1528, 4
      %v1531 = vrot.slane %v218, 5
      %v1532 = vsel %vm1511, %v1530, %v1531
      %v1533 = vrot.slane %v219, 5
      %v1534 = vrot.slane %v1533, 4
      %v1535 = vrot.slane %v220, 5
      %v1536 = vsel %vm1511, %v1534, %v1535
      %v1537 = vrot.slane %v1535, 4
      %v1538 = vrot.slane %v221, 5
      %v1539 = vsel %vm1511, %v1537, %v1538
      %v1540 = vrot.slane %v222, 5
      %v1541 = vrot.slane %v1540, 4
      %v1542 = vrot.slane %v223, 5
      %v1543 = vsel %vm1511, %v1541, %v1542
      %v1544 = vrot.slane %v1542, 4
      %v1545 = vrot.slane %v224, 5
      %v1546 = vsel %vm1511, %v1544, %v1545
      %v1547 = vrot.slane %v225, 5
      %v1548 = vrot.slane %v1547, 4
      %v1549 = vrot.slane %v226, 5
      %v1550 = vsel %vm1511, %v1548, %v1549
      %v1551 = vrot.slane %v1549, 4
      %v1552 = vrot.slane %v227, 5
      %v1553 = vsel %vm1511, %v1551, %v1552
      %v1554 = vrot.slane %v228, 5
      %v1555 = vrot.slane %v1554, 4
      %v1556 = vrot.slane %v229, 5
      %v1557 = vsel %vm1511, %v1555, %v1556
      %v1558 = vrot.slane %v1556, 4
      %v1559 = vrot.slane %v230, 5
      %v1560 = vsel %vm1511, %v1558, %v1559
      %v1561 = vrot.slane %v231, 5
      %v1562 = vrot.slane %v1561, 4
      %v1563 = vrot.slane %v232, 5
      %v1564 = vsel %vm1511, %v1562, %v1563
      %v1565 = vrot.slane %v1563, 4
      %v1566 = vrot.slane %v233, 5
      %v1567 = vsel %vm1511, %v1565, %v1566
      %v1568 = vrot.slane %v234, 5
      %v1569 = vrot.slane %v1568, 4
      %v1570 = vrot.slane %v235, 5
      %v1571 = vsel %vm1511, %v1569, %v1570
      %v1572 = vrot.slane %v1570, 4
      %v1573 = vrot.slane %v236, 5
      %v1574 = vsel %vm1511, %v1572, %v1573
      %v1575 = vrot.slane %v237, 5
      %v1576 = vrot.slane %v1575, 4
      %v1577 = vrot.slane %v238, 5
      %v1578 = vsel %vm1511, %v1576, %v1577
      %v1579 = vrot.slane %v1577, 4
      %v1580 = vrot.slane %v239, 5
      %v1581 = vsel %vm1511, %v1579, %v1580
      %v1582 = vrot.slane %v240, 5
      %v1583 = vrot.slane %v1582, 4
      %v1584 = vrot.slane %v241, 5
      %v1585 = vsel %vm1511, %v1583, %v1584
      %v1586 = vrot.slane %v1584, 4
      %v1587 = vrot.slane %v242, 5
      %v1588 = vsel %vm1511, %v1586, %v1587
      %v1589 = vrot.slane %v243, 5
      %v1590 = vrot.slane %v1589, 4
      %v1591 = vrot.slane %v244, 5
      %v1592 = vsel %vm1511, %v1590, %v1591
      %v1593 = vrot.slane %v1591, 4
      %v1594 = vrot.slane %v245, 5
      %v1595 = vsel %vm1511, %v1593, %v1594
      %v1596 = vrot.slane %v246, 5
      %v1597 = vrot.slane %v1596, 4
      %v1598 = vrot.slane %v247, 5
      %v1599 = vsel %vm1511, %v1597, %v1598
      %v1600 = vrot.slane %v1598, 4
      %v1601 = vrot.slane %v248, 5
      %v1602 = vsel %vm1511, %v1600, %v1601
      %v1603 = vrot.slane %v249, 5
      %v1604 = vrot.slane %v1603, 4
      %v1605 = vrot.slane %v250, 5
      %v1606 = vsel %vm1511, %v1604, %v1605
      %v1607 = vrot.slane %v1605, 4
      %v1608 = vrot.slane %v251, 5
      %v1609 = vsel %vm1511, %v1607, %v1608
      %v1610 = vrot.slane %v252, 5
      %v1611 = vrot.slane %v1610, 4
      %v1612 = vrot.slane %v253, 5
      %v1613 = vsel %vm1511, %v1611, %v1612
      %v1614 = vrot.slane %v1612, 4
      %v1615 = vrot.slane %v254, 5
      %v1616 = vsel %vm1511, %v1614, %v1615
      %v1617 = vrot.slane %v255, 5
      %v1618 = vrot.slane %v1617, 4
      %v1619 = vrot.slane %v256, 5
      %v1620 = vsel %vm1511, %v1618, %v1619
      %v1621 = vrot.slane %v1619, 4
      %v1622 = vrot.slane %v257, 5
      %v1623 = vsel %vm1511, %v1621, %v1622
      %v1624 = vld [vmem:[%s204] sm:$0xff]
      %v1625 = vld [vmem:[%s204 + $0x8] sm:$0xff]
      %v1626 = vld [vmem:[%s204 + $0x10] sm:$0xff]
      %v1627 = vld [vmem:[%s204 + $0x18] sm:$0xff]
      %v1628 = vld [vmem:[%s204 + $0x20] sm:$0xff]
      %v1629 = vld [vmem:[%s204 + $0x28] sm:$0xff]
      %v1630 = vld [vmem:[%s204 + $0x30] sm:$0xff]
      %v1631 = vld [vmem:[%s204 + $0x38] sm:$0xff]
      %v1632 = vld [vmem:[%s204 + $0x40] sm:$0xff]
      %v1633 = vld [vmem:[%s204 + $0x48] sm:$0xff]
      %v1634 = vld [vmem:[%s204 + $0x50] sm:$0xff]
      %v1635 = vld [vmem:[%s204 + $0x58] sm:$0xff]
      %v1636 = vld [vmem:[%s204 + $0x60] sm:$0xff]
      %v1637 = vld [vmem:[%s204 + $0x68] sm:$0xff]
      %v1638 = vld [vmem:[%s204 + $0x70] sm:$0xff]
      %v1639 = vld [vmem:[%s204 + $0x78] sm:$0xff]
      %v1640 = vld [vmem:[%s204 + $0x80] sm:$0xff]
      %v1641 = vld [vmem:[%s204 + $0x88] sm:$0xff]
      %v1642 = vld [vmem:[%s204 + $0x90] sm:$0xff]
      %v1643 = vld [vmem:[%s204 + $0x98] sm:$0xff]
      %v1644 = vld [vmem:[%s204 + $0xa0] sm:$0xff]
      %v1645 = vld [vmem:[%s204 + $0xa8] sm:$0xff]
      %v1646 = vld [vmem:[%s204 + $0xb0] sm:$0xff]
      %v1647 = vld [vmem:[%s204 + $0xb8] sm:$0xff]
      %v1648 = vld [vmem:[%s204 + $0xc0] sm:$0xff]
      %v1649 = vld [vmem:[%s204 + $0xc8] sm:$0xff]
      %v1650 = vld [vmem:[%s204 + $0xd0] sm:$0xff]
      %v1651 = vld [vmem:[%s204 + $0xd8] sm:$0xff]
      %v1652 = vld [vmem:[%s204 + $0xe0] sm:$0xff]
      %v1653 = vld [vmem:[%s204 + $0xe8] sm:$0xff]
      %v1654 = vld [vmem:[%s204 + $0xf0] sm:$0xff]
      %v1655 = vld [vmem:[%s204 + $0xf8] sm:$0xff]
      %s1656 = scalar_lea.vmem %s1, 128
      %v1657 = vld [vmem:[%s1656] sm:$0xf]
      %v1658 = vld [vmem:[%s1656 + $0x4] sm:$0xf]
      %v1659 = vld [vmem:[%s1656 + $0x8] sm:$0xf]
      %v1660 = vld [vmem:[%s1656 + $0xc] sm:$0xf]
      %v1661 = vld [vmem:[%s1656 + $0x10] sm:$0xf]
      %v1662 = vld [vmem:[%s1656 + $0x14] sm:$0xf]
      %v1663 = vld [vmem:[%s1656 + $0x18] sm:$0xf]
      %v1664 = vld [vmem:[%s1656 + $0x1c] sm:$0xf]
      %v1665 = vld [vmem:[%s1656 + $0x20] sm:$0xf]
      %v1666 = vld [vmem:[%s1656 + $0x24] sm:$0xf]
      %v1667 = vld [vmem:[%s1656 + $0x28] sm:$0xf]
      %v1668 = vld [vmem:[%s1656 + $0x2c] sm:$0xf]
      %v1669 = vld [vmem:[%s1656 + $0x30] sm:$0xf]
      %v1670 = vld [vmem:[%s1656 + $0x34] sm:$0xf]
      %v1671 = vld [vmem:[%s1656 + $0x38] sm:$0xf]
      %v1672 = vld [vmem:[%s1656 + $0x3c] sm:$0xf]
      %v1673 = vunpack.c.l.b16 %v1515
      %v1674 = vunpack.c.l.b16 %v1518
      %v1675 = vunpack.c.l.b16 %v1522
      %v1676 = vunpack.c.l.b16 %v1525
      %v1677 = vunpack.c.l.b16 %v1529
      %v1678 = vunpack.c.l.b16 %v1532
      %v1679 = vunpack.c.l.b16 %v1536
      %v1680 = vunpack.c.l.b16 %v1539
      %v1681 = vunpack.c.l.b16 %v1543
      %v1682 = vunpack.c.l.b16 %v1546
      %v1683 = vunpack.c.l.b16 %v1550
      %v1684 = vunpack.c.l.b16 %v1553
      %v1685 = vunpack.c.l.b16 %v1557
      %v1686 = vunpack.c.l.b16 %v1560
      %v1687 = vunpack.c.l.b16 %v1564
      %v1688 = vunpack.c.l.b16 %v1567
      %v1689 = vunpack.c.l.b16 %v1571
      %v1690 = vunpack.c.l.b16 %v1574
      %v1691 = vunpack.c.l.b16 %v1578
      %v1692 = vunpack.c.l.b16 %v1581
      %v1693 = vunpack.c.l.b16 %v1585
      %v1694 = vunpack.c.l.b16 %v1588
      %v1695 = vunpack.c.l.b16 %v1592
      %v1696 = vunpack.c.l.b16 %v1595
      %v1697 = vunpack.c.l.b16 %v1599
      %v1698 = vunpack.c.l.b16 %v1602
      %v1699 = vunpack.c.l.b16 %v1606
      %v1700 = vunpack.c.l.b16 %v1609
      %v1701 = vunpack.c.l.b16 %v1613
      %v1702 = vunpack.c.l.b16 %v1616
      %v1703 = vunpack.c.l.b16 %v1620
      %v1704 = vunpack.c.l.b16 %v1623
      %v1705 = vpack.c.b16 %v1674, %v1673
      %v1706 = vpack.c.b16 %v1676, %v1675
      %v1707 = vpack.c.b16 %v1678, %v1677
      %v1708 = vpack.c.b16 %v1680, %v1679
      %v1709 = vpack.c.b16 %v1682, %v1681
      %v1710 = vpack.c.b16 %v1684, %v1683
      %v1711 = vpack.c.b16 %v1686, %v1685
      %v1712 = vpack.c.b16 %v1688, %v1687
      %v1713 = vpack.c.b16 %v1690, %v1689
      %v1714 = vpack.c.b16 %v1692, %v1691
      %v1715 = vpack.c.b16 %v1694, %v1693
      %v1716 = vpack.c.b16 %v1696, %v1695
      %v1717 = vpack.c.b16 %v1698, %v1697
      %v1718 = vpack.c.b16 %v1700, %v1699
      %v1719 = vpack.c.b16 %v1702, %v1701
      %v1720 = vpack.c.b16 %v1704, %v1703
      %v1753 = vunpack.c.l.b16 %v1657
      %v1754 = vunpack.c.l.b16 %v1658
      %v1755 = vunpack.c.l.b16 %v1659
      %v1756 = vunpack.c.l.b16 %v1660
      %v1757 = vunpack.c.l.b16 %v1661
      %v1758 = vunpack.c.l.b16 %v1662
      %v1759 = vunpack.c.l.b16 %v1663
      %v1760 = vunpack.c.l.b16 %v1664
      %v1761 = vunpack.c.l.b16 %v1665
      %v1762 = vunpack.c.l.b16 %v1666
      %v1763 = vunpack.c.l.b16 %v1667
      %v1764 = vunpack.c.l.b16 %v1668
      %v1765 = vunpack.c.l.b16 %v1669
      %v1766 = vunpack.c.l.b16 %v1670
      %v1767 = vunpack.c.l.b16 %v1671
      %v1768 = vunpack.c.l.b16 %v1672
      %v1769 = vpack.c.b16 %v1754, %v1753
      %v1770 = vpack.c.b16 %v1756, %v1755
      %v1771 = vpack.c.b16 %v1758, %v1757
      %v1772 = vpack.c.b16 %v1760, %v1759
      %v1773 = vpack.c.b16 %v1762, %v1761
      %v1774 = vpack.c.b16 %v1764, %v1763
      %v1775 = vpack.c.b16 %v1766, %v1765
      %v1776 = vpack.c.b16 %v1768, %v1767
      %1785 = vmatprep.subr.bf16.mxu0 0
      %1786 = vmatpush1.bf16.msra.mxu0 %v1769
      %1787 = vmatprep.subr.bf16.mxu0 0
      %1788 = vmatpush1.bf16.msra.mxu0 %v1770
      %1789 = vmatprep.subr.bf16.mxu0 0
      %1790 = vmatpush1.bf16.msra.mxu0 %v1771
      %1791 = vmatprep.subr.bf16.mxu0 0
      %1792 = vmatpush1.bf16.msra.mxu0 %v1772
      %1793 = vmatprep.subr.bf16.mxu0 0
      %1794 = vmatpush1.bf16.msra.mxu0 %v1773
      %1795 = vmatprep.subr.bf16.mxu0 0
      %1796 = vmatpush1.bf16.msra.mxu0 %v1774
      %1797 = vmatprep.subr.bf16.mxu0 0
      %1798 = vmatpush1.bf16.msra.mxu0 %v1775
      %1799 = vmatprep.subr.bf16.mxu0 0
      %1800 = vmatpush1.bf16.msra.mxu0 %v1776
      %1801 = vmatprep.subr.bf16.mxu0 0
      %1802 = vmatpush1.bf16.msra.mxu0 0
      %1803 = vmatprep.subr.bf16.mxu0 0
      %1804 = vmatpush1.bf16.msra.mxu0 0
      %1805 = vmatprep.subr.bf16.mxu0 0
      %1806 = vmatpush1.bf16.msra.mxu0 0
      %1807 = vmatprep.subr.bf16.mxu0 0
      %1808 = vmatpush1.bf16.msra.mxu0 0
      %1809 = vmatprep.subr.bf16.mxu0 0
      %1810 = vmatpush1.bf16.msra.mxu0 0
      %1811 = vmatprep.subr.bf16.mxu0 0
      %1812 = vmatpush1.bf16.msra.mxu0 0
      %1813 = vmatprep.subr.bf16.mxu0 0
      %1814 = vmatpush1.bf16.msra.mxu0 0
      %1815 = vmatprep.subr.bf16.mxu0 0
      %1816 = vmatpush1.bf16.msra.mxu0 0
      %1817 = vmatprep.mubr.bf16.mxu0 0
      %1818 = vmatmul.mubr.bf16.gmra.mrb[0].mxu0 %v1705
      %v1819 = vpop.f32.mrb[0].mxu0
      %v1820 = vadd.f32 0.0, %v1819
      %v1821 = vpop.f32.mrb[0].mxu0
      %v1822 = vpop.f32.mrb[0].mxu0
      %v1823 = vadd.f32 0.0, %v1822
      %v1824 = vpop.f32.mrb[0].mxu0
      %1825 = vmatprep.mubr.bf16.mxu0 0
      %1826 = vmatmul.mubr.bf16.gmra.mrb[0].mxu0 %v1706
      %v1827 = vpop.f32.mrb[0].mxu0
      %v1828 = vadd.f32 0.0, %v1827
      %v1829 = vpop.f32.mrb[0].mxu0
      %v1830 = vpop.f32.mrb[0].mxu0
      %v1831 = vadd.f32 0.0, %v1830
      %v1832 = vpop.f32.mrb[0].mxu0
      %1833 = vmatprep.mubr.bf16.mxu0 0
      %1834 = vmatmul.mubr.bf16.gmra.mrb[0].mxu0 %v1707
      %v1835 = vpop.f32.mrb[0].mxu0
      %v1836 = vadd.f32 0.0, %v1835
      %v1837 = vpop.f32.mrb[0].mxu0
      %v1838 = vpop.f32.mrb[0].mxu0
      %v1839 = vadd.f32 0.0, %v1838
      %v1840 = vpop.f32.mrb[0].mxu0
      %1841 = vmatprep.mubr.bf16.mxu0 0
      %1842 = vmatmul.mubr.bf16.gmra.mrb[0].mxu0 %v1708
      %v1843 = vpop.f32.mrb[0].mxu0
      %v1844 = vadd.f32 0.0, %v1843
      %v1845 = vpop.f32.mrb[0].mxu0
      %v1846 = vpop.f32.mrb[0].mxu0
      %v1847 = vadd.f32 0.0, %v1846
      %v1848 = vpop.f32.mrb[0].mxu0
      %1849 = vmatprep.mubr.bf16.mxu0 0
      %1850 = vmatmul.mubr.bf16.gmra.mrb[0].mxu0 %v1709
      %v1851 = vpop.f32.mrb[0].mxu0
      %v1852 = vadd.f32 0.0, %v1851
      %v1853 = vpop.f32.mrb[0].mxu0
      %v1854 = vpop.f32.mrb[0].mxu0
      %v1855 = vadd.f32 0.0, %v1854
      %v1856 = vpop.f32.mrb[0].mxu0
      %1857 = vmatprep.mubr.bf16.mxu0 0
      %1858 = vmatmul.mubr.bf16.gmra.mrb[0].mxu0 %v1710
      %v1859 = vpop.f32.mrb[0].mxu0
      %v1860 = vadd.f32 0.0, %v1859
      %v1861 = vpop.f32.mrb[0].mxu0
      %v1862 = vpop.f32.mrb[0].mxu0
      %v1863 = vadd.f32 0.0, %v1862
      %v1864 = vpop.f32.mrb[0].mxu0
      %1865 = vmatprep.mubr.bf16.mxu0 0
      %1866 = vmatmul.mubr.bf16.gmra.mrb[0].mxu0 %v1711
      %v1867 = vpop.f32.mrb[0].mxu0
      %v1868 = vadd.f32 0.0, %v1867
      %v1869 = vpop.f32.mrb[0].mxu0
      %v1870 = vpop.f32.mrb[0].mxu0
      %v1871 = vadd.f32 0.0, %v1870
      %v1872 = vpop.f32.mrb[0].mxu0
      %1873 = vmatprep.mubr.bf16.mxu0 0
      %1874 = vmatmul.mubr.bf16.gmra.mrb[0].mxu0 %v1712
      %v1875 = vpop.f32.mrb[0].mxu0
      %v1876 = vadd.f32 0.0, %v1875
      %v1877 = vpop.f32.mrb[0].mxu0
      %v1878 = vpop.f32.mrb[0].mxu0
      %v1879 = vadd.f32 0.0, %v1878
      %v1880 = vpop.f32.mrb[0].mxu0
      %1881 = vmatprep.mubr.bf16.mxu0 0
      %1882 = vmatmul.mubr.bf16.gmra.mrb[0].mxu0 %v1713
      %v1883 = vpop.f32.mrb[0].mxu0
      %v1884 = vadd.f32 0.0, %v1883
      %v1885 = vpop.f32.mrb[0].mxu0
      %v1886 = vpop.f32.mrb[0].mxu0
      %v1887 = vadd.f32 0.0, %v1886
      %v1888 = vpop.f32.mrb[0].mxu0
      %1889 = vmatprep.mubr.bf16.mxu0 0
      %1890 = vmatmul.mubr.bf16.gmra.mrb[0].mxu0 %v1714
      %v1891 = vpop.f32.mrb[0].mxu0
      %v1892 = vadd.f32 0.0, %v1891
      %v1893 = vpop.f32.mrb[0].mxu0
      %v1894 = vpop.f32.mrb[0].mxu0
      %v1895 = vadd.f32 0.0, %v1894
      %v1896 = vpop.f32.mrb[0].mxu0
      %1897 = vmatprep.mubr.bf16.mxu0 0
      %1898 = vmatmul.mubr.bf16.gmra.mrb[0].mxu0 %v1715
      %v1899 = vpop.f32.mrb[0].mxu0
      %v1900 = vadd.f32 0.0, %v1899
      %v1901 = vpop.f32.mrb[0].mxu0
      %v1902 = vpop.f32.mrb[0].mxu0
      %v1903 = vadd.f32 0.0, %v1902
      %v1904 = vpop.f32.mrb[0].mxu0
      %1905 = vmatprep.mubr.bf16.mxu0 0
      %1906 = vmatmul.mubr.bf16.gmra.mrb[0].mxu0 %v1716
      %v1907 = vpop.f32.mrb[0].mxu0
      %v1908 = vadd.f32 0.0, %v1907
      %v1909 = vpop.f32.mrb[0].mxu0
      %v1910 = vpop.f32.mrb[0].mxu0
      %v1911 = vadd.f32 0.0, %v1910
      %v1912 = vpop.f32.mrb[0].mxu0
      %1913 = vmatprep.mubr.bf16.mxu0 0
      %1914 = vmatmul.mubr.bf16.gmra.mrb[0].mxu0 %v1717
      %v1915 = vpop.f32.mrb[0].mxu0
      %v1916 = vadd.f32 0.0, %v1915
      %v1917 = vpop.f32.mrb[0].mxu0
      %v1918 = vpop.f32.mrb[0].mxu0
      %v1919 = vadd.f32 0.0, %v1918
      %v1920 = vpop.f32.mrb[0].mxu0
      %1921 = vmatprep.mubr.bf16.mxu0 0
      %1922 = vmatmul.mubr.bf16.gmra.mrb[0].mxu0 %v1718
      %v1923 = vpop.f32.mrb[0].mxu0
      %v1924 = vadd.f32 0.0, %v1923
      %v1925 = vpop.f32.mrb[0].mxu0
      %v1926 = vpop.f32.mrb[0].mxu0
      %v1927 = vadd.f32 0.0, %v1926
      %v1928 = vpop.f32.mrb[0].mxu0
      %1929 = vmatprep.mubr.bf16.mxu0 0
      %1930 = vmatmul.mubr.bf16.gmra.mrb[0].mxu0 %v1719
      %v1931 = vpop.f32.mrb[0].mxu0
      %v1932 = vadd.f32 0.0, %v1931
      %v1933 = vpop.f32.mrb[0].mxu0
      %v1934 = vpop.f32.mrb[0].mxu0
      %v1935 = vadd.f32 0.0, %v1934
      %v1936 = vpop.f32.mrb[0].mxu0
      %1937 = vmatprep.mubr.bf16.mxu0 0
      %1938 = vmatmul.mubr.bf16.gmra.mrb[0].mxu0 %v1720
      %v1939 = vpop.f32.mrb[0].mxu0
      %v1940 = vadd.f32 0.0, %v1939
      %v1941 = vpop.f32.mrb[0].mxu0
      %v1942 = vpop.f32.mrb[0].mxu0
      %v1943 = vadd.f32 0.0, %v1942
      %v1944 = vpop.f32.mrb[0].mxu0
      %1945 = vdwg.mxu0
      %v1946 = vadd.f32 %v1624, %v1820
      %v1947 = vadd.f32 %v1625, %v1823
      %v1948 = vadd.f32 %v1626, %v1828
      %v1949 = vadd.f32 %v1627, %v1831
      %v1950 = vadd.f32 %v1628, %v1836
      %v1951 = vadd.f32 %v1629, %v1839
      %v1952 = vadd.f32 %v1630, %v1844
      %v1953 = vadd.f32 %v1631, %v1847
      %v1954 = vadd.f32 %v1632, %v1852
      %v1955 = vadd.f32 %v1633, %v1855
      %v1956 = vadd.f32 %v1634, %v1860
      %v1957 = vadd.f32 %v1635, %v1863
      %v1958 = vadd.f32 %v1636, %v1868
      %v1959 = vadd.f32 %v1637, %v1871
      %v1960 = vadd.f32 %v1638, %v1876
      %v1961 = vadd.f32 %v1639, %v1879
      %v1962 = vadd.f32 %v1640, %v1884
      %v1963 = vadd.f32 %v1641, %v1887
      %v1964 = vadd.f32 %v1642, %v1892
      %v1965 = vadd.f32 %v1643, %v1895
      %v1966 = vadd.f32 %v1644, %v1900
      %v1967 = vadd.f32 %v1645, %v1903
      %v1968 = vadd.f32 %v1646, %v1908
      %v1969 = vadd.f32 %v1647, %v1911
      %v1970 = vadd.f32 %v1648, %v1916
      %v1971 = vadd.f32 %v1649, %v1919
      %v1972 = vadd.f32 %v1650, %v1924
      %v1973 = vadd.f32 %v1651, %v1927
      %v1974 = vadd.f32 %v1652, %v1932
      %v1975 = vadd.f32 %v1653, %v1935
      %v1976 = vadd.f32 %v1654, %v1940
      %v1977 = vadd.f32 %v1655, %v1943
      %1978 = vst [vmem:[%s204] sm:$0xff] %v1946
      %1979 = vst [vmem:[%s204 + $0x8] sm:$0xff] %v1947
      %1980 = vst [vmem:[%s204 + $0x10] sm:$0xff] %v1948
      %1981 = vst [vmem:[%s204 + $0x18] sm:$0xff] %v1949
      %1982 = vst [vmem:[%s204 + $0x20] sm:$0xff] %v1950
      %1983 = vst [vmem:[%s204 + $0x28] sm:$0xff] %v1951
      %1984 = vst [vmem:[%s204 + $0x30] sm:$0xff] %v1952
      %1985 = vst [vmem:[%s204 + $0x38] sm:$0xff] %v1953
      %1986 = vst [vmem:[%s204 + $0x40] sm:$0xff] %v1954
      %1987 = vst [vmem:[%s204 + $0x48] sm:$0xff] %v1955
      %1988 = vst [vmem:[%s204 + $0x50] sm:$0xff] %v1956
      %1989 = vst [vmem:[%s204 + $0x58] sm:$0xff] %v1957
      %1990 = vst [vmem:[%s204 + $0x60] sm:$0xff] %v1958
      %1991 = vst [vmem:[%s204 + $0x68] sm:$0xff] %v1959
      %1992 = vst [vmem:[%s204 + $0x70] sm:$0xff] %v1960
      %1993 = vst [vmem:[%s204 + $0x78] sm:$0xff] %v1961
      %1994 = vst [vmem:[%s204 + $0x80] sm:$0xff] %v1962
      %1995 = vst [vmem:[%s204 + $0x88] sm:$0xff] %v1963
      %1996 = vst [vmem:[%s204 + $0x90] sm:$0xff] %v1964
      %1997 = vst [vmem:[%s204 + $0x98] sm:$0xff] %v1965
      %1998 = vst [vmem:[%s204 + $0xa0] sm:$0xff] %v1966
      %1999 = vst [vmem:[%s204 + $0xa8] sm:$0xff] %v1967
      %2000 = vst [vmem:[%s204 + $0xb0] sm:$0xff] %v1968
      %2001 = vst [vmem:[%s204 + $0xb8] sm:$0xff] %v1969
      %2002 = vst [vmem:[%s204 + $0xc0] sm:$0xff] %v1970
      %2003 = vst [vmem:[%s204 + $0xc8] sm:$0xff] %v1971
      %2004 = vst [vmem:[%s204 + $0xd0] sm:$0xff] %v1972
      %2005 = vst [vmem:[%s204 + $0xd8] sm:$0xff] %v1973
      %2006 = vst [vmem:[%s204 + $0xe0] sm:$0xff] %v1974
      %2007 = vst [vmem:[%s204 + $0xe8] sm:$0xff] %v1975
      %2008 = vst [vmem:[%s204 + $0xf0] sm:$0xff] %v1976
      %2009 = vst [vmem:[%s204 + $0xf8] sm:$0xff] %v1977
      %v2010 = vld [vmem:[%s204] sm:$0xff]
      %v2011 = vld [vmem:[%s204 + $0x8] sm:$0xff]
      %v2012 = vld [vmem:[%s204 + $0x10] sm:$0xff]
      %v2013 = vld [vmem:[%s204 + $0x18] sm:$0xff]
      %v2014 = vld [vmem:[%s204 + $0x20] sm:$0xff]
      %v2015 = vld [vmem:[%s204 + $0x28] sm:$0xff]
      %v2016 = vld [vmem:[%s204 + $0x30] sm:$0xff]
      %v2017 = vld [vmem:[%s204 + $0x38] sm:$0xff]
      %v2018 = vld [vmem:[%s204 + $0x40] sm:$0xff]
      %v2019 = vld [vmem:[%s204 + $0x48] sm:$0xff]
      %v2020 = vld [vmem:[%s204 + $0x50] sm:$0xff]
      %v2021 = vld [vmem:[%s204 + $0x58] sm:$0xff]
      %v2022 = vld [vmem:[%s204 + $0x60] sm:$0xff]
      %v2023 = vld [vmem:[%s204 + $0x68] sm:$0xff]
      %v2024 = vld [vmem:[%s204 + $0x70] sm:$0xff]
      %v2025 = vld [vmem:[%s204 + $0x78] sm:$0xff]
      %v2026 = vld [vmem:[%s204 + $0x80] sm:$0xff]
      %v2027 = vld [vmem:[%s204 + $0x88] sm:$0xff]
      %v2028 = vld [vmem:[%s204 + $0x90] sm:$0xff]
      %v2029 = vld [vmem:[%s204 + $0x98] sm:$0xff]
      %v2030 = vld [vmem:[%s204 + $0xa0] sm:$0xff]
      %v2031 = vld [vmem:[%s204 + $0xa8] sm:$0xff]
      %v2032 = vld [vmem:[%s204 + $0xb0] sm:$0xff]
      %v2033 = vld [vmem:[%s204 + $0xb8] sm:$0xff]
      %v2034 = vld [vmem:[%s204 + $0xc0] sm:$0xff]
      %v2035 = vld [vmem:[%s204 + $0xc8] sm:$0xff]
      %v2036 = vld [vmem:[%s204 + $0xd0] sm:$0xff]
      %v2037 = vld [vmem:[%s204 + $0xd8] sm:$0xff]
      %v2038 = vld [vmem:[%s204 + $0xe0] sm:$0xff]
      %v2039 = vld [vmem:[%s204 + $0xe8] sm:$0xff]
      %v2040 = vld [vmem:[%s204 + $0xf0] sm:$0xff]
      %v2041 = vld [vmem:[%s204 + $0xf8] sm:$0xff]
      %s2042 = scalar_lea.vmem %s1, 192
      %v2043 = vld [vmem:[%s2042] sm:$0xf]
      %v2044 = vld [vmem:[%s2042 + $0x4] sm:$0xf]
      %v2045 = vld [vmem:[%s2042 + $0x8] sm:$0xf]
      %v2046 = vld [vmem:[%s2042 + $0xc] sm:$0xf]
      %v2047 = vld [vmem:[%s2042 + $0x10] sm:$0xf]
      %v2048 = vld [vmem:[%s2042 + $0x14] sm:$0xf]
      %v2049 = vld [vmem:[%s2042 + $0x18] sm:$0xf]
      %v2050 = vld [vmem:[%s2042 + $0x1c] sm:$0xf]
      %v2051 = vld [vmem:[%s2042 + $0x20] sm:$0xf]
      %v2052 = vld [vmem:[%s2042 + $0x24] sm:$0xf]
      %v2053 = vld [vmem:[%s2042 + $0x28] sm:$0xf]
      %v2054 = vld [vmem:[%s2042 + $0x2c] sm:$0xf]
      %v2055 = vld [vmem:[%s2042 + $0x30] sm:$0xf]
      %v2056 = vld [vmem:[%s2042 + $0x34] sm:$0xf]
      %v2057 = vld [vmem:[%s2042 + $0x38] sm:$0xf]
      %v2058 = vld [vmem:[%s2042 + $0x3c] sm:$0xf]
      %v2061 = vunpack.c.l.b16 %v258
      %v2062 = vunpack.c.l.b16 %v259
      %v2063 = vpack.c.b16 %v2062, %v2061
      %v2081 = vunpack.c.l.b16 %v2043
      %v2082 = vunpack.c.l.b16 %v2044
      %v2083 = vunpack.c.l.b16 %v2045
      %v2084 = vunpack.c.l.b16 %v2046
      %v2085 = vunpack.c.l.b16 %v2047
      %v2086 = vunpack.c.l.b16 %v2048
      %v2087 = vunpack.c.l.b16 %v2049
      %v2088 = vunpack.c.l.b16 %v2050
      %v2089 = vunpack.c.l.b16 %v2051
      %v2090 = vunpack.c.l.b16 %v2052
      %v2091 = vunpack.c.l.b16 %v2053
      %v2092 = vunpack.c.l.b16 %v2054
      %v2093 = vunpack.c.l.b16 %v2055
      %v2094 = vunpack.c.l.b16 %v2056
      %v2095 = vunpack.c.l.b16 %v2057
      %v2096 = vunpack.c.l.b16 %v2058
      %v2097 = vpack.c.b16 %v2082, %v2081
      %v2098 = vpack.c.b16 %v2084, %v2083
      %v2099 = vpack.c.b16 %v2086, %v2085
      %v2100 = vpack.c.b16 %v2088, %v2087
      %v2101 = vpack.c.b16 %v2090, %v2089
      %v2102 = vpack.c.b16 %v2092, %v2091
      %v2103 = vpack.c.b16 %v2094, %v2093
      %v2104 = vpack.c.b16 %v2096, %v2095
      %2113 = vmatprep.subr.bf16.mxu0 0
      %2114 = vmatpush1.bf16.msra.mxu0 %v2097
      %2115 = vmatprep.subr.bf16.mxu0 0
      %2116 = vmatpush1.bf16.msra.mxu0 %v2098
      %2117 = vmatprep.subr.bf16.mxu0 0
      %2118 = vmatpush1.bf16.msra.mxu0 %v2099
      %2119 = vmatprep.subr.bf16.mxu0 0
      %2120 = vmatpush1.bf16.msra.mxu0 %v2100
      %2121 = vmatprep.subr.bf16.mxu0 0
      %2122 = vmatpush1.bf16.msra.mxu0 %v2101
      %2123 = vmatprep.subr.bf16.mxu0 0
      %2124 = vmatpush1.bf16.msra.mxu0 %v2102
      %2125 = vmatprep.subr.bf16.mxu0 0
      %2126 = vmatpush1.bf16.msra.mxu0 %v2103
      %2127 = vmatprep.subr.bf16.mxu0 0
      %2128 = vmatpush1.bf16.msra.mxu0 %v2104
      %2129 = vmatprep.subr.bf16.mxu0 0
      %2130 = vmatpush1.bf16.msra.mxu0 0
      %2131 = vmatprep.subr.bf16.mxu0 0
      %2132 = vmatpush1.bf16.msra.mxu0 0
      %2133 = vmatprep.subr.bf16.mxu0 0
      %2134 = vmatpush1.bf16.msra.mxu0 0
      %2135 = vmatprep.subr.bf16.mxu0 0
      %2136 = vmatpush1.bf16.msra.mxu0 0
      %2137 = vmatprep.subr.bf16.mxu0 0
      %2138 = vmatpush1.bf16.msra.mxu0 0
      %2139 = vmatprep.subr.bf16.mxu0 0
      %2140 = vmatpush1.bf16.msra.mxu0 0
      %2141 = vmatprep.subr.bf16.mxu0 0
      %2142 = vmatpush1.bf16.msra.mxu0 0
      %2143 = vmatprep.subr.bf16.mxu0 0
      %2144 = vmatpush1.bf16.msra.mxu0 0
      %2145 = vmatprep.mubr.bf16.mxu0 0
      %2146 = vmatmul.mubr.bf16.gmra.mrb[0].mxu0 %v416
      %v2147 = vpop.f32.mrb[0].mxu0
      %v2148 = vadd.f32 0.0, %v2147
      %v2149 = vpop.f32.mrb[0].mxu0
      %v2150 = vpop.f32.mrb[0].mxu0
      %v2151 = vadd.f32 0.0, %v2150
      %v2152 = vpop.f32.mrb[0].mxu0
      %2153 = vmatprep.mubr.bf16.mxu0 0
      %2154 = vmatmul.mubr.bf16.gmra.mrb[0].mxu0 %v417
      %v2155 = vpop.f32.mrb[0].mxu0
      %v2156 = vadd.f32 0.0, %v2155
      %v2157 = vpop.f32.mrb[0].mxu0
      %v2158 = vpop.f32.mrb[0].mxu0
      %v2159 = vadd.f32 0.0, %v2158
      %v2160 = vpop.f32.mrb[0].mxu0
      %2161 = vmatprep.mubr.bf16.mxu0 0
      %2162 = vmatmul.mubr.bf16.gmra.mrb[0].mxu0 %v418
      %v2163 = vpop.f32.mrb[0].mxu0
      %v2164 = vadd.f32 0.0, %v2163
      %v2165 = vpop.f32.mrb[0].mxu0
      %v2166 = vpop.f32.mrb[0].mxu0
      %v2167 = vadd.f32 0.0, %v2166
      %v2168 = vpop.f32.mrb[0].mxu0
      %2169 = vmatprep.mubr.bf16.mxu0 0
      %2170 = vmatmul.mubr.bf16.gmra.mrb[0].mxu0 %v419
      %v2171 = vpop.f32.mrb[0].mxu0
      %v2172 = vadd.f32 0.0, %v2171
      %v2173 = vpop.f32.mrb[0].mxu0
      %v2174 = vpop.f32.mrb[0].mxu0
      %v2175 = vadd.f32 0.0, %v2174
      %v2176 = vpop.f32.mrb[0].mxu0
      %2177 = vmatprep.mubr.bf16.mxu0 0
      %2178 = vmatmul.mubr.bf16.gmra.mrb[0].mxu0 %v420
      %v2179 = vpop.f32.mrb[0].mxu0
      %v2180 = vadd.f32 0.0, %v2179
      %v2181 = vpop.f32.mrb[0].mxu0
      %v2182 = vpop.f32.mrb[0].mxu0
      %v2183 = vadd.f32 0.0, %v2182
      %v2184 = vpop.f32.mrb[0].mxu0
      %2185 = vmatprep.mubr.bf16.mxu0 0
      %2186 = vmatmul.mubr.bf16.gmra.mrb[0].mxu0 %v421
      %v2187 = vpop.f32.mrb[0].mxu0
      %v2188 = vadd.f32 0.0, %v2187
      %v2189 = vpop.f32.mrb[0].mxu0
      %v2190 = vpop.f32.mrb[0].mxu0
      %v2191 = vadd.f32 0.0, %v2190
      %v2192 = vpop.f32.mrb[0].mxu0
      %2193 = vmatprep.mubr.bf16.mxu0 0
      %2194 = vmatmul.mubr.bf16.gmra.mrb[0].mxu0 %v422
      %v2195 = vpop.f32.mrb[0].mxu0
      %v2196 = vadd.f32 0.0, %v2195
      %v2197 = vpop.f32.mrb[0].mxu0
      %v2198 = vpop.f32.mrb[0].mxu0
      %v2199 = vadd.f32 0.0, %v2198
      %v2200 = vpop.f32.mrb[0].mxu0
      %2201 = vmatprep.mubr.bf16.mxu0 0
      %2202 = vmatmul.mubr.bf16.gmra.mrb[0].mxu0 %v423
      %v2203 = vpop.f32.mrb[0].mxu0
      %v2204 = vadd.f32 0.0, %v2203
      %v2205 = vpop.f32.mrb[0].mxu0
      %v2206 = vpop.f32.mrb[0].mxu0
      %v2207 = vadd.f32 0.0, %v2206
      %v2208 = vpop.f32.mrb[0].mxu0
      %2209 = vmatprep.mubr.bf16.mxu0 0
      %2210 = vmatmul.mubr.bf16.gmra.mrb[0].mxu0 %v424
      %v2211 = vpop.f32.mrb[0].mxu0
      %v2212 = vadd.f32 0.0, %v2211
      %v2213 = vpop.f32.mrb[0].mxu0
      %v2214 = vpop.f32.mrb[0].mxu0
      %v2215 = vadd.f32 0.0, %v2214
      %v2216 = vpop.f32.mrb[0].mxu0
      %2217 = vmatprep.mubr.bf16.mxu0 0
      %2218 = vmatmul.mubr.bf16.gmra.mrb[0].mxu0 %v425
      %v2219 = vpop.f32.mrb[0].mxu0
      %v2220 = vadd.f32 0.0, %v2219
      %v2221 = vpop.f32.mrb[0].mxu0
      %v2222 = vpop.f32.mrb[0].mxu0
      %v2223 = vadd.f32 0.0, %v2222
      %v2224 = vpop.f32.mrb[0].mxu0
      %2225 = vmatprep.mubr.bf16.mxu0 0
      %2226 = vmatmul.mubr.bf16.gmra.mrb[0].mxu0 %v426
      %v2227 = vpop.f32.mrb[0].mxu0
      %v2228 = vadd.f32 0.0, %v2227
      %v2229 = vpop.f32.mrb[0].mxu0
      %v2230 = vpop.f32.mrb[0].mxu0
      %v2231 = vadd.f32 0.0, %v2230
      %v2232 = vpop.f32.mrb[0].mxu0
      %2233 = vmatprep.mubr.bf16.mxu0 0
      %2234 = vmatmul.mubr.bf16.gmra.mrb[0].mxu0 %v427
      %v2235 = vpop.f32.mrb[0].mxu0
      %v2236 = vadd.f32 0.0, %v2235
      %v2237 = vpop.f32.mrb[0].mxu0
      %v2238 = vpop.f32.mrb[0].mxu0
      %v2239 = vadd.f32 0.0, %v2238
      %v2240 = vpop.f32.mrb[0].mxu0
      %2241 = vmatprep.mubr.bf16.mxu0 0
      %2242 = vmatmul.mubr.bf16.gmra.mrb[0].mxu0 %v428
      %v2243 = vpop.f32.mrb[0].mxu0
      %v2244 = vadd.f32 0.0, %v2243
      %v2245 = vpop.f32.mrb[0].mxu0
      %v2246 = vpop.f32.mrb[0].mxu0
      %v2247 = vadd.f32 0.0, %v2246
      %v2248 = vpop.f32.mrb[0].mxu0
      %2249 = vmatprep.mubr.bf16.mxu0 0
      %2250 = vmatmul.mubr.bf16.gmra.mrb[0].mxu0 %v429
      %v2251 = vpop.f32.mrb[0].mxu0
      %v2252 = vadd.f32 0.0, %v2251
      %v2253 = vpop.f32.mrb[0].mxu0
      %v2254 = vpop.f32.mrb[0].mxu0
      %v2255 = vadd.f32 0.0, %v2254
      %v2256 = vpop.f32.mrb[0].mxu0
      %2257 = vmatprep.mubr.bf16.mxu0 0
      %2258 = vmatmul.mubr.bf16.gmra.mrb[0].mxu0 %v430
      %v2259 = vpop.f32.mrb[0].mxu0
      %v2260 = vadd.f32 0.0, %v2259
      %v2261 = vpop.f32.mrb[0].mxu0
      %v2262 = vpop.f32.mrb[0].mxu0
      %v2263 = vadd.f32 0.0, %v2262
      %v2264 = vpop.f32.mrb[0].mxu0
      %2265 = vmatprep.mubr.bf16.mxu0 0
      %2266 = vmatmul.mubr.bf16.gmra.mrb[0].mxu0 %v2063
      %v2267 = vpop.f32.mrb[0].mxu0
      %v2268 = vadd.f32 0.0, %v2267
      %v2269 = vpop.f32.mrb[0].mxu0
      %v2270 = vpop.f32.mrb[0].mxu0
      %v2271 = vadd.f32 0.0, %v2270
      %v2272 = vpop.f32.mrb[0].mxu0
      %2273 = vdwg.mxu0
      %v2274 = vadd.f32 %v2010, %v2148
      %v2275 = vadd.f32 %v2011, %v2151
      %v2276 = vadd.f32 %v2012, %v2156
      %v2277 = vadd.f32 %v2013, %v2159
      %v2278 = vadd.f32 %v2014, %v2164
      %v2279 = vadd.f32 %v2015, %v2167
      %v2280 = vadd.f32 %v2016, %v2172
      %v2281 = vadd.f32 %v2017, %v2175
      %v2282 = vadd.f32 %v2018, %v2180
      %v2283 = vadd.f32 %v2019, %v2183
      %v2284 = vadd.f32 %v2020, %v2188
      %v2285 = vadd.f32 %v2021, %v2191
      %v2286 = vadd.f32 %v2022, %v2196
      %v2287 = vadd.f32 %v2023, %v2199
      %v2288 = vadd.f32 %v2024, %v2204
      %v2289 = vadd.f32 %v2025, %v2207
      %v2290 = vadd.f32 %v2026, %v2212
      %v2291 = vadd.f32 %v2027, %v2215
      %v2292 = vadd.f32 %v2028, %v2220
      %v2293 = vadd.f32 %v2029, %v2223
      %v2294 = vadd.f32 %v2030, %v2228
      %v2295 = vadd.f32 %v2031, %v2231
      %v2296 = vadd.f32 %v2032, %v2236
      %v2297 = vadd.f32 %v2033, %v2239
      %v2298 = vadd.f32 %v2034, %v2244
      %v2299 = vadd.f32 %v2035, %v2247
      %v2300 = vadd.f32 %v2036, %v2252
      %v2301 = vadd.f32 %v2037, %v2255
      %v2302 = vadd.f32 %v2038, %v2260
      %v2303 = vadd.f32 %v2039, %v2263
      %v2304 = vadd.f32 %v2040, %v2268
      %v2305 = vadd.f32 %v2041, %v2271
      %2306 = vst [vmem:[%s204] sm:$0xff] %v2274
      %2307 = vst [vmem:[%s204 + $0x8] sm:$0xff] %v2275
      %2308 = vst [vmem:[%s204 + $0x10] sm:$0xff] %v2276
      %2309 = vst [vmem:[%s204 + $0x18] sm:$0xff] %v2277
      %2310 = vst [vmem:[%s204 + $0x20] sm:$0xff] %v2278
      %2311 = vst [vmem:[%s204 + $0x28] sm:$0xff] %v2279
      %2312 = vst [vmem:[%s204 + $0x30] sm:$0xff] %v2280
      %2313 = vst [vmem:[%s204 + $0x38] sm:$0xff] %v2281
      %2314 = vst [vmem:[%s204 + $0x40] sm:$0xff] %v2282
      %2315 = vst [vmem:[%s204 + $0x48] sm:$0xff] %v2283
      %2316 = vst [vmem:[%s204 + $0x50] sm:$0xff] %v2284
      %2317 = vst [vmem:[%s204 + $0x58] sm:$0xff] %v2285
      %2318 = vst [vmem:[%s204 + $0x60] sm:$0xff] %v2286
      %2319 = vst [vmem:[%s204 + $0x68] sm:$0xff] %v2287
      %2320 = vst [vmem:[%s204 + $0x70] sm:$0xff] %v2288
      %2321 = vst [vmem:[%s204 + $0x78] sm:$0xff] %v2289
      %2322 = vst [vmem:[%s204 + $0x80] sm:$0xff] %v2290
      %2323 = vst [vmem:[%s204 + $0x88] sm:$0xff] %v2291
      %2324 = vst [vmem:[%s204 + $0x90] sm:$0xff] %v2292
      %2325 = vst [vmem:[%s204 + $0x98] sm:$0xff] %v2293
      %2326 = vst [vmem:[%s204 + $0xa0] sm:$0xff] %v2294
      %2327 = vst [vmem:[%s204 + $0xa8] sm:$0xff] %v2295
      %2328 = vst [vmem:[%s204 + $0xb0] sm:$0xff] %v2296
      %2329 = vst [vmem:[%s204 + $0xb8] sm:$0xff] %v2297
      %2330 = vst [vmem:[%s204 + $0xc0] sm:$0xff] %v2298
      %2331 = vst [vmem:[%s204 + $0xc8] sm:$0xff] %v2299
      %2332 = vst [vmem:[%s204 + $0xd0] sm:$0xff] %v2300
      %2333 = vst [vmem:[%s204 + $0xd8] sm:$0xff] %v2301
      %2334 = vst [vmem:[%s204 + $0xe0] sm:$0xff] %v2302
      %2335 = vst [vmem:[%s204 + $0xe8] sm:$0xff] %v2303
      %2336 = vst [vmem:[%s204 + $0xf0] sm:$0xff] %v2304
      %2337 = vst [vmem:[%s204 + $0xf8] sm:$0xff] %v2305
      %v2339 = vshrl.u32 %v258, 16
      %v2341 = vrot.slane %v2339, 4
      %v2342 = vshll.u32 %v258, 16
      %v2344 = vrot.slane %v2342, 5
      %v2345 = vor.u32 %v2341, %v2344
      %v2346 = vrot.slane %v2345, 4
      %v2348 = vshll.u32 %v259, 16
      %v2350 = vrot.slane %v2348, 5
      %v2351 = vsel %vm722, %v2346, %v2350
      %v2352 = vshrl.u32 %v259, 16
      %v2354 = vrot.slane %v2352, 4
      %v2355 = vor.u32 %v2354, %v2350
      %v2356 = vrot.slane %v2355, 4
      %v2358 = vshll.u32 %v260, 16
      %v2360 = vrot.slane %v2358, 5
      %v2361 = vsel %vm722, %v2356, %v2360
      %v2362 = vld [vmem:[%s204] sm:$0xff]
      %v2363 = vld [vmem:[%s204 + $0x8] sm:$0xff]
      %v2364 = vld [vmem:[%s204 + $0x10] sm:$0xff]
      %v2365 = vld [vmem:[%s204 + $0x18] sm:$0xff]
      %v2366 = vld [vmem:[%s204 + $0x20] sm:$0xff]
      %v2367 = vld [vmem:[%s204 + $0x28] sm:$0xff]
      %v2368 = vld [vmem:[%s204 + $0x30] sm:$0xff]
      %v2369 = vld [vmem:[%s204 + $0x38] sm:$0xff]
      %v2370 = vld [vmem:[%s204 + $0x40] sm:$0xff]
      %v2371 = vld [vmem:[%s204 + $0x48] sm:$0xff]
      %v2372 = vld [vmem:[%s204 + $0x50] sm:$0xff]
      %v2373 = vld [vmem:[%s204 + $0x58] sm:$0xff]
      %v2374 = vld [vmem:[%s204 + $0x60] sm:$0xff]
      %v2375 = vld [vmem:[%s204 + $0x68] sm:$0xff]
      %v2376 = vld [vmem:[%s204 + $0x70] sm:$0xff]
      %v2377 = vld [vmem:[%s204 + $0x78] sm:$0xff]
      %v2378 = vld [vmem:[%s204 + $0x80] sm:$0xff]
      %v2379 = vld [vmem:[%s204 + $0x88] sm:$0xff]
      %v2380 = vld [vmem:[%s204 + $0x90] sm:$0xff]
      %v2381 = vld [vmem:[%s204 + $0x98] sm:$0xff]
      %v2382 = vld [vmem:[%s204 + $0xa0] sm:$0xff]
      %v2383 = vld [vmem:[%s204 + $0xa8] sm:$0xff]
      %v2384 = vld [vmem:[%s204 + $0xb0] sm:$0xff]
      %v2385 = vld [vmem:[%s204 + $0xb8] sm:$0xff]
      %v2386 = vld [vmem:[%s204 + $0xc0] sm:$0xff]
      %v2387 = vld [vmem:[%s204 + $0xc8] sm:$0xff]
      %v2388 = vld [vmem:[%s204 + $0xd0] sm:$0xff]
      %v2389 = vld [vmem:[%s204 + $0xd8] sm:$0xff]
      %v2390 = vld [vmem:[%s204 + $0xe0] sm:$0xff]
      %v2391 = vld [vmem:[%s204 + $0xe8] sm:$0xff]
      %v2392 = vld [vmem:[%s204 + $0xf0] sm:$0xff]
      %v2393 = vld [vmem:[%s204 + $0xf8] sm:$0xff]
      %s2394 = scalar_lea.vmem %s1, 256
      %v2395 = vld [vmem:[%s2394] sm:$0xf]
      %v2396 = vld [vmem:[%s2394 + $0x4] sm:$0xf]
      %v2397 = vld [vmem:[%s2394 + $0x8] sm:$0xf]
      %v2398 = vld [vmem:[%s2394 + $0xc] sm:$0xf]
      %v2399 = vld [vmem:[%s2394 + $0x10] sm:$0xf]
      %v2400 = vld [vmem:[%s2394 + $0x14] sm:$0xf]
      %v2401 = vld [vmem:[%s2394 + $0x18] sm:$0xf]
      %v2402 = vld [vmem:[%s2394 + $0x1c] sm:$0xf]
      %v2403 = vld [vmem:[%s2394 + $0x20] sm:$0xf]
      %v2404 = vld [vmem:[%s2394 + $0x24] sm:$0xf]
      %v2405 = vld [vmem:[%s2394 + $0x28] sm:$0xf]
      %v2406 = vld [vmem:[%s2394 + $0x2c] sm:$0xf]
      %v2407 = vld [vmem:[%s2394 + $0x30] sm:$0xf]
      %v2408 = vld [vmem:[%s2394 + $0x34] sm:$0xf]
      %v2409 = vld [vmem:[%s2394 + $0x38] sm:$0xf]
      %v2410 = vld [vmem:[%s2394 + $0x3c] sm:$0xf]
      %v2411 = vunpack.c.l.b16 %v2351
      %v2412 = vunpack.c.l.b16 %v2361
      %v2413 = vpack.c.b16 %v2412, %v2411
      %v2431 = vunpack.c.l.b16 %v2395
      %v2432 = vunpack.c.l.b16 %v2396
      %v2433 = vunpack.c.l.b16 %v2397
      %v2434 = vunpack.c.l.b16 %v2398
      %v2435 = vunpack.c.l.b16 %v2399
      %v2436 = vunpack.c.l.b16 %v2400
      %v2437 = vunpack.c.l.b16 %v2401
      %v2438 = vunpack.c.l.b16 %v2402
      %v2439 = vunpack.c.l.b16 %v2403
      %v2440 = vunpack.c.l.b16 %v2404
      %v2441 = vunpack.c.l.b16 %v2405
      %v2442 = vunpack.c.l.b16 %v2406
      %v2443 = vunpack.c.l.b16 %v2407
      %v2444 = vunpack.c.l.b16 %v2408
      %v2445 = vunpack.c.l.b16 %v2409
      %v2446 = vunpack.c.l.b16 %v2410
      %v2447 = vpack.c.b16 %v2432, %v2431
      %v2448 = vpack.c.b16 %v2434, %v2433
      %v2449 = vpack.c.b16 %v2436, %v2435
      %v2450 = vpack.c.b16 %v2438, %v2437
      %v2451 = vpack.c.b16 %v2440, %v2439
      %v2452 = vpack.c.b16 %v2442, %v2441
      %v2453 = vpack.c.b16 %v2444, %v2443
      %v2454 = vpack.c.b16 %v2446, %v2445
      %2463 = vmatprep.subr.bf16.mxu0 0
      %2464 = vmatpush1.bf16.msra.mxu0 %v2447
      %2465 = vmatprep.subr.bf16.mxu0 0
      %2466 = vmatpush1.bf16.msra.mxu0 %v2448
      %2467 = vmatprep.subr.bf16.mxu0 0
      %2468 = vmatpush1.bf16.msra.mxu0 %v2449
      %2469 = vmatprep.subr.bf16.mxu0 0
      %2470 = vmatpush1.bf16.msra.mxu0 %v2450
      %2471 = vmatprep.subr.bf16.mxu0 0
      %2472 = vmatpush1.bf16.msra.mxu0 %v2451
      %2473 = vmatprep.subr.bf16.mxu0 0
      %2474 = vmatpush1.bf16.msra.mxu0 %v2452
      %2475 = vmatprep.subr.bf16.mxu0 0
      %2476 = vmatpush1.bf16.msra.mxu0 %v2453
      %2477 = vmatprep.subr.bf16.mxu0 0
      %2478 = vmatpush1.bf16.msra.mxu0 %v2454
      %2479 = vmatprep.subr.bf16.mxu0 0
      %2480 = vmatpush1.bf16.msra.mxu0 0
      %2481 = vmatprep.subr.bf16.mxu0 0
      %2482 = vmatpush1.bf16.msra.mxu0 0
      %2483 = vmatprep.subr.bf16.mxu0 0
      %2484 = vmatpush1.bf16.msra.mxu0 0
      %2485 = vmatprep.subr.bf16.mxu0 0
      %2486 = vmatpush1.bf16.msra.mxu0 0
      %2487 = vmatprep.subr.bf16.mxu0 0
      %2488 = vmatpush1.bf16.msra.mxu0 0
      %2489 = vmatprep.subr.bf16.mxu0 0
      %2490 = vmatpush1.bf16.msra.mxu0 0
      %2491 = vmatprep.subr.bf16.mxu0 0
      %2492 = vmatpush1.bf16.msra.mxu0 0
      %2493 = vmatprep.subr.bf16.mxu0 0
      %2494 = vmatpush1.bf16.msra.mxu0 0
      %2495 = vmatprep.mubr.bf16.mxu0 0
      %2496 = vmatmul.mubr.bf16.gmra.mrb[0].mxu0 %v1189
      %v2497 = vpop.f32.mrb[0].mxu0
      %v2498 = vadd.f32 0.0, %v2497
      %v2499 = vpop.f32.mrb[0].mxu0
      %v2500 = vpop.f32.mrb[0].mxu0
      %v2501 = vadd.f32 0.0, %v2500
      %v2502 = vpop.f32.mrb[0].mxu0
      %2503 = vmatprep.mubr.bf16.mxu0 0
      %2504 = vmatmul.mubr.bf16.gmra.mrb[0].mxu0 %v1190
      %v2505 = vpop.f32.mrb[0].mxu0
      %v2506 = vadd.f32 0.0, %v2505
      %v2507 = vpop.f32.mrb[0].mxu0
      %v2508 = vpop.f32.mrb[0].mxu0
      %v2509 = vadd.f32 0.0, %v2508
      %v2510 = vpop.f32.mrb[0].mxu0
      %2511 = vmatprep.mubr.bf16.mxu0 0
      %2512 = vmatmul.mubr.bf16.gmra.mrb[0].mxu0 %v1191
      %v2513 = vpop.f32.mrb[0].mxu0
      %v2514 = vadd.f32 0.0, %v2513
      %v2515 = vpop.f32.mrb[0].mxu0
      %v2516 = vpop.f32.mrb[0].mxu0
      %v2517 = vadd.f32 0.0, %v2516
      %v2518 = vpop.f32.mrb[0].mxu0
      %2519 = vmatprep.mubr.bf16.mxu0 0
      %2520 = vmatmul.mubr.bf16.gmra.mrb[0].mxu0 %v1192
      %v2521 = vpop.f32.mrb[0].mxu0
      %v2522 = vadd.f32 0.0, %v2521
      %v2523 = vpop.f32.mrb[0].mxu0
      %v2524 = vpop.f32.mrb[0].mxu0
      %v2525 = vadd.f32 0.0, %v2524
      %v2526 = vpop.f32.mrb[0].mxu0
      %2527 = vmatprep.mubr.bf16.mxu0 0
      %2528 = vmatmul.mubr.bf16.gmra.mrb[0].mxu0 %v1193
      %v2529 = vpop.f32.mrb[0].mxu0
      %v2530 = vadd.f32 0.0, %v2529
      %v2531 = vpop.f32.mrb[0].mxu0
      %v2532 = vpop.f32.mrb[0].mxu0
      %v2533 = vadd.f32 0.0, %v2532
      %v2534 = vpop.f32.mrb[0].mxu0
      %2535 = vmatprep.mubr.bf16.mxu0 0
      %2536 = vmatmul.mubr.bf16.gmra.mrb[0].mxu0 %v1194
      %v2537 = vpop.f32.mrb[0].mxu0
      %v2538 = vadd.f32 0.0, %v2537
      %v2539 = vpop.f32.mrb[0].mxu0
      %v2540 = vpop.f32.mrb[0].mxu0
      %v2541 = vadd.f32 0.0, %v2540
      %v2542 = vpop.f32.mrb[0].mxu0
      %2543 = vmatprep.mubr.bf16.mxu0 0
      %2544 = vmatmul.mubr.bf16.gmra.mrb[0].mxu0 %v1195
      %v2545 = vpop.f32.mrb[0].mxu0
      %v2546 = vadd.f32 0.0, %v2545
      %v2547 = vpop.f32.mrb[0].mxu0
      %v2548 = vpop.f32.mrb[0].mxu0
      %v2549 = vadd.f32 0.0, %v2548
      %v2550 = vpop.f32.mrb[0].mxu0
      %2551 = vmatprep.mubr.bf16.mxu0 0
      %2552 = vmatmul.mubr.bf16.gmra.mrb[0].mxu0 %v1196
      %v2553 = vpop.f32.mrb[0].mxu0
      %v2554 = vadd.f32 0.0, %v2553
      %v2555 = vpop.f32.mrb[0].mxu0
      %v2556 = vpop.f32.mrb[0].mxu0
      %v2557 = vadd.f32 0.0, %v2556
      %v2558 = vpop.f32.mrb[0].mxu0
      %2559 = vmatprep.mubr.bf16.mxu0 0
      %2560 = vmatmul.mubr.bf16.gmra.mrb[0].mxu0 %v1197
      %v2561 = vpop.f32.mrb[0].mxu0
      %v2562 = vadd.f32 0.0, %v2561
      %v2563 = vpop.f32.mrb[0].mxu0
      %v2564 = vpop.f32.mrb[0].mxu0
      %v2565 = vadd.f32 0.0, %v2564
      %v2566 = vpop.f32.mrb[0].mxu0
      %2567 = vmatprep.mubr.bf16.mxu0 0
      %2568 = vmatmul.mubr.bf16.gmra.mrb[0].mxu0 %v1198
      %v2569 = vpop.f32.mrb[0].mxu0
      %v2570 = vadd.f32 0.0, %v2569
      %v2571 = vpop.f32.mrb[0].mxu0
      %v2572 = vpop.f32.mrb[0].mxu0
      %v2573 = vadd.f32 0.0, %v2572
      %v2574 = vpop.f32.mrb[0].mxu0
      %2575 = vmatprep.mubr.bf16.mxu0 0
      %2576 = vmatmul.mubr.bf16.gmra.mrb[0].mxu0 %v1199
      %v2577 = vpop.f32.mrb[0].mxu0
      %v2578 = vadd.f32 0.0, %v2577
      %v2579 = vpop.f32.mrb[0].mxu0
      %v2580 = vpop.f32.mrb[0].mxu0
      %v2581 = vadd.f32 0.0, %v2580
      %v2582 = vpop.f32.mrb[0].mxu0
      %2583 = vmatprep.mubr.bf16.mxu0 0
      %2584 = vmatmul.mubr.bf16.gmra.mrb[0].mxu0 %v1200
      %v2585 = vpop.f32.mrb[0].mxu0
      %v2586 = vadd.f32 0.0, %v2585
      %v2587 = vpop.f32.mrb[0].mxu0
      %v2588 = vpop.f32.mrb[0].mxu0
      %v2589 = vadd.f32 0.0, %v2588
      %v2590 = vpop.f32.mrb[0].mxu0
      %2591 = vmatprep.mubr.bf16.mxu0 0
      %2592 = vmatmul.mubr.bf16.gmra.mrb[0].mxu0 %v1201
      %v2593 = vpop.f32.mrb[0].mxu0
      %v2594 = vadd.f32 0.0, %v2593
      %v2595 = vpop.f32.mrb[0].mxu0
      %v2596 = vpop.f32.mrb[0].mxu0
      %v2597 = vadd.f32 0.0, %v2596
      %v2598 = vpop.f32.mrb[0].mxu0
      %2599 = vmatprep.mubr.bf16.mxu0 0
      %2600 = vmatmul.mubr.bf16.gmra.mrb[0].mxu0 %v1202
      %v2601 = vpop.f32.mrb[0].mxu0
      %v2602 = vadd.f32 0.0, %v2601
      %v2603 = vpop.f32.mrb[0].mxu0
      %v2604 = vpop.f32.mrb[0].mxu0
      %v2605 = vadd.f32 0.0, %v2604
      %v2606 = vpop.f32.mrb[0].mxu0
      %2607 = vmatprep.mubr.bf16.mxu0 0
      %2608 = vmatmul.mubr.bf16.gmra.mrb[0].mxu0 %v1203
      %v2609 = vpop.f32.mrb[0].mxu0
      %v2610 = vadd.f32 0.0, %v2609
      %v2611 = vpop.f32.mrb[0].mxu0
      %v2612 = vpop.f32.mrb[0].mxu0
      %v2613 = vadd.f32 0.0, %v2612
      %v2614 = vpop.f32.mrb[0].mxu0
      %2615 = vmatprep.mubr.bf16.mxu0 0
      %2616 = vmatmul.mubr.bf16.gmra.mrb[0].mxu0 %v2413
      %v2617 = vpop.f32.mrb[0].mxu0
      %v2618 = vadd.f32 0.0, %v2617
      %v2619 = vpop.f32.mrb[0].mxu0
      %v2620 = vpop.f32.mrb[0].mxu0
      %v2621 = vadd.f32 0.0, %v2620
      %v2622 = vpop.f32.mrb[0].mxu0
      %2623 = vdwg.mxu0
      %v2624 = vadd.f32 %v2362, %v2498
      %v2625 = vadd.f32 %v2363, %v2501
      %v2626 = vadd.f32 %v2364, %v2506
      %v2627 = vadd.f32 %v2365, %v2509
      %v2628 = vadd.f32 %v2366, %v2514
      %v2629 = vadd.f32 %v2367, %v2517
      %v2630 = vadd.f32 %v2368, %v2522
      %v2631 = vadd.f32 %v2369, %v2525
      %v2632 = vadd.f32 %v2370, %v2530
      %v2633 = vadd.f32 %v2371, %v2533
      %v2634 = vadd.f32 %v2372, %v2538
      %v2635 = vadd.f32 %v2373, %v2541
      %v2636 = vadd.f32 %v2374, %v2546
      %v2637 = vadd.f32 %v2375, %v2549
      %v2638 = vadd.f32 %v2376, %v2554
      %v2639 = vadd.f32 %v2377, %v2557
      %v2640 = vadd.f32 %v2378, %v2562
      %v2641 = vadd.f32 %v2379, %v2565
      %v2642 = vadd.f32 %v2380, %v2570
      %v2643 = vadd.f32 %v2381, %v2573
      %v2644 = vadd.f32 %v2382, %v2578
      %v2645 = vadd.f32 %v2383, %v2581
      %v2646 = vadd.f32 %v2384, %v2586
      %v2647 = vadd.f32 %v2385, %v2589
      %v2648 = vadd.f32 %v2386, %v2594
      %v2649 = vadd.f32 %v2387, %v2597
      %v2650 = vadd.f32 %v2388, %v2602
      %v2651 = vadd.f32 %v2389, %v2605
      %v2652 = vadd.f32 %v2390, %v2610
      %v2653 = vadd.f32 %v2391, %v2613
      %v2654 = vadd.f32 %v2392, %v2618
      %v2655 = vadd.f32 %v2393, %v2621
      %2656 = vst [vmem:[%s204] sm:$0xff] %v2624
      %2657 = vst [vmem:[%s204 + $0x8] sm:$0xff] %v2625
      %2658 = vst [vmem:[%s204 + $0x10] sm:$0xff] %v2626
      %2659 = vst [vmem:[%s204 + $0x18] sm:$0xff] %v2627
      %2660 = vst [vmem:[%s204 + $0x20] sm:$0xff] %v2628
      %2661 = vst [vmem:[%s204 + $0x28] sm:$0xff] %v2629
      %2662 = vst [vmem:[%s204 + $0x30] sm:$0xff] %v2630
      %2663 = vst [vmem:[%s204 + $0x38] sm:$0xff] %v2631
      %2664 = vst [vmem:[%s204 + $0x40] sm:$0xff] %v2632
      %2665 = vst [vmem:[%s204 + $0x48] sm:$0xff] %v2633
      %2666 = vst [vmem:[%s204 + $0x50] sm:$0xff] %v2634
      %2667 = vst [vmem:[%s204 + $0x58] sm:$0xff] %v2635
      %2668 = vst [vmem:[%s204 + $0x60] sm:$0xff] %v2636
      %2669 = vst [vmem:[%s204 + $0x68] sm:$0xff] %v2637
      %2670 = vst [vmem:[%s204 + $0x70] sm:$0xff] %v2638
      %2671 = vst [vmem:[%s204 + $0x78] sm:$0xff] %v2639
      %2672 = vst [vmem:[%s204 + $0x80] sm:$0xff] %v2640
      %2673 = vst [vmem:[%s204 + $0x88] sm:$0xff] %v2641
      %2674 = vst [vmem:[%s204 + $0x90] sm:$0xff] %v2642
      %2675 = vst [vmem:[%s204 + $0x98] sm:$0xff] %v2643
      %2676 = vst [vmem:[%s204 + $0xa0] sm:$0xff] %v2644
      %2677 = vst [vmem:[%s204 + $0xa8] sm:$0xff] %v2645
      %2678 = vst [vmem:[%s204 + $0xb0] sm:$0xff] %v2646
      %2679 = vst [vmem:[%s204 + $0xb8] sm:$0xff] %v2647
      %2680 = vst [vmem:[%s204 + $0xc0] sm:$0xff] %v2648
      %2681 = vst [vmem:[%s204 + $0xc8] sm:$0xff] %v2649
      %2682 = vst [vmem:[%s204 + $0xd0] sm:$0xff] %v2650
      %2683 = vst [vmem:[%s204 + $0xd8] sm:$0xff] %v2651
      %2684 = vst [vmem:[%s204 + $0xe0] sm:$0xff] %v2652
      %2685 = vst [vmem:[%s204 + $0xe8] sm:$0xff] %v2653
      %2686 = vst [vmem:[%s204 + $0xf0] sm:$0xff] %v2654
      %2687 = vst [vmem:[%s204 + $0xf8] sm:$0xff] %v2655
      %v2689 = vrot.slane %v258, 5
      %v2690 = vrot.slane %v2689, 4
      %v2691 = vrot.slane %v259, 5
      %v2692 = vsel %vm1511, %v2690, %v2691
      %v2693 = vrot.slane %v2691, 4
      %v2694 = vrot.slane %v260, 5
      %v2695 = vsel %vm1511, %v2693, %v2694
      %v2696 = vld [vmem:[%s204] sm:$0xff]
      %v2697 = vld [vmem:[%s204 + $0x8] sm:$0xff]
      %v2698 = vld [vmem:[%s204 + $0x10] sm:$0xff]
      %v2699 = vld [vmem:[%s204 + $0x18] sm:$0xff]
      %v2700 = vld [vmem:[%s204 + $0x20] sm:$0xff]
      %v2701 = vld [vmem:[%s204 + $0x28] sm:$0xff]
      %v2702 = vld [vmem:[%s204 + $0x30] sm:$0xff]
      %v2703 = vld [vmem:[%s204 + $0x38] sm:$0xff]
      %v2704 = vld [vmem:[%s204 + $0x40] sm:$0xff]
      %v2705 = vld [vmem:[%s204 + $0x48] sm:$0xff]
      %v2706 = vld [vmem:[%s204 + $0x50] sm:$0xff]
      %v2707 = vld [vmem:[%s204 + $0x58] sm:$0xff]
      %v2708 = vld [vmem:[%s204 + $0x60] sm:$0xff]
      %v2709 = vld [vmem:[%s204 + $0x68] sm:$0xff]
      %v2710 = vld [vmem:[%s204 + $0x70] sm:$0xff]
      %v2711 = vld [vmem:[%s204 + $0x78] sm:$0xff]
      %v2712 = vld [vmem:[%s204 + $0x80] sm:$0xff]
      %v2713 = vld [vmem:[%s204 + $0x88] sm:$0xff]
      %v2714 = vld [vmem:[%s204 + $0x90] sm:$0xff]
      %v2715 = vld [vmem:[%s204 + $0x98] sm:$0xff]
      %v2716 = vld [vmem:[%s204 + $0xa0] sm:$0xff]
      %v2717 = vld [vmem:[%s204 + $0xa8] sm:$0xff]
      %v2718 = vld [vmem:[%s204 + $0xb0] sm:$0xff]
      %v2719 = vld [vmem:[%s204 + $0xb8] sm:$0xff]
      %v2720 = vld [vmem:[%s204 + $0xc0] sm:$0xff]
      %v2721 = vld [vmem:[%s204 + $0xc8] sm:$0xff]
      %v2722 = vld [vmem:[%s204 + $0xd0] sm:$0xff]
      %v2723 = vld [vmem:[%s204 + $0xd8] sm:$0xff]
      %v2724 = vld [vmem:[%s204 + $0xe0] sm:$0xff]
      %v2725 = vld [vmem:[%s204 + $0xe8] sm:$0xff]
      %v2726 = vld [vmem:[%s204 + $0xf0] sm:$0xff]
      %v2727 = vld [vmem:[%s204 + $0xf8] sm:$0xff]
      %s2728 = scalar_lea.vmem %s1, 320
      %v2729 = vld [vmem:[%s2728] sm:$0xf]
      %v2730 = vld [vmem:[%s2728 + $0x4] sm:$0xf]
      %v2731 = vld [vmem:[%s2728 + $0x8] sm:$0xf]
      %v2732 = vld [vmem:[%s2728 + $0xc] sm:$0xf]
      %v2733 = vld [vmem:[%s2728 + $0x10] sm:$0xf]
      %v2734 = vld [vmem:[%s2728 + $0x14] sm:$0xf]
      %v2735 = vld [vmem:[%s2728 + $0x18] sm:$0xf]
      %v2736 = vld [vmem:[%s2728 + $0x1c] sm:$0xf]
      %v2737 = vld [vmem:[%s2728 + $0x20] sm:$0xf]
      %v2738 = vld [vmem:[%s2728 + $0x24] sm:$0xf]
      %v2739 = vld [vmem:[%s2728 + $0x28] sm:$0xf]
      %v2740 = vld [vmem:[%s2728 + $0x2c] sm:$0xf]
      %v2741 = vld [vmem:[%s2728 + $0x30] sm:$0xf]
      %v2742 = vld [vmem:[%s2728 + $0x34] sm:$0xf]
      %v2743 = vld [vmem:[%s2728 + $0x38] sm:$0xf]
      %v2744 = vld [vmem:[%s2728 + $0x3c] sm:$0xf]
      %v2745 = vunpack.c.l.b16 %v2692
      %v2746 = vunpack.c.l.b16 %v2695
      %v2747 = vpack.c.b16 %v2746, %v2745
      %v2765 = vunpack.c.l.b16 %v2729
      %v2766 = vunpack.c.l.b16 %v2730
      %v2767 = vunpack.c.l.b16 %v2731
      %v2768 = vunpack.c.l.b16 %v2732
      %v2769 = vunpack.c.l.b16 %v2733
      %v2770 = vunpack.c.l.b16 %v2734
      %v2771 = vunpack.c.l.b16 %v2735
      %v2772 = vunpack.c.l.b16 %v2736
      %v2773 = vunpack.c.l.b16 %v2737
      %v2774 = vunpack.c.l.b16 %v2738
      %v2775 = vunpack.c.l.b16 %v2739
      %v2776 = vunpack.c.l.b16 %v2740
      %v2777 = vunpack.c.l.b16 %v2741
      %v2778 = vunpack.c.l.b16 %v2742
      %v2779 = vunpack.c.l.b16 %v2743
      %v2780 = vunpack.c.l.b16 %v2744
      %v2781 = vpack.c.b16 %v2766, %v2765
      %v2782 = vpack.c.b16 %v2768, %v2767
      %v2783 = vpack.c.b16 %v2770, %v2769
      %v2784 = vpack.c.b16 %v2772, %v2771
      %v2785 = vpack.c.b16 %v2774, %v2773
      %v2786 = vpack.c.b16 %v2776, %v2775
      %v2787 = vpack.c.b16 %v2778, %v2777
      %v2788 = vpack.c.b16 %v2780, %v2779
      %2797 = vmatprep.subr.bf16.mxu0 0
      %2798 = vmatpush1.bf16.msra.mxu0 %v2781
      %2799 = vmatprep.subr.bf16.mxu0 0
      %2800 = vmatpush1.bf16.msra.mxu0 %v2782
      %2801 = vmatprep.subr.bf16.mxu0 0
      %2802 = vmatpush1.bf16.msra.mxu0 %v2783
      %2803 = vmatprep.subr.bf16.mxu0 0
      %2804 = vmatpush1.bf16.msra.mxu0 %v2784
      %2805 = vmatprep.subr.bf16.mxu0 0
      %2806 = vmatpush1.bf16.msra.mxu0 %v2785
      %2807 = vmatprep.subr.bf16.mxu0 0
      %2808 = vmatpush1.bf16.msra.mxu0 %v2786
      %2809 = vmatprep.subr.bf16.mxu0 0
      %2810 = vmatpush1.bf16.msra.mxu0 %v2787
      %2811 = vmatprep.subr.bf16.mxu0 0
      %2812 = vmatpush1.bf16.msra.mxu0 %v2788
      %2813 = vmatprep.subr.bf16.mxu0 0
      %2814 = vmatpush1.bf16.msra.mxu0 0
      %2815 = vmatprep.subr.bf16.mxu0 0
      %2816 = vmatpush1.bf16.msra.mxu0 0
      %2817 = vmatprep.subr.bf16.mxu0 0
      %2818 = vmatpush1.bf16.msra.mxu0 0
      %2819 = vmatprep.subr.bf16.mxu0 0
      %2820 = vmatpush1.bf16.msra.mxu0 0
      %2821 = vmatprep.subr.bf16.mxu0 0
      %2822 = vmatpush1.bf16.msra.mxu0 0
      %2823 = vmatprep.subr.bf16.mxu0 0
      %2824 = vmatpush1.bf16.msra.mxu0 0
      %2825 = vmatprep.subr.bf16.mxu0 0
      %2826 = vmatpush1.bf16.msra.mxu0 0
      %2827 = vmatprep.subr.bf16.mxu0 0
      %2828 = vmatpush1.bf16.msra.mxu0 0
      %2829 = vmatprep.mubr.bf16.mxu0 0
      %2830 = vmatmul.mubr.bf16.gmra.mrb[0].mxu0 %v1706
      %v2831 = vpop.f32.mrb[0].mxu0
      %v2832 = vadd.f32 0.0, %v2831
      %v2833 = vpop.f32.mrb[0].mxu0
      %v2834 = vpop.f32.mrb[0].mxu0
      %v2835 = vadd.f32 0.0, %v2834
      %v2836 = vpop.f32.mrb[0].mxu0
      %2837 = vmatprep.mubr.bf16.mxu0 0
      %2838 = vmatmul.mubr.bf16.gmra.mrb[0].mxu0 %v1707
      %v2839 = vpop.f32.mrb[0].mxu0
      %v2840 = vadd.f32 0.0, %v2839
      %v2841 = vpop.f32.mrb[0].mxu0
      %v2842 = vpop.f32.mrb[0].mxu0
      %v2843 = vadd.f32 0.0, %v2842
      %v2844 = vpop.f32.mrb[0].mxu0
      %2845 = vmatprep.mubr.bf16.mxu0 0
      %2846 = vmatmul.mubr.bf16.gmra.mrb[0].mxu0 %v1708
      %v2847 = vpop.f32.mrb[0].mxu0
      %v2848 = vadd.f32 0.0, %v2847
      %v2849 = vpop.f32.mrb[0].mxu0
      %v2850 = vpop.f32.mrb[0].mxu0
      %v2851 = vadd.f32 0.0, %v2850
      %v2852 = vpop.f32.mrb[0].mxu0
      %2853 = vmatprep.mubr.bf16.mxu0 0
      %2854 = vmatmul.mubr.bf16.gmra.mrb[0].mxu0 %v1709
      %v2855 = vpop.f32.mrb[0].mxu0
      %v2856 = vadd.f32 0.0, %v2855
      %v2857 = vpop.f32.mrb[0].mxu0
      %v2858 = vpop.f32.mrb[0].mxu0
      %v2859 = vadd.f32 0.0, %v2858
      %v2860 = vpop.f32.mrb[0].mxu0
      %2861 = vmatprep.mubr.bf16.mxu0 0
      %2862 = vmatmul.mubr.bf16.gmra.mrb[0].mxu0 %v1710
      %v2863 = vpop.f32.mrb[0].mxu0
      %v2864 = vadd.f32 0.0, %v2863
      %v2865 = vpop.f32.mrb[0].mxu0
      %v2866 = vpop.f32.mrb[0].mxu0
      %v2867 = vadd.f32 0.0, %v2866
      %v2868 = vpop.f32.mrb[0].mxu0
      %2869 = vmatprep.mubr.bf16.mxu0 0
      %2870 = vmatmul.mubr.bf16.gmra.mrb[0].mxu0 %v1711
      %v2871 = vpop.f32.mrb[0].mxu0
      %v2872 = vadd.f32 0.0, %v2871
      %v2873 = vpop.f32.mrb[0].mxu0
      %v2874 = vpop.f32.mrb[0].mxu0
      %v2875 = vadd.f32 0.0, %v2874
      %v2876 = vpop.f32.mrb[0].mxu0
      %2877 = vmatprep.mubr.bf16.mxu0 0
      %2878 = vmatmul.mubr.bf16.gmra.mrb[0].mxu0 %v1712
      %v2879 = vpop.f32.mrb[0].mxu0
      %v2880 = vadd.f32 0.0, %v2879
      %v2881 = vpop.f32.mrb[0].mxu0
      %v2882 = vpop.f32.mrb[0].mxu0
      %v2883 = vadd.f32 0.0, %v2882
      %v2884 = vpop.f32.mrb[0].mxu0
      %2885 = vmatprep.mubr.bf16.mxu0 0
      %2886 = vmatmul.mubr.bf16.gmra.mrb[0].mxu0 %v1713
      %v2887 = vpop.f32.mrb[0].mxu0
      %v2888 = vadd.f32 0.0, %v2887
      %v2889 = vpop.f32.mrb[0].mxu0
      %v2890 = vpop.f32.mrb[0].mxu0
      %v2891 = vadd.f32 0.0, %v2890
      %v2892 = vpop.f32.mrb[0].mxu0
      %2893 = vmatprep.mubr.bf16.mxu0 0
      %2894 = vmatmul.mubr.bf16.gmra.mrb[0].mxu0 %v1714
      %v2895 = vpop.f32.mrb[0].mxu0
      %v2896 = vadd.f32 0.0, %v2895
      %v2897 = vpop.f32.mrb[0].mxu0
      %v2898 = vpop.f32.mrb[0].mxu0
      %v2899 = vadd.f32 0.0, %v2898
      %v2900 = vpop.f32.mrb[0].mxu0
      %2901 = vmatprep.mubr.bf16.mxu0 0
      %2902 = vmatmul.mubr.bf16.gmra.mrb[0].mxu0 %v1715
      %v2903 = vpop.f32.mrb[0].mxu0
      %v2904 = vadd.f32 0.0, %v2903
      %v2905 = vpop.f32.mrb[0].mxu0
      %v2906 = vpop.f32.mrb[0].mxu0
      %v2907 = vadd.f32 0.0, %v2906
      %v2908 = vpop.f32.mrb[0].mxu0
      %2909 = vmatprep.mubr.bf16.mxu0 0
      %2910 = vmatmul.mubr.bf16.gmra.mrb[0].mxu0 %v1716
      %v2911 = vpop.f32.mrb[0].mxu0
      %v2912 = vadd.f32 0.0, %v2911
      %v2913 = vpop.f32.mrb[0].mxu0
      %v2914 = vpop.f32.mrb[0].mxu0
      %v2915 = vadd.f32 0.0, %v2914
      %v2916 = vpop.f32.mrb[0].mxu0
      %2917 = vmatprep.mubr.bf16.mxu0 0
      %2918 = vmatmul.mubr.bf16.gmra.mrb[0].mxu0 %v1717
      %v2919 = vpop.f32.mrb[0].mxu0
      %v2920 = vadd.f32 0.0, %v2919
      %v2921 = vpop.f32.mrb[0].mxu0
      %v2922 = vpop.f32.mrb[0].mxu0
      %v2923 = vadd.f32 0.0, %v2922
      %v2924 = vpop.f32.mrb[0].mxu0
      %2925 = vmatprep.mubr.bf16.mxu0 0
      %2926 = vmatmul.mubr.bf16.gmra.mrb[0].mxu0 %v1718
      %v2927 = vpop.f32.mrb[0].mxu0
      %v2928 = vadd.f32 0.0, %v2927
      %v2929 = vpop.f32.mrb[0].mxu0
      %v2930 = vpop.f32.mrb[0].mxu0
      %v2931 = vadd.f32 0.0, %v2930
      %v2932 = vpop.f32.mrb[0].mxu0
      %2933 = vmatprep.mubr.bf16.mxu0 0
      %2934 = vmatmul.mubr.bf16.gmra.mrb[0].mxu0 %v1719
      %v2935 = vpop.f32.mrb[0].mxu0
      %v2936 = vadd.f32 0.0, %v2935
      %v2937 = vpop.f32.mrb[0].mxu0
      %v2938 = vpop.f32.mrb[0].mxu0
      %v2939 = vadd.f32 0.0, %v2938
      %v2940 = vpop.f32.mrb[0].mxu0
      %2941 = vmatprep.mubr.bf16.mxu0 0
      %2942 = vmatmul.mubr.bf16.gmra.mrb[0].mxu0 %v1720
      %v2943 = vpop.f32.mrb[0].mxu0
      %v2944 = vadd.f32 0.0, %v2943
      %v2945 = vpop.f32.mrb[0].mxu0
      %v2946 = vpop.f32.mrb[0].mxu0
      %v2947 = vadd.f32 0.0, %v2946
      %v2948 = vpop.f32.mrb[0].mxu0
      %2949 = vmatprep.mubr.bf16.mxu0 0
      %2950 = vmatmul.mubr.bf16.gmra.mrb[0].mxu0 %v2747
      %v2951 = vpop.f32.mrb[0].mxu0
      %v2952 = vadd.f32 0.0, %v2951
      %v2953 = vpop.f32.mrb[0].mxu0
      %v2954 = vpop.f32.mrb[0].mxu0
      %v2955 = vadd.f32 0.0, %v2954
      %v2956 = vpop.f32.mrb[0].mxu0
      %2957 = vdwg.mxu0
      %v2958 = vadd.f32 %v2696, %v2832
      %v2959 = vadd.f32 %v2697, %v2835
      %v2960 = vadd.f32 %v2698, %v2840
      %v2961 = vadd.f32 %v2699, %v2843
      %v2962 = vadd.f32 %v2700, %v2848
      %v2963 = vadd.f32 %v2701, %v2851
      %v2964 = vadd.f32 %v2702, %v2856
      %v2965 = vadd.f32 %v2703, %v2859
      %v2966 = vadd.f32 %v2704, %v2864
      %v2967 = vadd.f32 %v2705, %v2867
      %v2968 = vadd.f32 %v2706, %v2872
      %v2969 = vadd.f32 %v2707, %v2875
      %v2970 = vadd.f32 %v2708, %v2880
      %v2971 = vadd.f32 %v2709, %v2883
      %v2972 = vadd.f32 %v2710, %v2888
      %v2973 = vadd.f32 %v2711, %v2891
      %v2974 = vadd.f32 %v2712, %v2896
      %v2975 = vadd.f32 %v2713, %v2899
      %v2976 = vadd.f32 %v2714, %v2904
      %v2977 = vadd.f32 %v2715, %v2907
      %v2978 = vadd.f32 %v2716, %v2912
      %v2979 = vadd.f32 %v2717, %v2915
      %v2980 = vadd.f32 %v2718, %v2920
      %v2981 = vadd.f32 %v2719, %v2923
      %v2982 = vadd.f32 %v2720, %v2928
      %v2983 = vadd.f32 %v2721, %v2931
      %v2984 = vadd.f32 %v2722, %v2936
      %v2985 = vadd.f32 %v2723, %v2939
      %v2986 = vadd.f32 %v2724, %v2944
      %v2987 = vadd.f32 %v2725, %v2947
      %v2988 = vadd.f32 %v2726, %v2952
      %v2989 = vadd.f32 %v2727, %v2955
      %2990 = vst [vmem:[%s204] sm:$0xff] %v2958
      %2991 = vst [vmem:[%s204 + $0x8] sm:$0xff] %v2959
      %2992 = vst [vmem:[%s204 + $0x10] sm:$0xff] %v2960
      %2993 = vst [vmem:[%s204 + $0x18] sm:$0xff] %v2961
      %2994 = vst [vmem:[%s204 + $0x20] sm:$0xff] %v2962
      %2995 = vst [vmem:[%s204 + $0x28] sm:$0xff] %v2963
      %2996 = vst [vmem:[%s204 + $0x30] sm:$0xff] %v2964
      %2997 = vst [vmem:[%s204 + $0x38] sm:$0xff] %v2965
      %2998 = vst [vmem:[%s204 + $0x40] sm:$0xff] %v2966
      %2999 = vst [vmem:[%s204 + $0x48] sm:$0xff] %v2967
      %3000 = vst [vmem:[%s204 + $0x50] sm:$0xff] %v2968
      %3001 = vst [vmem:[%s204 + $0x58] sm:$0xff] %v2969
      %3002 = vst [vmem:[%s204 + $0x60] sm:$0xff] %v2970
      %3003 = vst [vmem:[%s204 + $0x68] sm:$0xff] %v2971
      %3004 = vst [vmem:[%s204 + $0x70] sm:$0xff] %v2972
      %3005 = vst [vmem:[%s204 + $0x78] sm:$0xff] %v2973
      %3006 = vst [vmem:[%s204 + $0x80] sm:$0xff] %v2974
      %3007 = vst [vmem:[%s204 + $0x88] sm:$0xff] %v2975
      %3008 = vst [vmem:[%s204 + $0x90] sm:$0xff] %v2976
      %3009 = vst [vmem:[%s204 + $0x98] sm:$0xff] %v2977
      %3010 = vst [vmem:[%s204 + $0xa0] sm:$0xff] %v2978
      %3011 = vst [vmem:[%s204 + $0xa8] sm:$0xff] %v2979
      %3012 = vst [vmem:[%s204 + $0xb0] sm:$0xff] %v2980
      %3013 = vst [vmem:[%s204 + $0xb8] sm:$0xff] %v2981
      %3014 = vst [vmem:[%s204 + $0xc0] sm:$0xff] %v2982
      %3015 = vst [vmem:[%s204 + $0xc8] sm:$0xff] %v2983
      %3016 = vst [vmem:[%s204 + $0xd0] sm:$0xff] %v2984
      %3017 = vst [vmem:[%s204 + $0xd8] sm:$0xff] %v2985
      %3018 = vst [vmem:[%s204 + $0xe0] sm:$0xff] %v2986
      %3019 = vst [vmem:[%s204 + $0xe8] sm:$0xff] %v2987
      %3020 = vst [vmem:[%s204 + $0xf0] sm:$0xff] %v2988
      %3021 = vst [vmem:[%s204 + $0xf8] sm:$0xff] %v2989
      %v3022 = vld [vmem:[%s204] sm:$0xff]
      %v3023 = vld [vmem:[%s204 + $0x8] sm:$0xff]
      %v3024 = vld [vmem:[%s204 + $0x10] sm:$0xff]
      %v3025 = vld [vmem:[%s204 + $0x18] sm:$0xff]
      %v3026 = vld [vmem:[%s204 + $0x20] sm:$0xff]
      %v3027 = vld [vmem:[%s204 + $0x28] sm:$0xff]
      %v3028 = vld [vmem:[%s204 + $0x30] sm:$0xff]
      %v3029 = vld [vmem:[%s204 + $0x38] sm:$0xff]
      %v3030 = vld [vmem:[%s204 + $0x40] sm:$0xff]
      %v3031 = vld [vmem:[%s204 + $0x48] sm:$0xff]
      %v3032 = vld [vmem:[%s204 + $0x50] sm:$0xff]
      %v3033 = vld [vmem:[%s204 + $0x58] sm:$0xff]
      %v3034 = vld [vmem:[%s204 + $0x60] sm:$0xff]
      %v3035 = vld [vmem:[%s204 + $0x68] sm:$0xff]
      %v3036 = vld [vmem:[%s204 + $0x70] sm:$0xff]
      %v3037 = vld [vmem:[%s204 + $0x78] sm:$0xff]
      %v3038 = vld [vmem:[%s204 + $0x80] sm:$0xff]
      %v3039 = vld [vmem:[%s204 + $0x88] sm:$0xff]
      %v3040 = vld [vmem:[%s204 + $0x90] sm:$0xff]
      %v3041 = vld [vmem:[%s204 + $0x98] sm:$0xff]
      %v3042 = vld [vmem:[%s204 + $0xa0] sm:$0xff]
      %v3043 = vld [vmem:[%s204 + $0xa8] sm:$0xff]
      %v3044 = vld [vmem:[%s204 + $0xb0] sm:$0xff]
      %v3045 = vld [vmem:[%s204 + $0xb8] sm:$0xff]
      %v3046 = vld [vmem:[%s204 + $0xc0] sm:$0xff]
      %v3047 = vld [vmem:[%s204 + $0xc8] sm:$0xff]
      %v3048 = vld [vmem:[%s204 + $0xd0] sm:$0xff]
      %v3049 = vld [vmem:[%s204 + $0xd8] sm:$0xff]
      %v3050 = vld [vmem:[%s204 + $0xe0] sm:$0xff]
      %v3051 = vld [vmem:[%s204 + $0xe8] sm:$0xff]
      %v3052 = vld [vmem:[%s204 + $0xf0] sm:$0xff]
      %v3053 = vld [vmem:[%s204 + $0xf8] sm:$0xff]
      %s3054 = scalar_lea.vmem %s1, 384
      %v3055 = vld [vmem:[%s3054] sm:$0xf]
      %v3056 = vld [vmem:[%s3054 + $0x4] sm:$0xf]
      %v3057 = vld [vmem:[%s3054 + $0x8] sm:$0xf]
      %v3058 = vld [vmem:[%s3054 + $0xc] sm:$0xf]
      %v3059 = vld [vmem:[%s3054 + $0x10] sm:$0xf]
      %v3060 = vld [vmem:[%s3054 + $0x14] sm:$0xf]
      %v3061 = vld [vmem:[%s3054 + $0x18] sm:$0xf]
      %v3062 = vld [vmem:[%s3054 + $0x1c] sm:$0xf]
      %v3063 = vld [vmem:[%s3054 + $0x20] sm:$0xf]
      %v3064 = vld [vmem:[%s3054 + $0x24] sm:$0xf]
      %v3065 = vld [vmem:[%s3054 + $0x28] sm:$0xf]
      %v3066 = vld [vmem:[%s3054 + $0x2c] sm:$0xf]
      %v3067 = vld [vmem:[%s3054 + $0x30] sm:$0xf]
      %v3068 = vld [vmem:[%s3054 + $0x34] sm:$0xf]
      %v3069 = vld [vmem:[%s3054 + $0x38] sm:$0xf]
      %v3070 = vld [vmem:[%s3054 + $0x3c] sm:$0xf]
      %v3073 = vunpack.c.l.b16 %v261
      %v3074 = vunpack.c.l.b16 %v262
      %v3075 = vpack.c.b16 %v3074, %v3073
      %v3093 = vunpack.c.l.b16 %v3055
      %v3094 = vunpack.c.l.b16 %v3056
      %v3095 = vunpack.c.l.b16 %v3057
      %v3096 = vunpack.c.l.b16 %v3058
      %v3097 = vunpack.c.l.b16 %v3059
      %v3098 = vunpack.c.l.b16 %v3060
      %v3099 = vunpack.c.l.b16 %v3061
      %v3100 = vunpack.c.l.b16 %v3062
      %v3101 = vunpack.c.l.b16 %v3063
      %v3102 = vunpack.c.l.b16 %v3064
      %v3103 = vunpack.c.l.b16 %v3065
      %v3104 = vunpack.c.l.b16 %v3066
      %v3105 = vunpack.c.l.b16 %v3067
      %v3106 = vunpack.c.l.b16 %v3068
      %v3107 = vunpack.c.l.b16 %v3069
      %v3108 = vunpack.c.l.b16 %v3070
      %v3109 = vpack.c.b16 %v3094, %v3093
      %v3110 = vpack.c.b16 %v3096, %v3095
      %v3111 = vpack.c.b16 %v3098, %v3097
      %v3112 = vpack.c.b16 %v3100, %v3099
      %v3113 = vpack.c.b16 %v3102, %v3101
      %v3114 = vpack.c.b16 %v3104, %v3103
      %v3115 = vpack.c.b16 %v3106, %v3105
      %v3116 = vpack.c.b16 %v3108, %v3107
      %3125 = vmatprep.subr.bf16.mxu0 0
      %3126 = vmatpush1.bf16.msra.mxu0 %v3109
      %3127 = vmatprep.subr.bf16.mxu0 0
      %3128 = vmatpush1.bf16.msra.mxu0 %v3110
      %3129 = vmatprep.subr.bf16.mxu0 0
      %3130 = vmatpush1.bf16.msra.mxu0 %v3111
      %3131 = vmatprep.subr.bf16.mxu0 0
      %3132 = vmatpush1.bf16.msra.mxu0 %v3112
      %3133 = vmatprep.subr.bf16.mxu0 0
      %3134 = vmatpush1.bf16.msra.mxu0 %v3113
      %3135 = vmatprep.subr.bf16.mxu0 0
      %3136 = vmatpush1.bf16.msra.mxu0 %v3114
      %3137 = vmatprep.subr.bf16.mxu0 0
      %3138 = vmatpush1.bf16.msra.mxu0 %v3115
      %3139 = vmatprep.subr.bf16.mxu0 0
      %3140 = vmatpush1.bf16.msra.mxu0 %v3116
      %3141 = vmatprep.subr.bf16.mxu0 0
      %3142 = vmatpush1.bf16.msra.mxu0 0
      %3143 = vmatprep.subr.bf16.mxu0 0
      %3144 = vmatpush1.bf16.msra.mxu0 0
      %3145 = vmatprep.subr.bf16.mxu0 0
      %3146 = vmatpush1.bf16.msra.mxu0 0
      %3147 = vmatprep.subr.bf16.mxu0 0
      %3148 = vmatpush1.bf16.msra.mxu0 0
      %3149 = vmatprep.subr.bf16.mxu0 0
      %3150 = vmatpush1.bf16.msra.mxu0 0
      %3151 = vmatprep.subr.bf16.mxu0 0
      %3152 = vmatpush1.bf16.msra.mxu0 0
      %3153 = vmatprep.subr.bf16.mxu0 0
      %3154 = vmatpush1.bf16.msra.mxu0 0
      %3155 = vmatprep.subr.bf16.mxu0 0
      %3156 = vmatpush1.bf16.msra.mxu0 0
      %3157 = vmatprep.mubr.bf16.mxu0 0
      %3158 = vmatmul.mubr.bf16.gmra.mrb[0].mxu0 %v417
      %v3159 = vpop.f32.mrb[0].mxu0
      %v3160 = vadd.f32 0.0, %v3159
      %v3161 = vpop.f32.mrb[0].mxu0
      %v3162 = vpop.f32.mrb[0].mxu0
      %v3163 = vadd.f32 0.0, %v3162
      %v3164 = vpop.f32.mrb[0].mxu0
      %3165 = vmatprep.mubr.bf16.mxu0 0
      %3166 = vmatmul.mubr.bf16.gmra.mrb[0].mxu0 %v418
      %v3167 = vpop.f32.mrb[0].mxu0
      %v3168 = vadd.f32 0.0, %v3167
      %v3169 = vpop.f32.mrb[0].mxu0
      %v3170 = vpop.f32.mrb[0].mxu0
      %v3171 = vadd.f32 0.0, %v3170
      %v3172 = vpop.f32.mrb[0].mxu0
      %3173 = vmatprep.mubr.bf16.mxu0 0
      %3174 = vmatmul.mubr.bf16.gmra.mrb[0].mxu0 %v419
      %v3175 = vpop.f32.mrb[0].mxu0
      %v3176 = vadd.f32 0.0, %v3175
      %v3177 = vpop.f32.mrb[0].mxu0
      %v3178 = vpop.f32.mrb[0].mxu0
      %v3179 = vadd.f32 0.0, %v3178
      %v3180 = vpop.f32.mrb[0].mxu0
      %3181 = vmatprep.mubr.bf16.mxu0 0
      %3182 = vmatmul.mubr.bf16.gmra.mrb[0].mxu0 %v420
      %v3183 = vpop.f32.mrb[0].mxu0
      %v3184 = vadd.f32 0.0, %v3183
      %v3185 = vpop.f32.mrb[0].mxu0
      %v3186 = vpop.f32.mrb[0].mxu0
      %v3187 = vadd.f32 0.0, %v3186
      %v3188 = vpop.f32.mrb[0].mxu0
      %3189 = vmatprep.mubr.bf16.mxu0 0
      %3190 = vmatmul.mubr.bf16.gmra.mrb[0].mxu0 %v421
      %v3191 = vpop.f32.mrb[0].mxu0
      %v3192 = vadd.f32 0.0, %v3191
      %v3193 = vpop.f32.mrb[0].mxu0
      %v3194 = vpop.f32.mrb[0].mxu0
      %v3195 = vadd.f32 0.0, %v3194
      %v3196 = vpop.f32.mrb[0].mxu0
      %3197 = vmatprep.mubr.bf16.mxu0 0
      %3198 = vmatmul.mubr.bf16.gmra.mrb[0].mxu0 %v422
      %v3199 = vpop.f32.mrb[0].mxu0
      %v3200 = vadd.f32 0.0, %v3199
      %v3201 = vpop.f32.mrb[0].mxu0
      %v3202 = vpop.f32.mrb[0].mxu0
      %v3203 = vadd.f32 0.0, %v3202
      %v3204 = vpop.f32.mrb[0].mxu0
      %3205 = vmatprep.mubr.bf16.mxu0 0
      %3206 = vmatmul.mubr.bf16.gmra.mrb[0].mxu0 %v423
      %v3207 = vpop.f32.mrb[0].mxu0
      %v3208 = vadd.f32 0.0, %v3207
      %v3209 = vpop.f32.mrb[0].mxu0
      %v3210 = vpop.f32.mrb[0].mxu0
      %v3211 = vadd.f32 0.0, %v3210
      %v3212 = vpop.f32.mrb[0].mxu0
      %3213 = vmatprep.mubr.bf16.mxu0 0
      %3214 = vmatmul.mubr.bf16.gmra.mrb[0].mxu0 %v424
      %v3215 = vpop.f32.mrb[0].mxu0
      %v3216 = vadd.f32 0.0, %v3215
      %v3217 = vpop.f32.mrb[0].mxu0
      %v3218 = vpop.f32.mrb[0].mxu0
      %v3219 = vadd.f32 0.0, %v3218
      %v3220 = vpop.f32.mrb[0].mxu0
      %3221 = vmatprep.mubr.bf16.mxu0 0
      %3222 = vmatmul.mubr.bf16.gmra.mrb[0].mxu0 %v425
      %v3223 = vpop.f32.mrb[0].mxu0
      %v3224 = vadd.f32 0.0, %v3223
      %v3225 = vpop.f32.mrb[0].mxu0
      %v3226 = vpop.f32.mrb[0].mxu0
      %v3227 = vadd.f32 0.0, %v3226
      %v3228 = vpop.f32.mrb[0].mxu0
      %3229 = vmatprep.mubr.bf16.mxu0 0
      %3230 = vmatmul.mubr.bf16.gmra.mrb[0].mxu0 %v426
      %v3231 = vpop.f32.mrb[0].mxu0
      %v3232 = vadd.f32 0.0, %v3231
      %v3233 = vpop.f32.mrb[0].mxu0
      %v3234 = vpop.f32.mrb[0].mxu0
      %v3235 = vadd.f32 0.0, %v3234
      %v3236 = vpop.f32.mrb[0].mxu0
      %3237 = vmatprep.mubr.bf16.mxu0 0
      %3238 = vmatmul.mubr.bf16.gmra.mrb[0].mxu0 %v427
      %v3239 = vpop.f32.mrb[0].mxu0
      %v3240 = vadd.f32 0.0, %v3239
      %v3241 = vpop.f32.mrb[0].mxu0
      %v3242 = vpop.f32.mrb[0].mxu0
      %v3243 = vadd.f32 0.0, %v3242
      %v3244 = vpop.f32.mrb[0].mxu0
      %3245 = vmatprep.mubr.bf16.mxu0 0
      %3246 = vmatmul.mubr.bf16.gmra.mrb[0].mxu0 %v428
      %v3247 = vpop.f32.mrb[0].mxu0
      %v3248 = vadd.f32 0.0, %v3247
      %v3249 = vpop.f32.mrb[0].mxu0
      %v3250 = vpop.f32.mrb[0].mxu0
      %v3251 = vadd.f32 0.0, %v3250
      %v3252 = vpop.f32.mrb[0].mxu0
      %3253 = vmatprep.mubr.bf16.mxu0 0
      %3254 = vmatmul.mubr.bf16.gmra.mrb[0].mxu0 %v429
      %v3255 = vpop.f32.mrb[0].mxu0
      %v3256 = vadd.f32 0.0, %v3255
      %v3257 = vpop.f32.mrb[0].mxu0
      %v3258 = vpop.f32.mrb[0].mxu0
      %v3259 = vadd.f32 0.0, %v3258
      %v3260 = vpop.f32.mrb[0].mxu0
      %3261 = vmatprep.mubr.bf16.mxu0 0
      %3262 = vmatmul.mubr.bf16.gmra.mrb[0].mxu0 %v430
      %v3263 = vpop.f32.mrb[0].mxu0
      %v3264 = vadd.f32 0.0, %v3263
      %v3265 = vpop.f32.mrb[0].mxu0
      %v3266 = vpop.f32.mrb[0].mxu0
      %v3267 = vadd.f32 0.0, %v3266
      %v3268 = vpop.f32.mrb[0].mxu0
      %3269 = vmatprep.mubr.bf16.mxu0 0
      %3270 = vmatmul.mubr.bf16.gmra.mrb[0].mxu0 %v2063
      %v3271 = vpop.f32.mrb[0].mxu0
      %v3272 = vadd.f32 0.0, %v3271
      %v3273 = vpop.f32.mrb[0].mxu0
      %v3274 = vpop.f32.mrb[0].mxu0
      %v3275 = vadd.f32 0.0, %v3274
      %v3276 = vpop.f32.mrb[0].mxu0
      %3277 = vmatprep.mubr.bf16.mxu0 0
      %3278 = vmatmul.mubr.bf16.gmra.mrb[0].mxu0 %v3075
      %v3279 = vpop.f32.mrb[0].mxu0
      %v3280 = vadd.f32 0.0, %v3279
      %v3281 = vpop.f32.mrb[0].mxu0
      %v3282 = vpop.f32.mrb[0].mxu0
      %v3283 = vadd.f32 0.0, %v3282
      %v3284 = vpop.f32.mrb[0].mxu0
      %3285 = vdwg.mxu0
      %v3286 = vadd.f32 %v3022, %v3160
      %v3287 = vadd.f32 %v3023, %v3163
      %v3288 = vadd.f32 %v3024, %v3168
      %v3289 = vadd.f32 %v3025, %v3171
      %v3290 = vadd.f32 %v3026, %v3176
      %v3291 = vadd.f32 %v3027, %v3179
      %v3292 = vadd.f32 %v3028, %v3184
      %v3293 = vadd.f32 %v3029, %v3187
      %v3294 = vadd.f32 %v3030, %v3192
      %v3295 = vadd.f32 %v3031, %v3195
      %v3296 = vadd.f32 %v3032, %v3200
      %v3297 = vadd.f32 %v3033, %v3203
      %v3298 = vadd.f32 %v3034, %v3208
      %v3299 = vadd.f32 %v3035, %v3211
      %v3300 = vadd.f32 %v3036, %v3216
      %v3301 = vadd.f32 %v3037, %v3219
      %v3302 = vadd.f32 %v3038, %v3224
      %v3303 = vadd.f32 %v3039, %v3227
      %v3304 = vadd.f32 %v3040, %v3232
      %v3305 = vadd.f32 %v3041, %v3235
      %v3306 = vadd.f32 %v3042, %v3240
      %v3307 = vadd.f32 %v3043, %v3243
      %v3308 = vadd.f32 %v3044, %v3248
      %v3309 = vadd.f32 %v3045, %v3251
      %v3310 = vadd.f32 %v3046, %v3256
      %v3311 = vadd.f32 %v3047, %v3259
      %v3312 = vadd.f32 %v3048, %v3264
      %v3313 = vadd.f32 %v3049, %v3267
      %v3314 = vadd.f32 %v3050, %v3272
      %v3315 = vadd.f32 %v3051, %v3275
      %v3316 = vadd.f32 %v3052, %v3280
      %v3317 = vadd.f32 %v3053, %v3283
      %3318 = vst [vmem:[%s204] sm:$0xff] %v3286
      %3319 = vst [vmem:[%s204 + $0x8] sm:$0xff] %v3287
      %3320 = vst [vmem:[%s204 + $0x10] sm:$0xff] %v3288
      %3321 = vst [vmem:[%s204 + $0x18] sm:$0xff] %v3289
      %3322 = vst [vmem:[%s204 + $0x20] sm:$0xff] %v3290
      %3323 = vst [vmem:[%s204 + $0x28] sm:$0xff] %v3291
      %3324 = vst [vmem:[%s204 + $0x30] sm:$0xff] %v3292
      %3325 = vst [vmem:[%s204 + $0x38] sm:$0xff] %v3293
      %3326 = vst [vmem:[%s204 + $0x40] sm:$0xff] %v3294
      %3327 = vst [vmem:[%s204 + $0x48] sm:$0xff] %v3295
      %3328 = vst [vmem:[%s204 + $0x50] sm:$0xff] %v3296
      %3329 = vst [vmem:[%s204 + $0x58] sm:$0xff] %v3297
      %3330 = vst [vmem:[%s204 + $0x60] sm:$0xff] %v3298
      %3331 = vst [vmem:[%s204 + $0x68] sm:$0xff] %v3299
      %3332 = vst [vmem:[%s204 + $0x70] sm:$0xff] %v3300
      %3333 = vst [vmem:[%s204 + $0x78] sm:$0xff] %v3301
      %3334 = vst [vmem:[%s204 + $0x80] sm:$0xff] %v3302
      %3335 = vst [vmem:[%s204 + $0x88] sm:$0xff] %v3303
      %3336 = vst [vmem:[%s204 + $0x90] sm:$0xff] %v3304
      %3337 = vst [vmem:[%s204 + $0x98] sm:$0xff] %v3305
      %3338 = vst [vmem:[%s204 + $0xa0] sm:$0xff] %v3306
      %3339 = vst [vmem:[%s204 + $0xa8] sm:$0xff] %v3307
      %3340 = vst [vmem:[%s204 + $0xb0] sm:$0xff] %v3308
      %3341 = vst [vmem:[%s204 + $0xb8] sm:$0xff] %v3309
      %3342 = vst [vmem:[%s204 + $0xc0] sm:$0xff] %v3310
      %3343 = vst [vmem:[%s204 + $0xc8] sm:$0xff] %v3311
      %3344 = vst [vmem:[%s204 + $0xd0] sm:$0xff] %v3312
      %3345 = vst [vmem:[%s204 + $0xd8] sm:$0xff] %v3313
      %3346 = vst [vmem:[%s204 + $0xe0] sm:$0xff] %v3314
      %3347 = vst [vmem:[%s204 + $0xe8] sm:$0xff] %v3315
      %3348 = vst [vmem:[%s204 + $0xf0] sm:$0xff] %v3316
      %3349 = vst [vmem:[%s204 + $0xf8] sm:$0xff] %v3317
      %v3351 = vshrl.u32 %v261, 16
      %v3353 = vrot.slane %v3351, 4
      %v3354 = vshll.u32 %v261, 16
      %v3356 = vrot.slane %v3354, 5
      %v3357 = vor.u32 %v3353, %v3356
      %v3358 = vrot.slane %v3357, 4
      %v3360 = vshll.u32 %v262, 16
      %v3362 = vrot.slane %v3360, 5
      %v3363 = vsel %vm722, %v3358, %v3362
      %v3364 = vshrl.u32 %v262, 16
      %v3366 = vrot.slane %v3364, 4
      %v3367 = vor.u32 %v3366, %v3362
      %v3368 = vrot.slane %v3367, 4
      %v3370 = vshll.u32 %v263, 16
      %v3372 = vrot.slane %v3370, 5
      %v3373 = vsel %vm722, %v3368, %v3372
      %v3374 = vld [vmem:[%s204] sm:$0xff]
      %v3375 = vld [vmem:[%s204 + $0x8] sm:$0xff]
      %v3376 = vld [vmem:[%s204 + $0x10] sm:$0xff]
      %v3377 = vld [vmem:[%s204 + $0x18] sm:$0xff]
      %v3378 = vld [vmem:[%s204 + $0x20] sm:$0xff]
      %v3379 = vld [vmem:[%s204 + $0x28] sm:$0xff]
      %v3380 = vld [vmem:[%s204 + $0x30] sm:$0xff]
      %v3381 = vld [vmem:[%s204 + $0x38] sm:$0xff]
      %v3382 = vld [vmem:[%s204 + $0x40] sm:$0xff]
      %v3383 = vld [vmem:[%s204 + $0x48] sm:$0xff]
      %v3384 = vld [vmem:[%s204 + $0x50] sm:$0xff]
      %v3385 = vld [vmem:[%s204 + $0x58] sm:$0xff]
      %v3386 = vld [vmem:[%s204 + $0x60] sm:$0xff]
      %v3387 = vld [vmem:[%s204 + $0x68] sm:$0xff]
      %v3388 = vld [vmem:[%s204 + $0x70] sm:$0xff]
      %v3389 = vld [vmem:[%s204 + $0x78] sm:$0xff]
      %v3390 = vld [vmem:[%s204 + $0x80] sm:$0xff]
      %v3391 = vld [vmem:[%s204 + $0x88] sm:$0xff]
      %v3392 = vld [vmem:[%s204 + $0x90] sm:$0xff]
      %v3393 = vld [vmem:[%s204 + $0x98] sm:$0xff]
      %v3394 = vld [vmem:[%s204 + $0xa0] sm:$0xff]
      %v3395 = vld [vmem:[%s204 + $0xa8] sm:$0xff]
      %v3396 = vld [vmem:[%s204 + $0xb0] sm:$0xff]
      %v3397 = vld [vmem:[%s204 + $0xb8] sm:$0xff]
      %v3398 = vld [vmem:[%s204 + $0xc0] sm:$0xff]
      %v3399 = vld [vmem:[%s204 + $0xc8] sm:$0xff]
      %v3400 = vld [vmem:[%s204 + $0xd0] sm:$0xff]
      %v3401 = vld [vmem:[%s204 + $0xd8] sm:$0xff]
      %v3402 = vld [vmem:[%s204 + $0xe0] sm:$0xff]
      %v3403 = vld [vmem:[%s204 + $0xe8] sm:$0xff]
      %v3404 = vld [vmem:[%s204 + $0xf0] sm:$0xff]
      %v3405 = vld [vmem:[%s204 + $0xf8] sm:$0xff]
      %s3406 = scalar_lea.vmem %s1, 448
      %v3407 = vld [vmem:[%s3406] sm:$0xf]
      %v3408 = vld [vmem:[%s3406 + $0x4] sm:$0xf]
      %v3409 = vld [vmem:[%s3406 + $0x8] sm:$0xf]
      %v3410 = vld [vmem:[%s3406 + $0xc] sm:$0xf]
      %v3411 = vld [vmem:[%s3406 + $0x10] sm:$0xf]
      %v3412 = vld [vmem:[%s3406 + $0x14] sm:$0xf]
      %v3413 = vld [vmem:[%s3406 + $0x18] sm:$0xf]
      %v3414 = vld [vmem:[%s3406 + $0x1c] sm:$0xf]
      %v3415 = vld [vmem:[%s3406 + $0x20] sm:$0xf]
      %v3416 = vld [vmem:[%s3406 + $0x24] sm:$0xf]
      %v3417 = vld [vmem:[%s3406 + $0x28] sm:$0xf]
      %v3418 = vld [vmem:[%s3406 + $0x2c] sm:$0xf]
      %v3419 = vld [vmem:[%s3406 + $0x30] sm:$0xf]
      %v3420 = vld [vmem:[%s3406 + $0x34] sm:$0xf]
      %v3421 = vld [vmem:[%s3406 + $0x38] sm:$0xf]
      %v3422 = vld [vmem:[%s3406 + $0x3c] sm:$0xf]
      %v3423 = vunpack.c.l.b16 %v3363
      %v3424 = vunpack.c.l.b16 %v3373
      %v3425 = vpack.c.b16 %v3424, %v3423
      %v3443 = vunpack.c.l.b16 %v3407
      %v3444 = vunpack.c.l.b16 %v3408
      %v3445 = vunpack.c.l.b16 %v3409
      %v3446 = vunpack.c.l.b16 %v3410
      %v3447 = vunpack.c.l.b16 %v3411
      %v3448 = vunpack.c.l.b16 %v3412
      %v3449 = vunpack.c.l.b16 %v3413
      %v3450 = vunpack.c.l.b16 %v3414
      %v3451 = vunpack.c.l.b16 %v3415
      %v3452 = vunpack.c.l.b16 %v3416
      %v3453 = vunpack.c.l.b16 %v3417
      %v3454 = vunpack.c.l.b16 %v3418
      %v3455 = vunpack.c.l.b16 %v3419
      %v3456 = vunpack.c.l.b16 %v3420
      %v3457 = vunpack.c.l.b16 %v3421
      %v3458 = vunpack.c.l.b16 %v3422
      %v3459 = vpack.c.b16 %v3444, %v3443
      %v3460 = vpack.c.b16 %v3446, %v3445
      %v3461 = vpack.c.b16 %v3448, %v3447
      %v3462 = vpack.c.b16 %v3450, %v3449
      %v3463 = vpack.c.b16 %v3452, %v3451
      %v3464 = vpack.c.b16 %v3454, %v3453
      %v3465 = vpack.c.b16 %v3456, %v3455
      %v3466 = vpack.c.b16 %v3458, %v3457
      %3475 = vmatprep.subr.bf16.mxu0 0
      %3476 = vmatpush1.bf16.msra.mxu0 %v3459
      %3477 = vmatprep.subr.bf16.mxu0 0
      %3478 = vmatpush1.bf16.msra.mxu0 %v3460
      %3479 = vmatprep.subr.bf16.mxu0 0
      %3480 = vmatpush1.bf16.msra.mxu0 %v3461
      %3481 = vmatprep.subr.bf16.mxu0 0
      %3482 = vmatpush1.bf16.msra.mxu0 %v3462
      %3483 = vmatprep.subr.bf16.mxu0 0
      %3484 = vmatpush1.bf16.msra.mxu0 %v3463
      %3485 = vmatprep.subr.bf16.mxu0 0
      %3486 = vmatpush1.bf16.msra.mxu0 %v3464
      %3487 = vmatprep.subr.bf16.mxu0 0
      %3488 = vmatpush1.bf16.msra.mxu0 %v3465
      %3489 = vmatprep.subr.bf16.mxu0 0
      %3490 = vmatpush1.bf16.msra.mxu0 %v3466
      %3491 = vmatprep.subr.bf16.mxu0 0
      %3492 = vmatpush1.bf16.msra.mxu0 0
      %3493 = vmatprep.subr.bf16.mxu0 0
      %3494 = vmatpush1.bf16.msra.mxu0 0
      %3495 = vmatprep.subr.bf16.mxu0 0
      %3496 = vmatpush1.bf16.msra.mxu0 0
      %3497 = vmatprep.subr.bf16.mxu0 0
      %3498 = vmatpush1.bf16.msra.mxu0 0
      %3499 = vmatprep.subr.bf16.mxu0 0
      %3500 = vmatpush1.bf16.msra.mxu0 0
      %3501 = vmatprep.subr.bf16.mxu0 0
      %3502 = vmatpush1.bf16.msra.mxu0 0
      %3503 = vmatprep.subr.bf16.mxu0 0
      %3504 = vmatpush1.bf16.msra.mxu0 0
      %3505 = vmatprep.subr.bf16.mxu0 0
      %3506 = vmatpush1.bf16.msra.mxu0 0
      %3507 = vmatprep.mubr.bf16.mxu0 0
      %3508 = vmatmul.mubr.bf16.gmra.mrb[0].mxu0 %v1190
      %v3509 = vpop.f32.mrb[0].mxu0
      %v3510 = vadd.f32 0.0, %v3509
      %v3511 = vpop.f32.mrb[0].mxu0
      %v3512 = vpop.f32.mrb[0].mxu0
      %v3513 = vadd.f32 0.0, %v3512
      %v3514 = vpop.f32.mrb[0].mxu0
      %3515 = vmatprep.mubr.bf16.mxu0 0
      %3516 = vmatmul.mubr.bf16.gmra.mrb[0].mxu0 %v1191
      %v3517 = vpop.f32.mrb[0].mxu0
      %v3518 = vadd.f32 0.0, %v3517
      %v3519 = vpop.f32.mrb[0].mxu0
      %v3520 = vpop.f32.mrb[0].mxu0
      %v3521 = vadd.f32 0.0, %v3520
      %v3522 = vpop.f32.mrb[0].mxu0
      %3523 = vmatprep.mubr.bf16.mxu0 0
      %3524 = vmatmul.mubr.bf16.gmra.mrb[0].mxu0 %v1192
      %v3525 = vpop.f32.mrb[0].mxu0
      %v3526 = vadd.f32 0.0, %v3525
      %v3527 = vpop.f32.mrb[0].mxu0
      %v3528 = vpop.f32.mrb[0].mxu0
      %v3529 = vadd.f32 0.0, %v3528
      %v3530 = vpop.f32.mrb[0].mxu0
      %3531 = vmatprep.mubr.bf16.mxu0 0
      %3532 = vmatmul.mubr.bf16.gmra.mrb[0].mxu0 %v1193
      %v3533 = vpop.f32.mrb[0].mxu0
      %v3534 = vadd.f32 0.0, %v3533
      %v3535 = vpop.f32.mrb[0].mxu0
      %v3536 = vpop.f32.mrb[0].mxu0
      %v3537 = vadd.f32 0.0, %v3536
      %v3538 = vpop.f32.mrb[0].mxu0
      %3539 = vmatprep.mubr.bf16.mxu0 0
      %3540 = vmatmul.mubr.bf16.gmra.mrb[0].mxu0 %v1194
      %v3541 = vpop.f32.mrb[0].mxu0
      %v3542 = vadd.f32 0.0, %v3541
      %v3543 = vpop.f32.mrb[0].mxu0
      %v3544 = vpop.f32.mrb[0].mxu0
      %v3545 = vadd.f32 0.0, %v3544
      %v3546 = vpop.f32.mrb[0].mxu0
      %3547 = vmatprep.mubr.bf16.mxu0 0
      %3548 = vmatmul.mubr.bf16.gmra.mrb[0].mxu0 %v1195
      %v3549 = vpop.f32.mrb[0].mxu0
      %v3550 = vadd.f32 0.0, %v3549
      %v3551 = vpop.f32.mrb[0].mxu0
      %v3552 = vpop.f32.mrb[0].mxu0
      %v3553 = vadd.f32 0.0, %v3552
      %v3554 = vpop.f32.mrb[0].mxu0
      %3555 = vmatprep.mubr.bf16.mxu0 0
      %3556 = vmatmul.mubr.bf16.gmra.mrb[0].mxu0 %v1196
      %v3557 = vpop.f32.mrb[0].mxu0
      %v3558 = vadd.f32 0.0, %v3557
      %v3559 = vpop.f32.mrb[0].mxu0
      %v3560 = vpop.f32.mrb[0].mxu0
      %v3561 = vadd.f32 0.0, %v3560
      %v3562 = vpop.f32.mrb[0].mxu0
      %3563 = vmatprep.mubr.bf16.mxu0 0
      %3564 = vmatmul.mubr.bf16.gmra.mrb[0].mxu0 %v1197
      %v3565 = vpop.f32.mrb[0].mxu0
      %v3566 = vadd.f32 0.0, %v3565
      %v3567 = vpop.f32.mrb[0].mxu0
      %v3568 = vpop.f32.mrb[0].mxu0
      %v3569 = vadd.f32 0.0, %v3568
      %v3570 = vpop.f32.mrb[0].mxu0
      %3571 = vmatprep.mubr.bf16.mxu0 0
      %3572 = vmatmul.mubr.bf16.gmra.mrb[0].mxu0 %v1198
      %v3573 = vpop.f32.mrb[0].mxu0
      %v3574 = vadd.f32 0.0, %v3573
      %v3575 = vpop.f32.mrb[0].mxu0
      %v3576 = vpop.f32.mrb[0].mxu0
      %v3577 = vadd.f32 0.0, %v3576
      %v3578 = vpop.f32.mrb[0].mxu0
      %3579 = vmatprep.mubr.bf16.mxu0 0
      %3580 = vmatmul.mubr.bf16.gmra.mrb[0].mxu0 %v1199
      %v3581 = vpop.f32.mrb[0].mxu0
      %v3582 = vadd.f32 0.0, %v3581
      %v3583 = vpop.f32.mrb[0].mxu0
      %v3584 = vpop.f32.mrb[0].mxu0
      %v3585 = vadd.f32 0.0, %v3584
      %v3586 = vpop.f32.mrb[0].mxu0
      %3587 = vmatprep.mubr.bf16.mxu0 0
      %3588 = vmatmul.mubr.bf16.gmra.mrb[0].mxu0 %v1200
      %v3589 = vpop.f32.mrb[0].mxu0
      %v3590 = vadd.f32 0.0, %v3589
      %v3591 = vpop.f32.mrb[0].mxu0
      %v3592 = vpop.f32.mrb[0].mxu0
      %v3593 = vadd.f32 0.0, %v3592
      %v3594 = vpop.f32.mrb[0].mxu0
      %3595 = vmatprep.mubr.bf16.mxu0 0
      %3596 = vmatmul.mubr.bf16.gmra.mrb[0].mxu0 %v1201
      %v3597 = vpop.f32.mrb[0].mxu0
      %v3598 = vadd.f32 0.0, %v3597
      %v3599 = vpop.f32.mrb[0].mxu0
      %v3600 = vpop.f32.mrb[0].mxu0
      %v3601 = vadd.f32 0.0, %v3600
      %v3602 = vpop.f32.mrb[0].mxu0
      %3603 = vmatprep.mubr.bf16.mxu0 0
      %3604 = vmatmul.mubr.bf16.gmra.mrb[0].mxu0 %v1202
      %v3605 = vpop.f32.mrb[0].mxu0
      %v3606 = vadd.f32 0.0, %v3605
      %v3607 = vpop.f32.mrb[0].mxu0
      %v3608 = vpop.f32.mrb[0].mxu0
      %v3609 = vadd.f32 0.0, %v3608
      %v3610 = vpop.f32.mrb[0].mxu0
      %3611 = vmatprep.mubr.bf16.mxu0 0
      %3612 = vmatmul.mubr.bf16.gmra.mrb[0].mxu0 %v1203
      %v3613 = vpop.f32.mrb[0].mxu0
      %v3614 = vadd.f32 0.0, %v3613
      %v3615 = vpop.f32.mrb[0].mxu0
      %v3616 = vpop.f32.mrb[0].mxu0
      %v3617 = vadd.f32 0.0, %v3616
      %v3618 = vpop.f32.mrb[0].mxu0
      %3619 = vmatprep.mubr.bf16.mxu0 0
      %3620 = vmatmul.mubr.bf16.gmra.mrb[0].mxu0 %v2413
      %v3621 = vpop.f32.mrb[0].mxu0
      %v3622 = vadd.f32 0.0, %v3621
      %v3623 = vpop.f32.mrb[0].mxu0
      %v3624 = vpop.f32.mrb[0].mxu0
      %v3625 = vadd.f32 0.0, %v3624
      %v3626 = vpop.f32.mrb[0].mxu0
      %3627 = vmatprep.mubr.bf16.mxu0 0
      %3628 = vmatmul.mubr.bf16.gmra.mrb[0].mxu0 %v3425
      %v3629 = vpop.f32.mrb[0].mxu0
      %v3630 = vadd.f32 0.0, %v3629
      %v3631 = vpop.f32.mrb[0].mxu0
      %v3632 = vpop.f32.mrb[0].mxu0
      %v3633 = vadd.f32 0.0, %v3632
      %v3634 = vpop.f32.mrb[0].mxu0
      %3635 = vdwg.mxu0
      %v3636 = vadd.f32 %v3374, %v3510
      %v3637 = vadd.f32 %v3375, %v3513
      %v3638 = vadd.f32 %v3376, %v3518
      %v3639 = vadd.f32 %v3377, %v3521
      %v3640 = vadd.f32 %v3378, %v3526
      %v3641 = vadd.f32 %v3379, %v3529
      %v3642 = vadd.f32 %v3380, %v3534
      %v3643 = vadd.f32 %v3381, %v3537
      %v3644 = vadd.f32 %v3382, %v3542
      %v3645 = vadd.f32 %v3383, %v3545
      %v3646 = vadd.f32 %v3384, %v3550
      %v3647 = vadd.f32 %v3385, %v3553
      %v3648 = vadd.f32 %v3386, %v3558
      %v3649 = vadd.f32 %v3387, %v3561
      %v3650 = vadd.f32 %v3388, %v3566
      %v3651 = vadd.f32 %v3389, %v3569
      %v3652 = vadd.f32 %v3390, %v3574
      %v3653 = vadd.f32 %v3391, %v3577
      %v3654 = vadd.f32 %v3392, %v3582
      %v3655 = vadd.f32 %v3393, %v3585
      %v3656 = vadd.f32 %v3394, %v3590
      %v3657 = vadd.f32 %v3395, %v3593
      %v3658 = vadd.f32 %v3396, %v3598
      %v3659 = vadd.f32 %v3397, %v3601
      %v3660 = vadd.f32 %v3398, %v3606
      %v3661 = vadd.f32 %v3399, %v3609
      %v3662 = vadd.f32 %v3400, %v3614
      %v3663 = vadd.f32 %v3401, %v3617
      %v3664 = vadd.f32 %v3402, %v3622
      %v3665 = vadd.f32 %v3403, %v3625
      %v3666 = vadd.f32 %v3404, %v3630
      %v3667 = vadd.f32 %v3405, %v3633
      %3668 = vst [vmem:[%s204] sm:$0xff] %v3636
      %3669 = vst [vmem:[%s204 + $0x8] sm:$0xff] %v3637
      %3670 = vst [vmem:[%s204 + $0x10] sm:$0xff] %v3638
      %3671 = vst [vmem:[%s204 + $0x18] sm:$0xff] %v3639
      %3672 = vst [vmem:[%s204 + $0x20] sm:$0xff] %v3640
      %3673 = vst [vmem:[%s204 + $0x28] sm:$0xff] %v3641
      %3674 = vst [vmem:[%s204 + $0x30] sm:$0xff] %v3642
      %3675 = vst [vmem:[%s204 + $0x38] sm:$0xff] %v3643
      %3676 = vst [vmem:[%s204 + $0x40] sm:$0xff] %v3644
      %3677 = vst [vmem:[%s204 + $0x48] sm:$0xff] %v3645
      %3678 = vst [vmem:[%s204 + $0x50] sm:$0xff] %v3646
      %3679 = vst [vmem:[%s204 + $0x58] sm:$0xff] %v3647
      %3680 = vst [vmem:[%s204 + $0x60] sm:$0xff] %v3648
      %3681 = vst [vmem:[%s204 + $0x68] sm:$0xff] %v3649
      %3682 = vst [vmem:[%s204 + $0x70] sm:$0xff] %v3650
      %3683 = vst [vmem:[%s204 + $0x78] sm:$0xff] %v3651
      %3684 = vst [vmem:[%s204 + $0x80] sm:$0xff] %v3652
      %3685 = vst [vmem:[%s204 + $0x88] sm:$0xff] %v3653
      %3686 = vst [vmem:[%s204 + $0x90] sm:$0xff] %v3654
      %3687 = vst [vmem:[%s204 + $0x98] sm:$0xff] %v3655
      %3688 = vst [vmem:[%s204 + $0xa0] sm:$0xff] %v3656
      %3689 = vst [vmem:[%s204 + $0xa8] sm:$0xff] %v3657
      %3690 = vst [vmem:[%s204 + $0xb0] sm:$0xff] %v3658
      %3691 = vst [vmem:[%s204 + $0xb8] sm:$0xff] %v3659
      %3692 = vst [vmem:[%s204 + $0xc0] sm:$0xff] %v3660
      %3693 = vst [vmem:[%s204 + $0xc8] sm:$0xff] %v3661
      %3694 = vst [vmem:[%s204 + $0xd0] sm:$0xff] %v3662
      %3695 = vst [vmem:[%s204 + $0xd8] sm:$0xff] %v3663
      %3696 = vst [vmem:[%s204 + $0xe0] sm:$0xff] %v3664
      %3697 = vst [vmem:[%s204 + $0xe8] sm:$0xff] %v3665
      %3698 = vst [vmem:[%s204 + $0xf0] sm:$0xff] %v3666
      %3699 = vst [vmem:[%s204 + $0xf8] sm:$0xff] %v3667
      %v3701 = vrot.slane %v261, 5
      %v3702 = vrot.slane %v3701, 4
      %v3703 = vrot.slane %v262, 5
      %v3704 = vsel %vm1511, %v3702, %v3703
      %v3705 = vrot.slane %v3703, 4
      %v3706 = vrot.slane %v263, 5
      %v3707 = vsel %vm1511, %v3705, %v3706
      %v3708 = vld [vmem:[%s204] sm:$0xff]
      %v3709 = vld [vmem:[%s204 + $0x8] sm:$0xff]
      %v3710 = vld [vmem:[%s204 + $0x10] sm:$0xff]
      %v3711 = vld [vmem:[%s204 + $0x18] sm:$0xff]
      %v3712 = vld [vmem:[%s204 + $0x20] sm:$0xff]
      %v3713 = vld [vmem:[%s204 + $0x28] sm:$0xff]
      %v3714 = vld [vmem:[%s204 + $0x30] sm:$0xff]
      %v3715 = vld [vmem:[%s204 + $0x38] sm:$0xff]
      %v3716 = vld [vmem:[%s204 + $0x40] sm:$0xff]
      %v3717 = vld [vmem:[%s204 + $0x48] sm:$0xff]
      %v3718 = vld [vmem:[%s204 + $0x50] sm:$0xff]
      %v3719 = vld [vmem:[%s204 + $0x58] sm:$0xff]
      %v3720 = vld [vmem:[%s204 + $0x60] sm:$0xff]
      %v3721 = vld [vmem:[%s204 + $0x68] sm:$0xff]
      %v3722 = vld [vmem:[%s204 + $0x70] sm:$0xff]
      %v3723 = vld [vmem:[%s204 + $0x78] sm:$0xff]
      %v3724 = vld [vmem:[%s204 + $0x80] sm:$0xff]
      %v3725 = vld [vmem:[%s204 + $0x88] sm:$0xff]
      %v3726 = vld [vmem:[%s204 + $0x90] sm:$0xff]
      %v3727 = vld [vmem:[%s204 + $0x98] sm:$0xff]
      %v3728 = vld [vmem:[%s204 + $0xa0] sm:$0xff]
      %v3729 = vld [vmem:[%s204 + $0xa8] sm:$0xff]
      %v3730 = vld [vmem:[%s204 + $0xb0] sm:$0xff]
      %v3731 = vld [vmem:[%s204 + $0xb8] sm:$0xff]
      %v3732 = vld [vmem:[%s204 + $0xc0] sm:$0xff]
      %v3733 = vld [vmem:[%s204 + $0xc8] sm:$0xff]
      %v3734 = vld [vmem:[%s204 + $0xd0] sm:$0xff]
      %v3735 = vld [vmem:[%s204 + $0xd8] sm:$0xff]
      %v3736 = vld [vmem:[%s204 + $0xe0] sm:$0xff]
      %v3737 = vld [vmem:[%s204 + $0xe8] sm:$0xff]
      %v3738 = vld [vmem:[%s204 + $0xf0] sm:$0xff]
      %v3739 = vld [vmem:[%s204 + $0xf8] sm:$0xff]
      %s3740 = scalar_lea.vmem %s1, 512
      %v3741 = vld [vmem:[%s3740] sm:$0xf]
      %v3742 = vld [vmem:[%s3740 + $0x4] sm:$0xf]
      %v3743 = vld [vmem:[%s3740 + $0x8] sm:$0xf]
      %v3744 = vld [vmem:[%s3740 + $0xc] sm:$0xf]
      %v3745 = vld [vmem:[%s3740 + $0x10] sm:$0xf]
      %v3746 = vld [vmem:[%s3740 + $0x14] sm:$0xf]
      %v3747 = vld [vmem:[%s3740 + $0x18] sm:$0xf]
      %v3748 = vld [vmem:[%s3740 + $0x1c] sm:$0xf]
      %v3749 = vld [vmem:[%s3740 + $0x20] sm:$0xf]
      %v3750 = vld [vmem:[%s3740 + $0x24] sm:$0xf]
      %v3751 = vld [vmem:[%s3740 + $0x28] sm:$0xf]
      %v3752 = vld [vmem:[%s3740 + $0x2c] sm:$0xf]
      %v3753 = vld [vmem:[%s3740 + $0x30] sm:$0xf]
      %v3754 = vld [vmem:[%s3740 + $0x34] sm:$0xf]
      %v3755 = vld [vmem:[%s3740 + $0x38] sm:$0xf]
      %v3756 = vld [vmem:[%s3740 + $0x3c] sm:$0xf]
      %v3757 = vunpack.c.l.b16 %v3704
      %v3758 = vunpack.c.l.b16 %v3707
      %v3759 = vpack.c.b16 %v3758, %v3757
      %v3777 = vunpack.c.l.b16 %v3741
      %v3778 = vunpack.c.l.b16 %v3742
      %v3779 = vunpack.c.l.b16 %v3743
      %v3780 = vunpack.c.l.b16 %v3744
      %v3781 = vunpack.c.l.b16 %v3745
      %v3782 = vunpack.c.l.b16 %v3746
      %v3783 = vunpack.c.l.b16 %v3747
      %v3784 = vunpack.c.l.b16 %v3748
      %v3785 = vunpack.c.l.b16 %v3749
      %v3786 = vunpack.c.l.b16 %v3750
      %v3787 = vunpack.c.l.b16 %v3751
      %v3788 = vunpack.c.l.b16 %v3752
      %v3789 = vunpack.c.l.b16 %v3753
      %v3790 = vunpack.c.l.b16 %v3754
      %v3791 = vunpack.c.l.b16 %v3755
      %v3792 = vunpack.c.l.b16 %v3756
      %v3793 = vpack.c.b16 %v3778, %v3777
      %v3794 = vpack.c.b16 %v3780, %v3779
      %v3795 = vpack.c.b16 %v3782, %v3781
      %v3796 = vpack.c.b16 %v3784, %v3783
      %v3797 = vpack.c.b16 %v3786, %v3785
      %v3798 = vpack.c.b16 %v3788, %v3787
      %v3799 = vpack.c.b16 %v3790, %v3789
      %v3800 = vpack.c.b16 %v3792, %v3791
      %3809 = vmatprep.subr.bf16.mxu0 0
      %3810 = vmatpush1.bf16.msra.mxu0 %v3793
      %3811 = vmatprep.subr.bf16.mxu0 0
      %3812 = vmatpush1.bf16.msra.mxu0 %v3794
      %3813 = vmatprep.subr.bf16.mxu0 0
      %3814 = vmatpush1.bf16.msra.mxu0 %v3795
      %3815 = vmatprep.subr.bf16.mxu0 0
      %3816 = vmatpush1.bf16.msra.mxu0 %v3796
      %3817 = vmatprep.subr.bf16.mxu0 0
      %3818 = vmatpush1.bf16.msra.mxu0 %v3797
      %3819 = vmatprep.subr.bf16.mxu0 0
      %3820 = vmatpush1.bf16.msra.mxu0 %v3798
      %3821 = vmatprep.subr.bf16.mxu0 0
      %3822 = vmatpush1.bf16.msra.mxu0 %v3799
      %3823 = vmatprep.subr.bf16.mxu0 0
      %3824 = vmatpush1.bf16.msra.mxu0 %v3800
      %3825 = vmatprep.subr.bf16.mxu0 0
      %3826 = vmatpush1.bf16.msra.mxu0 0
      %3827 = vmatprep.subr.bf16.mxu0 0
      %3828 = vmatpush1.bf16.msra.mxu0 0
      %3829 = vmatprep.subr.bf16.mxu0 0
      %3830 = vmatpush1.bf16.msra.mxu0 0
      %3831 = vmatprep.subr.bf16.mxu0 0
      %3832 = vmatpush1.bf16.msra.mxu0 0
      %3833 = vmatprep.subr.bf16.mxu0 0
      %3834 = vmatpush1.bf16.msra.mxu0 0
      %3835 = vmatprep.subr.bf16.mxu0 0
      %3836 = vmatpush1.bf16.msra.mxu0 0
      %3837 = vmatprep.subr.bf16.mxu0 0
      %3838 = vmatpush1.bf16.msra.mxu0 0
      %3839 = vmatprep.subr.bf16.mxu0 0
      %3840 = vmatpush1.bf16.msra.mxu0 0
      %3841 = vmatprep.mubr.bf16.mxu0 0
      %3842 = vmatmul.mubr.bf16.gmra.mrb[0].mxu0 %v1707
      %v3843 = vpop.f32.mrb[0].mxu0
      %v3844 = vadd.f32 0.0, %v3843
      %v3845 = vpop.f32.mrb[0].mxu0
      %v3846 = vpop.f32.mrb[0].mxu0
      %v3847 = vadd.f32 0.0, %v3846
      %v3848 = vpop.f32.mrb[0].mxu0
      %3849 = vmatprep.mubr.bf16.mxu0 0
      %3850 = vmatmul.mubr.bf16.gmra.mrb[0].mxu0 %v1708
      %v3851 = vpop.f32.mrb[0].mxu0
      %v3852 = vadd.f32 0.0, %v3851
      %v3853 = vpop.f32.mrb[0].mxu0
      %v3854 = vpop.f32.mrb[0].mxu0
      %v3855 = vadd.f32 0.0, %v3854
      %v3856 = vpop.f32.mrb[0].mxu0
      %3857 = vmatprep.mubr.bf16.mxu0 0
      %3858 = vmatmul.mubr.bf16.gmra.mrb[0].mxu0 %v1709
      %v3859 = vpop.f32.mrb[0].mxu0
      %v3860 = vadd.f32 0.0, %v3859
      %v3861 = vpop.f32.mrb[0].mxu0
      %v3862 = vpop.f32.mrb[0].mxu0
      %v3863 = vadd.f32 0.0, %v3862
      %v3864 = vpop.f32.mrb[0].mxu0
      %3865 = vmatprep.mubr.bf16.mxu0 0
      %3866 = vmatmul.mubr.bf16.gmra.mrb[0].mxu0 %v1710
      %v3867 = vpop.f32.mrb[0].mxu0
      %v3868 = vadd.f32 0.0, %v3867
      %v3869 = vpop.f32.mrb[0].mxu0
      %v3870 = vpop.f32.mrb[0].mxu0
      %v3871 = vadd.f32 0.0, %v3870
      %v3872 = vpop.f32.mrb[0].mxu0
      %3873 = vmatprep.mubr.bf16.mxu0 0
      %3874 = vmatmul.mubr.bf16.gmra.mrb[0].mxu0 %v1711
      %v3875 = vpop.f32.mrb[0].mxu0
      %v3876 = vadd.f32 0.0, %v3875
      %v3877 = vpop.f32.mrb[0].mxu0
      %v3878 = vpop.f32.mrb[0].mxu0
      %v3879 = vadd.f32 0.0, %v3878
      %v3880 = vpop.f32.mrb[0].mxu0
      %3881 = vmatprep.mubr.bf16.mxu0 0
      %3882 = vmatmul.mubr.bf16.gmra.mrb[0].mxu0 %v1712
      %v3883 = vpop.f32.mrb[0].mxu0
      %v3884 = vadd.f32 0.0, %v3883
      %v3885 = vpop.f32.mrb[0].mxu0
      %v3886 = vpop.f32.mrb[0].mxu0
      %v3887 = vadd.f32 0.0, %v3886
      %v3888 = vpop.f32.mrb[0].mxu0
      %3889 = vmatprep.mubr.bf16.mxu0 0
      %3890 = vmatmul.mubr.bf16.gmra.mrb[0].mxu0 %v1713
      %v3891 = vpop.f32.mrb[0].mxu0
      %v3892 = vadd.f32 0.0, %v3891
      %v3893 = vpop.f32.mrb[0].mxu0
      %v3894 = vpop.f32.mrb[0].mxu0
      %v3895 = vadd.f32 0.0, %v3894
      %v3896 = vpop.f32.mrb[0].mxu0
      %3897 = vmatprep.mubr.bf16.mxu0 0
      %3898 = vmatmul.mubr.bf16.gmra.mrb[0].mxu0 %v1714
      %v3899 = vpop.f32.mrb[0].mxu0
      %v3900 = vadd.f32 0.0, %v3899
      %v3901 = vpop.f32.mrb[0].mxu0
      %v3902 = vpop.f32.mrb[0].mxu0
      %v3903 = vadd.f32 0.0, %v3902
      %v3904 = vpop.f32.mrb[0].mxu0
      %3905 = vmatprep.mubr.bf16.mxu0 0
      %3906 = vmatmul.mubr.bf16.gmra.mrb[0].mxu0 %v1715
      %v3907 = vpop.f32.mrb[0].mxu0
      %v3908 = vadd.f32 0.0, %v3907
      %v3909 = vpop.f32.mrb[0].mxu0
      %v3910 = vpop.f32.mrb[0].mxu0
      %v3911 = vadd.f32 0.0, %v3910
      %v3912 = vpop.f32.mrb[0].mxu0
      %3913 = vmatprep.mubr.bf16.mxu0 0
      %3914 = vmatmul.mubr.bf16.gmra.mrb[0].mxu0 %v1716
      %v3915 = vpop.f32.mrb[0].mxu0
      %v3916 = vadd.f32 0.0, %v3915
      %v3917 = vpop.f32.mrb[0].mxu0
      %v3918 = vpop.f32.mrb[0].mxu0
      %v3919 = vadd.f32 0.0, %v3918
      %v3920 = vpop.f32.mrb[0].mxu0
      %3921 = vmatprep.mubr.bf16.mxu0 0
      %3922 = vmatmul.mubr.bf16.gmra.mrb[0].mxu0 %v1717
      %v3923 = vpop.f32.mrb[0].mxu0
      %v3924 = vadd.f32 0.0, %v3923
      %v3925 = vpop.f32.mrb[0].mxu0
      %v3926 = vpop.f32.mrb[0].mxu0
      %v3927 = vadd.f32 0.0, %v3926
      %v3928 = vpop.f32.mrb[0].mxu0
      %3929 = vmatprep.mubr.bf16.mxu0 0
      %3930 = vmatmul.mubr.bf16.gmra.mrb[0].mxu0 %v1718
      %v3931 = vpop.f32.mrb[0].mxu0
      %v3932 = vadd.f32 0.0, %v3931
      %v3933 = vpop.f32.mrb[0].mxu0
      %v3934 = vpop.f32.mrb[0].mxu0
      %v3935 = vadd.f32 0.0, %v3934
      %v3936 = vpop.f32.mrb[0].mxu0
      %3937 = vmatprep.mubr.bf16.mxu0 0
      %3938 = vmatmul.mubr.bf16.gmra.mrb[0].mxu0 %v1719
      %v3939 = vpop.f32.mrb[0].mxu0
      %v3940 = vadd.f32 0.0, %v3939
      %v3941 = vpop.f32.mrb[0].mxu0
      %v3942 = vpop.f32.mrb[0].mxu0
      %v3943 = vadd.f32 0.0, %v3942
      %v3944 = vpop.f32.mrb[0].mxu0
      %3945 = vmatprep.mubr.bf16.mxu0 0
      %3946 = vmatmul.mubr.bf16.gmra.mrb[0].mxu0 %v1720
      %v3947 = vpop.f32.mrb[0].mxu0
      %v3948 = vadd.f32 0.0, %v3947
      %v3949 = vpop.f32.mrb[0].mxu0
      %v3950 = vpop.f32.mrb[0].mxu0
      %v3951 = vadd.f32 0.0, %v3950
      %v3952 = vpop.f32.mrb[0].mxu0
      %3953 = vmatprep.mubr.bf16.mxu0 0
      %3954 = vmatmul.mubr.bf16.gmra.mrb[0].mxu0 %v2747
      %v3955 = vpop.f32.mrb[0].mxu0
      %v3956 = vadd.f32 0.0, %v3955
      %v3957 = vpop.f32.mrb[0].mxu0
      %v3958 = vpop.f32.mrb[0].mxu0
      %v3959 = vadd.f32 0.0, %v3958
      %v3960 = vpop.f32.mrb[0].mxu0
      %3961 = vmatprep.mubr.bf16.mxu0 0
      %3962 = vmatmul.mubr.bf16.gmra.mrb[0].mxu0 %v3759
      %v3963 = vpop.f32.mrb[0].mxu0
      %v3964 = vadd.f32 0.0, %v3963
      %v3965 = vpop.f32.mrb[0].mxu0
      %v3966 = vpop.f32.mrb[0].mxu0
      %v3967 = vadd.f32 0.0, %v3966
      %v3968 = vpop.f32.mrb[0].mxu0
      %3969 = vdwg.mxu0
      %v3970 = vadd.f32 %v3708, %v3844
      %v3971 = vadd.f32 %v3709, %v3847
      %v3972 = vadd.f32 %v3710, %v3852
      %v3973 = vadd.f32 %v3711, %v3855
      %v3974 = vadd.f32 %v3712, %v3860
      %v3975 = vadd.f32 %v3713, %v3863
      %v3976 = vadd.f32 %v3714, %v3868
      %v3977 = vadd.f32 %v3715, %v3871
      %v3978 = vadd.f32 %v3716, %v3876
      %v3979 = vadd.f32 %v3717, %v3879
      %v3980 = vadd.f32 %v3718, %v3884
      %v3981 = vadd.f32 %v3719, %v3887
      %v3982 = vadd.f32 %v3720, %v3892
      %v3983 = vadd.f32 %v3721, %v3895
      %v3984 = vadd.f32 %v3722, %v3900
      %v3985 = vadd.f32 %v3723, %v3903
      %v3986 = vadd.f32 %v3724, %v3908
      %v3987 = vadd.f32 %v3725, %v3911
      %v3988 = vadd.f32 %v3726, %v3916
      %v3989 = vadd.f32 %v3727, %v3919
      %v3990 = vadd.f32 %v3728, %v3924
      %v3991 = vadd.f32 %v3729, %v3927
      %v3992 = vadd.f32 %v3730, %v3932
      %v3993 = vadd.f32 %v3731, %v3935
      %v3994 = vadd.f32 %v3732, %v3940
      %v3995 = vadd.f32 %v3733, %v3943
      %v3996 = vadd.f32 %v3734, %v3948
      %v3997 = vadd.f32 %v3735, %v3951
      %v3998 = vadd.f32 %v3736, %v3956
      %v3999 = vadd.f32 %v3737, %v3959
      %v4000 = vadd.f32 %v3738, %v3964
      %v4001 = vadd.f32 %v3739, %v3967
      %4002 = vst [vmem:[%s204] sm:$0xff] %v3970
      %4003 = vst [vmem:[%s204 + $0x8] sm:$0xff] %v3971
      %4004 = vst [vmem:[%s204 + $0x10] sm:$0xff] %v3972
      %4005 = vst [vmem:[%s204 + $0x18] sm:$0xff] %v3973
      %4006 = vst [vmem:[%s204 + $0x20] sm:$0xff] %v3974
      %4007 = vst [vmem:[%s204 + $0x28] sm:$0xff] %v3975
      %4008 = vst [vmem:[%s204 + $0x30] sm:$0xff] %v3976
      %4009 = vst [vmem:[%s204 + $0x38] sm:$0xff] %v3977
      %4010 = vst [vmem:[%s204 + $0x40] sm:$0xff] %v3978
      %4011 = vst [vmem:[%s204 + $0x48] sm:$0xff] %v3979
      %4012 = vst [vmem:[%s204 + $0x50] sm:$0xff] %v3980
      %4013 = vst [vmem:[%s204 + $0x58] sm:$0xff] %v3981
      %4014 = vst [vmem:[%s204 + $0x60] sm:$0xff] %v3982
      %4015 = vst [vmem:[%s204 + $0x68] sm:$0xff] %v3983
      %4016 = vst [vmem:[%s204 + $0x70] sm:$0xff] %v3984
      %4017 = vst [vmem:[%s204 + $0x78] sm:$0xff] %v3985
      %4018 = vst [vmem:[%s204 + $0x80] sm:$0xff] %v3986
      %4019 = vst [vmem:[%s204 + $0x88] sm:$0xff] %v3987
      %4020 = vst [vmem:[%s204 + $0x90] sm:$0xff] %v3988
      %4021 = vst [vmem:[%s204 + $0x98] sm:$0xff] %v3989
      %4022 = vst [vmem:[%s204 + $0xa0] sm:$0xff] %v3990
      %4023 = vst [vmem:[%s204 + $0xa8] sm:$0xff] %v3991
      %4024 = vst [vmem:[%s204 + $0xb0] sm:$0xff] %v3992
      %4025 = vst [vmem:[%s204 + $0xb8] sm:$0xff] %v3993
      %4026 = vst [vmem:[%s204 + $0xc0] sm:$0xff] %v3994
      %4027 = vst [vmem:[%s204 + $0xc8] sm:$0xff] %v3995
      %4028 = vst [vmem:[%s204 + $0xd0] sm:$0xff] %v3996
      %4029 = vst [vmem:[%s204 + $0xd8] sm:$0xff] %v3997
      %4030 = vst [vmem:[%s204 + $0xe0] sm:$0xff] %v3998
      %4031 = vst [vmem:[%s204 + $0xe8] sm:$0xff] %v3999
      %4032 = vst [vmem:[%s204 + $0xf0] sm:$0xff] %v4000
      %4033 = vst [vmem:[%s204 + $0xf8] sm:$0xff] %v4001
      %v4034 = vld [vmem:[%s204] sm:$0xff]
      %v4035 = vld [vmem:[%s204 + $0x8] sm:$0xff]
      %v4036 = vld [vmem:[%s204 + $0x10] sm:$0xff]
      %v4037 = vld [vmem:[%s204 + $0x18] sm:$0xff]
      %v4038 = vld [vmem:[%s204 + $0x20] sm:$0xff]
      %v4039 = vld [vmem:[%s204 + $0x28] sm:$0xff]
      %v4040 = vld [vmem:[%s204 + $0x30] sm:$0xff]
      %v4041 = vld [vmem:[%s204 + $0x38] sm:$0xff]
      %v4042 = vld [vmem:[%s204 + $0x40] sm:$0xff]
      %v4043 = vld [vmem:[%s204 + $0x48] sm:$0xff]
      %v4044 = vld [vmem:[%s204 + $0x50] sm:$0xff]
      %v4045 = vld [vmem:[%s204 + $0x58] sm:$0xff]
      %v4046 = vld [vmem:[%s204 + $0x60] sm:$0xff]
      %v4047 = vld [vmem:[%s204 + $0x68] sm:$0xff]
      %v4048 = vld [vmem:[%s204 + $0x70] sm:$0xff]
      %v4049 = vld [vmem:[%s204 + $0x78] sm:$0xff]
      %v4050 = vld [vmem:[%s204 + $0x80] sm:$0xff]
      %v4051 = vld [vmem:[%s204 + $0x88] sm:$0xff]
      %v4052 = vld [vmem:[%s204 + $0x90] sm:$0xff]
      %v4053 = vld [vmem:[%s204 + $0x98] sm:$0xff]
      %v4054 = vld [vmem:[%s204 + $0xa0] sm:$0xff]
      %v4055 = vld [vmem:[%s204 + $0xa8] sm:$0xff]
      %v4056 = vld [vmem:[%s204 + $0xb0] sm:$0xff]
      %v4057 = vld [vmem:[%s204 + $0xb8] sm:$0xff]
      %v4058 = vld [vmem:[%s204 + $0xc0] sm:$0xff]
      %v4059 = vld [vmem:[%s204 + $0xc8] sm:$0xff]
      %v4060 = vld [vmem:[%s204 + $0xd0] sm:$0xff]
      %v4061 = vld [vmem:[%s204 + $0xd8] sm:$0xff]
      %v4062 = vld [vmem:[%s204 + $0xe0] sm:$0xff]
      %v4063 = vld [vmem:[%s204 + $0xe8] sm:$0xff]
      %v4064 = vld [vmem:[%s204 + $0xf0] sm:$0xff]
      %v4065 = vld [vmem:[%s204 + $0xf8] sm:$0xff]
      %v4066 = vadd.f32 %v4034, %v4035
      %v4067 = vadd.f32 %v4066, %v4036
      %v4068 = vadd.f32 %v4067, %v4037
      %v4069 = vadd.f32 %v4068, %v4038
      %v4070 = vadd.f32 %v4069, %v4039
      %v4071 = vadd.f32 %v4070, %v4040
      %v4072 = vadd.f32 %v4071, %v4041
      %v4073 = vadd.f32 %v4072, %v4042
      %v4074 = vadd.f32 %v4073, %v4043
      %v4075 = vadd.f32 %v4074, %v4044
      %v4076 = vadd.f32 %v4075, %v4045
      %v4077 = vadd.f32 %v4076, %v4046
      %v4078 = vadd.f32 %v4077, %v4047
      %v4079 = vadd.f32 %v4078, %v4048
      %v4080 = vadd.f32 %v4079, %v4049
      %v4081 = vadd.f32 %v4080, %v4050
      %v4082 = vadd.f32 %v4081, %v4051
      %v4083 = vadd.f32 %v4082, %v4052
      %v4084 = vadd.f32 %v4083, %v4053
      %v4085 = vadd.f32 %v4084, %v4054
      %v4086 = vadd.f32 %v4085, %v4055
      %v4087 = vadd.f32 %v4086, %v4056
      %v4088 = vadd.f32 %v4087, %v4057
      %v4089 = vadd.f32 %v4088, %v4058
      %v4090 = vadd.f32 %v4089, %v4059
      %v4091 = vadd.f32 %v4090, %v4060
      %v4092 = vadd.f32 %v4091, %v4061
      %v4093 = vadd.f32 %v4092, %v4062
      %v4094 = vadd.f32 %v4093, %v4063
      %v4095 = vadd.f32 %v4094, %v4064
      %v4096 = vadd.f32 %v4095, %v4065
      %v4097 = vrot.slane %v4096, 4
      %v4098 = vadd.f32 %v4096, %v4097
      %v4099 = vrot.slane %v4098, 2
      %v4100 = vadd.f32 %v4098, %v4099
      %v4101 = vrot.slane %v4100, 1
      %v4102 = vadd.f32 %v4100, %v4101
      %v4103 = vmul.f32 %v4034, %v4034
      %v4104 = vmul.f32 %v4035, %v4035
      %v4105 = vmul.f32 %v4036, %v4036
      %v4106 = vmul.f32 %v4037, %v4037
      %v4107 = vmul.f32 %v4038, %v4038
      %v4108 = vmul.f32 %v4039, %v4039
      %v4109 = vmul.f32 %v4040, %v4040
      %v4110 = vmul.f32 %v4041, %v4041
      %v4111 = vmul.f32 %v4042, %v4042
      %v4112 = vmul.f32 %v4043, %v4043
      %v4113 = vmul.f32 %v4044, %v4044
      %v4114 = vmul.f32 %v4045, %v4045
      %v4115 = vmul.f32 %v4046, %v4046
      %v4116 = vmul.f32 %v4047, %v4047
      %v4117 = vmul.f32 %v4048, %v4048
      %v4118 = vmul.f32 %v4049, %v4049
      %v4119 = vmul.f32 %v4050, %v4050
      %v4120 = vmul.f32 %v4051, %v4051
      %v4121 = vmul.f32 %v4052, %v4052
      %v4122 = vmul.f32 %v4053, %v4053
      %v4123 = vmul.f32 %v4054, %v4054
      %v4124 = vmul.f32 %v4055, %v4055
      %v4125 = vmul.f32 %v4056, %v4056
      %v4126 = vmul.f32 %v4057, %v4057
      %v4127 = vmul.f32 %v4058, %v4058
      %v4128 = vmul.f32 %v4059, %v4059
      %v4129 = vmul.f32 %v4060, %v4060
      %v4130 = vmul.f32 %v4061, %v4061
      %v4131 = vmul.f32 %v4062, %v4062
      %v4132 = vmul.f32 %v4063, %v4063
      %v4133 = vmul.f32 %v4064, %v4064
      %v4134 = vmul.f32 %v4065, %v4065
      %v4135 = vadd.f32 %v4103, %v4104
      %v4136 = vadd.f32 %v4135, %v4105
      %v4137 = vadd.f32 %v4136, %v4106
      %v4138 = vadd.f32 %v4137, %v4107
      %v4139 = vadd.f32 %v4138, %v4108
      %v4140 = vadd.f32 %v4139, %v4109
      %v4141 = vadd.f32 %v4140, %v4110
      %v4142 = vadd.f32 %v4141, %v4111
      %v4143 = vadd.f32 %v4142, %v4112
      %v4144 = vadd.f32 %v4143, %v4113
      %v4145 = vadd.f32 %v4144, %v4114
      %v4146 = vadd.f32 %v4145, %v4115
      %v4147 = vadd.f32 %v4146, %v4116
      %v4148 = vadd.f32 %v4147, %v4117
      %v4149 = vadd.f32 %v4148, %v4118
      %v4150 = vadd.f32 %v4149, %v4119
      %v4151 = vadd.f32 %v4150, %v4120
      %v4152 = vadd.f32 %v4151, %v4121
      %v4153 = vadd.f32 %v4152, %v4122
      %v4154 = vadd.f32 %v4153, %v4123
      %v4155 = vadd.f32 %v4154, %v4124
      %v4156 = vadd.f32 %v4155, %v4125
      %v4157 = vadd.f32 %v4156, %v4126
      %v4158 = vadd.f32 %v4157, %v4127
      %v4159 = vadd.f32 %v4158, %v4128
      %v4160 = vadd.f32 %v4159, %v4129
      %v4161 = vadd.f32 %v4160, %v4130
      %v4162 = vadd.f32 %v4161, %v4131
      %v4163 = vadd.f32 %v4162, %v4132
      %v4164 = vadd.f32 %v4163, %v4133
      %v4165 = vadd.f32 %v4164, %v4134
      %v4166 = vrot.slane %v4165, 4
      %v4167 = vadd.f32 %v4165, %v4166
      %v4168 = vrot.slane %v4167, 2
      %v4169 = vadd.f32 %v4167, %v4168
      %v4170 = vrot.slane %v4169, 1
      %v4171 = vadd.f32 %v4169, %v4170
      %vm4172 = vcmask 1040384
      %v4173 = vsel %vm4172, %v4102, %v4171
      %4174 = vst [vmem:[%s208] sm:$0x3] %v4173
      %p4175 = scmp.lt.s32.totalorder %s16, 1
      %s4176 = scalar_select %p4175, %s16, 1
      %s4177 = smul.addr %s4176, 32
      %s4178 = smul.addr %s4177, 8
      %s4179 = scalar_lea.vmem %s3, %s4178
      %p4180 = scmp.lt.s32.totalorder %s16, 1
      %s4181 = scalar_select %p4180, %s16, 1
      %s4182 = smul.addr %s4181, 2
      %s4183 = scalar_lea.vmem %s4, %s4182
      // Predicated region
      $region33: #{conv_block_forward.4} parent=31 // pred_check
        %p4184 = pneg %p102
      $region34: #{conv_block_forward.4} parent=31 // pred_check_branch
        %4186 = sbr.rel (%p4184) target = $region36
      $region35: #{conv_block_forward.4} parent=31 // pred_region
        _
      $region36: #{conv_block_forward.4} parent=31 // pred_fallthru
        _
      // Predicated region
      $region37: #{conv_block_forward.4} parent=31 // pred_check
        %p4187 = pneg %p128
      $region38: #{conv_block_forward.4} parent=31 // pred_check_branch
        %4189 = sbr.rel (%p4187) target = $region40
      $region39: #{conv_block_forward.4} parent=31 // pred_region
        _
      $region40: #{conv_block_forward.4} parent=31 // pred_fallthru
        _
    $region32: #{conv_block_forward.4} parent=5 // pred_fallthru
      _
    %p4190 = scmp.le.s32.totalorder 2, %s11
    // Predicated region
    $region41: #{conv_block_forward.4} parent=5 // pred_check
      %p4191 = pneg %p4190
    $region42: #{conv_block_forward.4} parent=5 // pred_check_branch
      %4193 = sbr.rel (%p4191) target = $region44
    $region43: #{conv_block_forward.4} parent=5 // pred_region
      %s4194 = ssub.s32 %s11, 2
      // Predicated region
      $region45: #{conv_block_forward.4} parent=43 // pred_check
        %p4195 = pneg %p108
      $region46: #{conv_block_forward.4} parent=43 // pred_check_branch
        %4197 = sbr.rel (%p4195) target = $region48
      $region47: #{conv_block_forward.4} parent=43 // pred_region
        %p4198 = scmp.lt.s32.totalorder %s17, 1
        %s4199 = scalar_select %p4198, %s17, 1
        %s4200 = smul.addr %s4199, 32
        %s4201 = smul.addr %s4200, 8
        %s4202 = scalar_lea.vmem %s3, %s4201
      $region48: #{conv_block_forward.4} parent=43 // pred_fallthru
        _
      // Predicated region
      $region49: #{conv_block_forward.4} parent=43 // pred_check
        %p4203 = pneg %p134
      $region50: #{conv_block_forward.4} parent=43 // pred_check_branch
        %4205 = sbr.rel (%p4203) target = $region52
      $region51: #{conv_block_forward.4} parent=43 // pred_region
        %p4206 = scmp.lt.s32.totalorder %s17, 1
        %s4207 = scalar_select %p4206, %s17, 1
        %s4208 = smul.addr %s4207, 2
        %s4209 = scalar_lea.vmem %s4, %s4208
      $region52: #{conv_block_forward.4} parent=43 // pred_fallthru
        _
    $region44: #{conv_block_forward.4} parent=5 // pred_fallthru
      _
  $region6: #{conv_block_forward.4} parent=0 // loop_footer
    %s15 = sadd.s32 1, %s11
  $region7: #{conv_block_forward.4} parent=0 // loop_footer_branch
    %10 = sbr.rel target = $region3
  $region8: #{conv_block_forward.4} parent=0 // loop_exit
    _

</llo_original>
